<compile_context>
chip_gen: v7x
topology: tpu7x:2x2x1
jax: 0.10.0
libtpu: 0.0.40
codegen_flags: <defaults>
</compile_context>

<pallas_src>
import numpy as np
import jax
import jax.numpy as jnp
from jax import lax
from jax.experimental import pallas as pl
from jax.experimental.pallas import tpu as pltpu


# Static architecture: (kind, k, cin, cout, relu); "c"=Conv2d, "t"=ConvTranspose2d.
_LAYERS = (
    ("c", 5, 1, 4, True),
    ("c", 3, 4, 32, True),
    ("c", 3, 32, 64, True),
    ("t", 3, 64, 32, True),
    ("t", 3, 32, 4, True),
    ("t", 5, 4, 1, False),
)


# ----------------------------- Pallas kernel --------------------------------

def _fused_autoencoder_kernel(x_ref, *refs):
    """All six layers for the whole batch, fully resident in VMEM.

    x_ref : (B, H, W)   input images
    refs  : w0, b0, ..., w5, b5, o_ref
            wi : (k*Wc*Cin, Wo*Cout)  block-Toeplitz weight (see prep below)
            bi : (1, Wo*Cout)         bias tiled over output width
    o_ref : (B, H, W)   output images (Cout of the last layer is 1)

    Activations are per-image 2D slabs a[h, w*C + c]: rows = spatial height
    (sublanes), columns = width*channels (lanes).  Per layer: lane-concatenate
    the k row-shifted slabs of each image, stack the images along sublanes,
    and do ONE MXU matmul for the whole batch.  No reshapes / relayouts other
    than small sublane/lane concats on VMEM-resident data.
    """
    o_ref = refs[-1]
    wb = refs[:-1]
    B = x_ref.shape[0]

    # Per-image activation slabs; Cin = 1 for the input, so slab = (H, W).
    hs = [x_ref[b].astype(jnp.float32) for b in range(B)]

    for li, (kind, k, _cin, _cout, relu) in enumerate(_LAYERS):
        w_ref, b_ref = wb[2 * li], wb[2 * li + 1]
        if kind == "t":
            # stride-1 ConvTranspose2d == full-padded valid conv with flipped
            # weights; width padding is folded into w_ref, height padding here.
            z = jnp.zeros((k - 1, hs[0].shape[1]), jnp.float32)
            hs = [jnp.concatenate([z, h, z], axis=0) for h in hs]
        ho = hs[0].shape[0] - k + 1
        # Row-wise im2col for every image, stacked along sublanes:
        #   patch[b*ho + r, i*Wc*Cin + x*Cin + ci] = h_b[r + i, x*Cin + ci]
        patch = jnp.concatenate(
            [jnp.concatenate([h[i:i + ho, :] for i in range(k)], axis=1)
             for h in hs],
            axis=0)                                        # (B*ho, k*Wc*Cin)
        y = jnp.dot(patch, w_ref[...], preferred_element_type=jnp.float32)
        y = y + b_ref[...]                                 # (1, Wo*Cout) bcast
        y = jnp.maximum(y, 0.0) if relu else y             # (B*ho, Wo*Cout)
        hs = [y[b * ho:(b + 1) * ho, :] for b in range(B)]

    for b in range(B):
        o_ref[b] = hs[b].astype(o_ref.dtype)               # (H, W) each


# ----------------------- hoisted weight preprocessing ------------------------

def prepare_layer_weights(params, w_in):
    """Runs ONCE (not per forward).  For a layer whose input slab is
    (Hc, Wc*Cin), the kernel computes

        y[r, wo*Cout+co] = sum_{i,x,ci} patch[r, i*Wc*Cin + x*Cin + ci]
                                       * W[i*Wc*Cin + x*Cin + ci, wo*Cout+co]

    so W folds the kernel-width unrolling, the ConvTranspose2d flip/channel
    swap and its implicit width zero-padding into one static block-Toeplitz
    matrix; the bias is pre-tiled over the output width.
    """
    out = []
    wc = w_in
    for li, (kind, k, cin, cout, _relu) in enumerate(_LAYERS):
        w = np.asarray(params[f"w{li}"], np.float32)
        b = np.asarray(params[f"b{li}"], np.float32)
        if kind == "c":                         # Conv2d weight: (Cout, Cin, k, k)
            w_hwio = np.transpose(w, (2, 3, 1, 0))
            pad = 0
        else:                                   # ConvTranspose2d: (Cin, Cout, k, k)
            w_hwio = np.transpose(w[:, :, ::-1, ::-1], (2, 3, 0, 1))
            pad = k - 1
        wo = wc + 2 * pad - k + 1
        W = np.zeros((k, wc, cin, wo, cout), np.float32)
        for i in range(k):
            for j in range(k):
                for o in range(wo):
                    x = o + j - pad
                    if 0 <= x < wc:
                        W[i, x, :, o, :] = w_hwio[i, j]
        out.append((jnp.asarray(W.reshape(k * wc * cin, wo * cout)),
                    jnp.asarray(np.tile(b, wo).reshape(1, wo * cout))))
        wc = wo
    return out


# ------------------------------- forward pass --------------------------------

@jax.jit
def torch_conv_model_forward(layer_weights, x):
    """Fused Pallas forward of TorchConvModel. x: (B, H, W) f32 -> (B, H, W)."""
    B, H, W = x.shape
    flat = [x]
    for w_mat, b_row in layer_weights:
        flat += [w_mat, b_row]
    # No grid / no BlockSpecs: every operand is a whole-array VMEM-resident
    # block (weights ~5 MiB + activations << VMEM on v5e/v6e/v7x); the whole
    # batch is processed in a single kernel invocation.
    return pl.pallas_call(
        _fused_autoencoder_kernel,
        out_shape=jax.ShapeDtypeStruct((B, H, W), x.dtype),
        compiler_params=pltpu.CompilerParams(
            vmem_limit_bytes=32 * 1024 * 1024,
        ),
    )(*flat)


# --------------------------- parameters & reference --------------------------

def init_params(key):
    """Deterministic synthetic parameters matching TorchConvModel shapes."""
    def conv_w(k, cout, cin, ksz):                 # PyTorch Conv2d: (Cout,Cin,K,K)
        std = (2.0 / (cin * ksz * ksz)) ** 0.5
        return std * jax.random.normal(k, (cout, cin, ksz, ksz), jnp.float32)

    def convt_w(k, cin, cout, ksz):                # PyTorch ConvT2d: (Cin,Cout,K,K)
        std = (2.0 / (cin * ksz * ksz)) ** 0.5
        return std * jax.random.normal(k, (cin, cout, ksz, ksz), jnp.float32)

    ks = jax.random.split(key, 12)
    return {
        "w0": conv_w(ks[0], 4, 1, 5),   "b0": 0.01 * jax.random.normal(ks[1], (4,)),
        "w1": conv_w(ks[2], 32, 4, 3),  "b1": 0.01 * jax.random.normal(ks[3], (32,)),
        "w2": conv_w(ks[4], 64, 32, 3), "b2": 0.01 * jax.random.normal(ks[5], (64,)),
        "w3": convt_w(ks[6], 64, 32, 3), "b3": 0.01 * jax.random.normal(ks[7], (32,)),
        "w4": convt_w(ks[8], 32, 4, 3),  "b4": 0.01 * jax.random.normal(ks[9], (4,)),
        "w5": convt_w(ks[10], 4, 1, 5),  "b5": 0.01 * jax.random.normal(ks[11], (1,)),
    }


def _oihw_to_hwio(w):
    return jnp.transpose(w, (2, 3, 1, 0))


def _ref_conv(x, w_hwio, b, relu):
    y = lax.conv_general_dilated(
        x, w_hwio, window_strides=(1, 1), padding="VALID",
        dimension_numbers=("NHWC", "HWIO", "NHWC")) + b.reshape(1, 1, 1, -1)
    return jnp.maximum(y, 0.0) if relu else y


def reference_forward(params, x):
    """Pure-JAX (lax.conv) reference built from the raw PyTorch-layout params."""
    h = x[..., None]
    h = _ref_conv(h, _oihw_to_hwio(params["w0"]), params["b0"], True)
    h = _ref_conv(h, _oihw_to_hwio(params["w1"]), params["b1"], True)
    h = _ref_conv(h, _oihw_to_hwio(params["w2"]), params["b2"], True)
    for wkey, bkey, relu in (("w3", "b3", True), ("w4", "b4", True), ("w5", "b5", False)):
        wt = params[wkey]
        kh, kw = wt.shape[2], wt.shape[3]
        w_hwio = jnp.transpose(jnp.flip(wt, axis=(2, 3)), (2, 3, 0, 1))
        h = jnp.pad(h, ((0, 0), (kh - 1, kh - 1), (kw - 1, kw - 1), (0, 0)))
        h = _ref_conv(h, w_hwio, params[bkey], relu)
    return h[..., 0]


# ------------------------------------ main -----------------------------------

if __name__ == "__main__":
    key = jax.random.PRNGKey(0)
    pkey, xkey = jax.random.split(key)
    params = init_params(pkey)

    # (B, H, W) = (2, 16, 16); spatial path: 16 -> 12 -> 10 -> 8 -> 10 -> 12 -> 16
    x = jax.random.normal(xkey, (2, 16, 16), jnp.float32)

    layer_weights = prepare_layer_weights(params, 16)   # hoisted, done once

    y = jax.block_until_ready(torch_conv_model_forward(layer_weights, x))
    assert y.shape == (2, 16, 16), y.shape

    y_ref = jax.block_until_ready(reference_forward(params, x))
    max_err = float(jnp.max(jnp.abs(y - y_ref)))
    assert jnp.allclose(y, y_ref, rtol=1e-4, atol=1e-4), max_err

    print("KERNEL_OK")
</pallas_src>

<mosaic_0001>
module attributes {stable_mosaic.version = 11 : i64} {
  func.func @_fused_autoencoder_kernel(%arg0: memref<2x16x16xf32, #tpu.memory_space<vmem>>, %arg1: memref<80x48xf32, #tpu.memory_space<vmem>>, %arg2: memref<1x48xf32, #tpu.memory_space<vmem>>, %arg3: memref<144x320xf32, #tpu.memory_space<vmem>>, %arg4: memref<1x320xf32, #tpu.memory_space<vmem>>, %arg5: memref<960x512xf32, #tpu.memory_space<vmem>>, %arg6: memref<1x512xf32, #tpu.memory_space<vmem>>, %arg7: memref<1536x320xf32, #tpu.memory_space<vmem>>, %arg8: memref<1x320xf32, #tpu.memory_space<vmem>>, %arg9: memref<960x48xf32, #tpu.memory_space<vmem>>, %arg10: memref<1x48xf32, #tpu.memory_space<vmem>>, %arg11: memref<240x16xf32, #tpu.memory_space<vmem>>, %arg12: memref<1x16xf32, #tpu.memory_space<vmem>>, %arg13: memref<2x16x16xf32, #tpu.memory_space<vmem>>) attributes {dimension_semantics = [], scalar_prefetch = 0 : i64, scratch_operands = 0 : i64, tpu.core_type = #tpu.core_type<tc>} {
    %c0 = arith.constant 0 : index
    %c0_0 = arith.constant 0 : index
    %c0_1 = arith.constant 0 : index
    %0 = vector.load %arg0[%c0, %c0_0, %c0_1] : memref<2x16x16xf32, #tpu.memory_space<vmem>>, vector<1x16x16xf32>
    %1 = vector.shape_cast %0 : vector<1x16x16xf32> to vector<16x16xf32>
    %c1 = arith.constant 1 : index
    %c0_2 = arith.constant 0 : index
    %c0_3 = arith.constant 0 : index
    %2 = vector.load %arg0[%c1, %c0_2, %c0_3] : memref<2x16x16xf32, #tpu.memory_space<vmem>>, vector<1x16x16xf32>
    %3 = vector.shape_cast %2 : vector<1x16x16xf32> to vector<16x16xf32>
    %4 = vector.extract_strided_slice %1 {offsets = [0, 0], sizes = [12, 16], strides = [1, 1]} : vector<16x16xf32> to vector<12x16xf32>
    %5 = vector.extract_strided_slice %1 {offsets = [1, 0], sizes = [12, 16], strides = [1, 1]} : vector<16x16xf32> to vector<12x16xf32>
    %6 = vector.extract_strided_slice %1 {offsets = [2, 0], sizes = [12, 16], strides = [1, 1]} : vector<16x16xf32> to vector<12x16xf32>
    %7 = vector.extract_strided_slice %1 {offsets = [3, 0], sizes = [12, 16], strides = [1, 1]} : vector<16x16xf32> to vector<12x16xf32>
    %8 = vector.extract_strided_slice %1 {offsets = [4, 0], sizes = [12, 16], strides = [1, 1]} : vector<16x16xf32> to vector<12x16xf32>
    %9 = tpu.concatenate %4, %5, %6, %7, %8 in 1 : vector<12x16xf32>, vector<12x16xf32>, vector<12x16xf32>, vector<12x16xf32>, vector<12x16xf32> -> vector<12x80xf32>
    %10 = vector.extract_strided_slice %3 {offsets = [0, 0], sizes = [12, 16], strides = [1, 1]} : vector<16x16xf32> to vector<12x16xf32>
    %11 = vector.extract_strided_slice %3 {offsets = [1, 0], sizes = [12, 16], strides = [1, 1]} : vector<16x16xf32> to vector<12x16xf32>
    %12 = vector.extract_strided_slice %3 {offsets = [2, 0], sizes = [12, 16], strides = [1, 1]} : vector<16x16xf32> to vector<12x16xf32>
    %13 = vector.extract_strided_slice %3 {offsets = [3, 0], sizes = [12, 16], strides = [1, 1]} : vector<16x16xf32> to vector<12x16xf32>
    %14 = vector.extract_strided_slice %3 {offsets = [4, 0], sizes = [12, 16], strides = [1, 1]} : vector<16x16xf32> to vector<12x16xf32>
    %15 = tpu.concatenate %10, %11, %12, %13, %14 in 1 : vector<12x16xf32>, vector<12x16xf32>, vector<12x16xf32>, vector<12x16xf32>, vector<12x16xf32> -> vector<12x80xf32>
    %16 = tpu.concatenate %9, %15 in 0 : vector<12x80xf32>, vector<12x80xf32> -> vector<24x80xf32>
    %c0_4 = arith.constant 0 : index
    %c0_5 = arith.constant 0 : index
    %17 = vector.load %arg1[%c0_4, %c0_5] : memref<80x48xf32, #tpu.memory_space<vmem>>, vector<80x48xf32>
    %cst = arith.constant dense<0.000000e+00> : vector<24x48xf32>
    %18 = tpu.matmul %16, %17, %cst {dimension_numbers = #tpu.dot_dimension_numbers<[1], [0], [0], [1], [0, 0, 1, 1], [], []>} : vector<24x80xf32>, vector<80x48xf32>, vector<24x48xf32> -> vector<24x48xf32>
    %c0_6 = arith.constant 0 : index
    %c0_7 = arith.constant 0 : index
    %19 = vector.load %arg2[%c0_6, %c0_7] : memref<1x48xf32, #tpu.memory_space<vmem>>, vector<1x48xf32>
    %20 = vector.broadcast %19 : vector<1x48xf32> to vector<24x48xf32>
    %21 = arith.addf %18, %20 : vector<24x48xf32>
    %cst_8 = arith.constant 0.000000e+00 : f32
    %22 = vector.broadcast %cst_8 : f32 to vector<24x48xf32>
    %23 = arith.maximumf %21, %22 : vector<24x48xf32>
    %24 = vector.extract_strided_slice %23 {offsets = [0, 0], sizes = [12, 48], strides = [1, 1]} : vector<24x48xf32> to vector<12x48xf32>
    %25 = vector.extract_strided_slice %23 {offsets = [12, 0], sizes = [12, 48], strides = [1, 1]} : vector<24x48xf32> to vector<12x48xf32>
    %26 = vector.extract_strided_slice %24 {offsets = [0, 0], sizes = [10, 48], strides = [1, 1]} : vector<12x48xf32> to vector<10x48xf32>
    %27 = vector.extract_strided_slice %24 {offsets = [1, 0], sizes = [10, 48], strides = [1, 1]} : vector<12x48xf32> to vector<10x48xf32>
    %28 = vector.extract_strided_slice %24 {offsets = [2, 0], sizes = [10, 48], strides = [1, 1]} : vector<12x48xf32> to vector<10x48xf32>
    %29 = tpu.concatenate %26, %27, %28 in 1 : vector<10x48xf32>, vector<10x48xf32>, vector<10x48xf32> -> vector<10x144xf32>
    %30 = vector.extract_strided_slice %25 {offsets = [0, 0], sizes = [10, 48], strides = [1, 1]} : vector<12x48xf32> to vector<10x48xf32>
    %31 = vector.extract_strided_slice %25 {offsets = [1, 0], sizes = [10, 48], strides = [1, 1]} : vector<12x48xf32> to vector<10x48xf32>
    %32 = vector.extract_strided_slice %25 {offsets = [2, 0], sizes = [10, 48], strides = [1, 1]} : vector<12x48xf32> to vector<10x48xf32>
    %33 = tpu.concatenate %30, %31, %32 in 1 : vector<10x48xf32>, vector<10x48xf32>, vector<10x48xf32> -> vector<10x144xf32>
    %34 = tpu.concatenate %29, %33 in 0 : vector<10x144xf32>, vector<10x144xf32> -> vector<20x144xf32>
    %c0_9 = arith.constant 0 : index
    %c0_10 = arith.constant 0 : index
    %35 = vector.load %arg3[%c0_9, %c0_10] : memref<144x320xf32, #tpu.memory_space<vmem>>, vector<144x320xf32>
    %cst_11 = arith.constant dense<0.000000e+00> : vector<20x320xf32>
    %36 = tpu.matmul %34, %35, %cst_11 {dimension_numbers = #tpu.dot_dimension_numbers<[1], [0], [0], [1], [0, 0, 1, 1], [], []>} : vector<20x144xf32>, vector<144x320xf32>, vector<20x320xf32> -> vector<20x320xf32>
    %c0_12 = arith.constant 0 : index
    %c0_13 = arith.constant 0 : index
    %37 = vector.load %arg4[%c0_12, %c0_13] : memref<1x320xf32, #tpu.memory_space<vmem>>, vector<1x320xf32>
    %38 = vector.broadcast %37 : vector<1x320xf32> to vector<20x320xf32>
    %39 = arith.addf %36, %38 : vector<20x320xf32>
    %cst_14 = arith.constant 0.000000e+00 : f32
    %40 = vector.broadcast %cst_14 : f32 to vector<20x320xf32>
    %41 = arith.maximumf %39, %40 : vector<20x320xf32>
    %42 = vector.extract_strided_slice %41 {offsets = [0, 0], sizes = [10, 320], strides = [1, 1]} : vector<20x320xf32> to vector<10x320xf32>
    %43 = vector.extract_strided_slice %41 {offsets = [10, 0], sizes = [10, 320], strides = [1, 1]} : vector<20x320xf32> to vector<10x320xf32>
    %44 = vector.extract_strided_slice %42 {offsets = [0, 0], sizes = [8, 320], strides = [1, 1]} : vector<10x320xf32> to vector<8x320xf32>
    %45 = vector.extract_strided_slice %42 {offsets = [1, 0], sizes = [8, 320], strides = [1, 1]} : vector<10x320xf32> to vector<8x320xf32>
    %46 = vector.extract_strided_slice %42 {offsets = [2, 0], sizes = [8, 320], strides = [1, 1]} : vector<10x320xf32> to vector<8x320xf32>
    %47 = tpu.concatenate %44, %45, %46 in 1 : vector<8x320xf32>, vector<8x320xf32>, vector<8x320xf32> -> vector<8x960xf32>
    %48 = vector.extract_strided_slice %43 {offsets = [0, 0], sizes = [8, 320], strides = [1, 1]} : vector<10x320xf32> to vector<8x320xf32>
    %49 = vector.extract_strided_slice %43 {offsets = [1, 0], sizes = [8, 320], strides = [1, 1]} : vector<10x320xf32> to vector<8x320xf32>
    %50 = vector.extract_strided_slice %43 {offsets = [2, 0], sizes = [8, 320], strides = [1, 1]} : vector<10x320xf32> to vector<8x320xf32>
    %51 = tpu.concatenate %48, %49, %50 in 1 : vector<8x320xf32>, vector<8x320xf32>, vector<8x320xf32> -> vector<8x960xf32>
    %52 = tpu.concatenate %47, %51 in 0 : vector<8x960xf32>, vector<8x960xf32> -> vector<16x960xf32>
    %c0_15 = arith.constant 0 : index
    %c0_16 = arith.constant 0 : index
    %53 = vector.load %arg5[%c0_15, %c0_16] : memref<960x512xf32, #tpu.memory_space<vmem>>, vector<960x512xf32>
    %cst_17 = arith.constant dense<0.000000e+00> : vector<16x512xf32>
    %54 = tpu.matmul %52, %53, %cst_17 {dimension_numbers = #tpu.dot_dimension_numbers<[1], [0], [0], [1], [0, 0, 1, 1], [], []>} : vector<16x960xf32>, vector<960x512xf32>, vector<16x512xf32> -> vector<16x512xf32>
    %c0_18 = arith.constant 0 : index
    %c0_19 = arith.constant 0 : index
    %55 = vector.load %arg6[%c0_18, %c0_19] : memref<1x512xf32, #tpu.memory_space<vmem>>, vector<1x512xf32>
    %56 = vector.broadcast %55 : vector<1x512xf32> to vector<16x512xf32>
    %57 = arith.addf %54, %56 : vector<16x512xf32>
    %cst_20 = arith.constant 0.000000e+00 : f32
    %58 = vector.broadcast %cst_20 : f32 to vector<16x512xf32>
    %59 = arith.maximumf %57, %58 : vector<16x512xf32>
    %60 = vector.extract_strided_slice %59 {offsets = [0, 0], sizes = [8, 512], strides = [1, 1]} : vector<16x512xf32> to vector<8x512xf32>
    %61 = vector.extract_strided_slice %59 {offsets = [8, 0], sizes = [8, 512], strides = [1, 1]} : vector<16x512xf32> to vector<8x512xf32>
    %cst_21 = arith.constant 0.000000e+00 : f32
    %62 = vector.broadcast %cst_21 : f32 to vector<2x512xf32>
    %63 = tpu.concatenate %62, %60, %62 in 0 : vector<2x512xf32>, vector<8x512xf32>, vector<2x512xf32> -> vector<12x512xf32>
    %64 = tpu.concatenate %62, %61, %62 in 0 : vector<2x512xf32>, vector<8x512xf32>, vector<2x512xf32> -> vector<12x512xf32>
    %65 = vector.extract_strided_slice %63 {offsets = [0, 0], sizes = [10, 512], strides = [1, 1]} : vector<12x512xf32> to vector<10x512xf32>
    %66 = vector.extract_strided_slice %63 {offsets = [1, 0], sizes = [10, 512], strides = [1, 1]} : vector<12x512xf32> to vector<10x512xf32>
    %67 = vector.extract_strided_slice %63 {offsets = [2, 0], sizes = [10, 512], strides = [1, 1]} : vector<12x512xf32> to vector<10x512xf32>
    %68 = tpu.concatenate %65, %66, %67 in 1 : vector<10x512xf32>, vector<10x512xf32>, vector<10x512xf32> -> vector<10x1536xf32>
    %69 = vector.extract_strided_slice %64 {offsets = [0, 0], sizes = [10, 512], strides = [1, 1]} : vector<12x512xf32> to vector<10x512xf32>
    %70 = vector.extract_strided_slice %64 {offsets = [1, 0], sizes = [10, 512], strides = [1, 1]} : vector<12x512xf32> to vector<10x512xf32>
    %71 = vector.extract_strided_slice %64 {offsets = [2, 0], sizes = [10, 512], strides = [1, 1]} : vector<12x512xf32> to vector<10x512xf32>
    %72 = tpu.concatenate %69, %70, %71 in 1 : vector<10x512xf32>, vector<10x512xf32>, vector<10x512xf32> -> vector<10x1536xf32>
    %73 = tpu.concatenate %68, %72 in 0 : vector<10x1536xf32>, vector<10x1536xf32> -> vector<20x1536xf32>
    %c0_22 = arith.constant 0 : index
    %c0_23 = arith.constant 0 : index
    %74 = vector.load %arg7[%c0_22, %c0_23] : memref<1536x320xf32, #tpu.memory_space<vmem>>, vector<1536x320xf32>
    %cst_24 = arith.constant dense<0.000000e+00> : vector<20x320xf32>
    %75 = tpu.matmul %73, %74, %cst_24 {dimension_numbers = #tpu.dot_dimension_numbers<[1], [0], [0], [1], [0, 0, 1, 1], [], []>} : vector<20x1536xf32>, vector<1536x320xf32>, vector<20x320xf32> -> vector<20x320xf32>
    %c0_25 = arith.constant 0 : index
    %c0_26 = arith.constant 0 : index
    %76 = vector.load %arg8[%c0_25, %c0_26] : memref<1x320xf32, #tpu.memory_space<vmem>>, vector<1x320xf32>
    %77 = vector.broadcast %76 : vector<1x320xf32> to vector<20x320xf32>
    %78 = arith.addf %75, %77 : vector<20x320xf32>
    %cst_27 = arith.constant 0.000000e+00 : f32
    %79 = vector.broadcast %cst_27 : f32 to vector<20x320xf32>
    %80 = arith.maximumf %78, %79 : vector<20x320xf32>
    %81 = vector.extract_strided_slice %80 {offsets = [0, 0], sizes = [10, 320], strides = [1, 1]} : vector<20x320xf32> to vector<10x320xf32>
    %82 = vector.extract_strided_slice %80 {offsets = [10, 0], sizes = [10, 320], strides = [1, 1]} : vector<20x320xf32> to vector<10x320xf32>
    %cst_28 = arith.constant 0.000000e+00 : f32
    %83 = vector.broadcast %cst_28 : f32 to vector<2x320xf32>
    %84 = tpu.concatenate %83, %81, %83 in 0 : vector<2x320xf32>, vector<10x320xf32>, vector<2x320xf32> -> vector<14x320xf32>
    %85 = tpu.concatenate %83, %82, %83 in 0 : vector<2x320xf32>, vector<10x320xf32>, vector<2x320xf32> -> vector<14x320xf32>
    %86 = vector.extract_strided_slice %84 {offsets = [0, 0], sizes = [12, 320], strides = [1, 1]} : vector<14x320xf32> to vector<12x320xf32>
    %87 = vector.extract_strided_slice %84 {offsets = [1, 0], sizes = [12, 320], strides = [1, 1]} : vector<14x320xf32> to vector<12x320xf32>
    %88 = vector.extract_strided_slice %84 {offsets = [2, 0], sizes = [12, 320], strides = [1, 1]} : vector<14x320xf32> to vector<12x320xf32>
    %89 = tpu.concatenate %86, %87, %88 in 1 : vector<12x320xf32>, vector<12x320xf32>, vector<12x320xf32> -> vector<12x960xf32>
    %90 = vector.extract_strided_slice %85 {offsets = [0, 0], sizes = [12, 320], strides = [1, 1]} : vector<14x320xf32> to vector<12x320xf32>
    %91 = vector.extract_strided_slice %85 {offsets = [1, 0], sizes = [12, 320], strides = [1, 1]} : vector<14x320xf32> to vector<12x320xf32>
    %92 = vector.extract_strided_slice %85 {offsets = [2, 0], sizes = [12, 320], strides = [1, 1]} : vector<14x320xf32> to vector<12x320xf32>
    %93 = tpu.concatenate %90, %91, %92 in 1 : vector<12x320xf32>, vector<12x320xf32>, vector<12x320xf32> -> vector<12x960xf32>
    %94 = tpu.concatenate %89, %93 in 0 : vector<12x960xf32>, vector<12x960xf32> -> vector<24x960xf32>
    %c0_29 = arith.constant 0 : index
    %c0_30 = arith.constant 0 : index
    %95 = vector.load %arg9[%c0_29, %c0_30] : memref<960x48xf32, #tpu.memory_space<vmem>>, vector<960x48xf32>
    %cst_31 = arith.constant dense<0.000000e+00> : vector<24x48xf32>
    %96 = tpu.matmul %94, %95, %cst_31 {dimension_numbers = #tpu.dot_dimension_numbers<[1], [0], [0], [1], [0, 0, 1, 1], [], []>} : vector<24x960xf32>, vector<960x48xf32>, vector<24x48xf32> -> vector<24x48xf32>
    %c0_32 = arith.constant 0 : index
    %c0_33 = arith.constant 0 : index
    %97 = vector.load %arg10[%c0_32, %c0_33] : memref<1x48xf32, #tpu.memory_space<vmem>>, vector<1x48xf32>
    %98 = vector.broadcast %97 : vector<1x48xf32> to vector<24x48xf32>
    %99 = arith.addf %96, %98 : vector<24x48xf32>
    %cst_34 = arith.constant 0.000000e+00 : f32
    %100 = vector.broadcast %cst_34 : f32 to vector<24x48xf32>
    %101 = arith.maximumf %99, %100 : vector<24x48xf32>
    %102 = vector.extract_strided_slice %101 {offsets = [0, 0], sizes = [12, 48], strides = [1, 1]} : vector<24x48xf32> to vector<12x48xf32>
    %103 = vector.extract_strided_slice %101 {offsets = [12, 0], sizes = [12, 48], strides = [1, 1]} : vector<24x48xf32> to vector<12x48xf32>
    %cst_35 = arith.constant 0.000000e+00 : f32
    %104 = vector.broadcast %cst_35 : f32 to vector<4x48xf32>
    %105 = tpu.concatenate %104, %102, %104 in 0 : vector<4x48xf32>, vector<12x48xf32>, vector<4x48xf32> -> vector<20x48xf32>
    %106 = tpu.concatenate %104, %103, %104 in 0 : vector<4x48xf32>, vector<12x48xf32>, vector<4x48xf32> -> vector<20x48xf32>
    %107 = vector.extract_strided_slice %105 {offsets = [0, 0], sizes = [16, 48], strides = [1, 1]} : vector<20x48xf32> to vector<16x48xf32>
    %108 = vector.extract_strided_slice %105 {offsets = [1, 0], sizes = [16, 48], strides = [1, 1]} : vector<20x48xf32> to vector<16x48xf32>
    %109 = vector.extract_strided_slice %105 {offsets = [2, 0], sizes = [16, 48], strides = [1, 1]} : vector<20x48xf32> to vector<16x48xf32>
    %110 = vector.extract_strided_slice %105 {offsets = [3, 0], sizes = [16, 48], strides = [1, 1]} : vector<20x48xf32> to vector<16x48xf32>
    %111 = vector.extract_strided_slice %105 {offsets = [4, 0], sizes = [16, 48], strides = [1, 1]} : vector<20x48xf32> to vector<16x48xf32>
    %112 = tpu.concatenate %107, %108, %109, %110, %111 in 1 : vector<16x48xf32>, vector<16x48xf32>, vector<16x48xf32>, vector<16x48xf32>, vector<16x48xf32> -> vector<16x240xf32>
    %113 = vector.extract_strided_slice %106 {offsets = [0, 0], sizes = [16, 48], strides = [1, 1]} : vector<20x48xf32> to vector<16x48xf32>
    %114 = vector.extract_strided_slice %106 {offsets = [1, 0], sizes = [16, 48], strides = [1, 1]} : vector<20x48xf32> to vector<16x48xf32>
    %115 = vector.extract_strided_slice %106 {offsets = [2, 0], sizes = [16, 48], strides = [1, 1]} : vector<20x48xf32> to vector<16x48xf32>
    %116 = vector.extract_strided_slice %106 {offsets = [3, 0], sizes = [16, 48], strides = [1, 1]} : vector<20x48xf32> to vector<16x48xf32>
    %117 = vector.extract_strided_slice %106 {offsets = [4, 0], sizes = [16, 48], strides = [1, 1]} : vector<20x48xf32> to vector<16x48xf32>
    %118 = tpu.concatenate %113, %114, %115, %116, %117 in 1 : vector<16x48xf32>, vector<16x48xf32>, vector<16x48xf32>, vector<16x48xf32>, vector<16x48xf32> -> vector<16x240xf32>
    %119 = tpu.concatenate %112, %118 in 0 : vector<16x240xf32>, vector<16x240xf32> -> vector<32x240xf32>
    %c0_36 = arith.constant 0 : index
    %c0_37 = arith.constant 0 : index
    %120 = vector.load %arg11[%c0_36, %c0_37] : memref<240x16xf32, #tpu.memory_space<vmem>>, vector<240x16xf32>
    %cst_38 = arith.constant dense<0.000000e+00> : vector<32x16xf32>
    %121 = tpu.matmul %119, %120, %cst_38 {dimension_numbers = #tpu.dot_dimension_numbers<[1], [0], [0], [1], [0, 0, 1, 1], [], []>} : vector<32x240xf32>, vector<240x16xf32>, vector<32x16xf32> -> vector<32x16xf32>
    %c0_39 = arith.constant 0 : index
    %c0_40 = arith.constant 0 : index
    %122 = vector.load %arg12[%c0_39, %c0_40] : memref<1x16xf32, #tpu.memory_space<vmem>>, vector<1x16xf32>
    %123 = vector.broadcast %122 : vector<1x16xf32> to vector<32x16xf32>
    %124 = arith.addf %121, %123 : vector<32x16xf32>
    %125 = vector.extract_strided_slice %124 {offsets = [0, 0], sizes = [16, 16], strides = [1, 1]} : vector<32x16xf32> to vector<16x16xf32>
    %126 = vector.extract_strided_slice %124 {offsets = [16, 0], sizes = [16, 16], strides = [1, 1]} : vector<32x16xf32> to vector<16x16xf32>
    %c0_41 = arith.constant 0 : index
    %c0_42 = arith.constant 0 : index
    %c0_43 = arith.constant 0 : index
    %127 = vector.load %arg13[%c0_41, %c0_42, %c0_43] : memref<2x16x16xf32, #tpu.memory_space<vmem>>, vector<1x16x16xf32>
    %128 = vector.shape_cast %127 : vector<1x16x16xf32> to vector<16x16xf32>
    %129 = vector.shape_cast %125 : vector<16x16xf32> to vector<1x16x16xf32>
    tpu.vector_store %arg13[%c0_41, %c0_42, %c0_43], %129 {strides = array<i32>} : memref<2x16x16xf32, #tpu.memory_space<vmem>>, vector<1x16x16xf32>,
    %c1_44 = arith.constant 1 : index
    %c0_45 = arith.constant 0 : index
    %c0_46 = arith.constant 0 : index
    %130 = vector.load %arg13[%c1_44, %c0_45, %c0_46] : memref<2x16x16xf32, #tpu.memory_space<vmem>>, vector<1x16x16xf32>
    %131 = vector.shape_cast %130 : vector<1x16x16xf32> to vector<16x16xf32>
    %132 = vector.shape_cast %126 : vector<16x16xf32> to vector<1x16x16xf32>
    tpu.vector_store %arg13[%c1_44, %c0_45, %c0_46], %132 {strides = array<i32>} : memref<2x16x16xf32, #tpu.memory_space<vmem>>, vector<1x16x16xf32>,
    return
  }
}

</mosaic_0001>

<llo_original>
// kernel: torch_conv_model_forward.1
$region0: #{torch_conv_model_forward.1}
  #allocation0 [shape = 'u32[]', space=smem, size = 0x4, offset = 0x4, fixed_abs, tag = 'smem constant byte address 0x4 - core index']
  #allocation1 [shape = 'u32[144,128]{1,0:T(1,128)}', space=vmem, size = 0x12000, scoped, tag = 'internal scratch']
  %s0 = inlined_call_operand.vmem [shape: f32[2,16,16], index: 0, kind: input, shape index: {}]
  %s1 = inlined_call_operand.vmem [shape: f32[80,48], index: 1, kind: input, shape index: {}]
  %s2 = inlined_call_operand.vmem [shape: f32[1,48], index: 2, kind: input, shape index: {}]
  %s3 = inlined_call_operand.vmem [shape: f32[144,320], index: 3, kind: input, shape index: {}]
  %s4 = inlined_call_operand.vmem [shape: f32[1,320], index: 4, kind: input, shape index: {}]
  %s5 = inlined_call_operand.vmem [shape: f32[960,512], index: 5, kind: input, shape index: {}]
  %s6 = inlined_call_operand.vmem [shape: f32[1,512], index: 6, kind: input, shape index: {}]
  %s7 = inlined_call_operand.vmem [shape: f32[1536,320], index: 7, kind: input, shape index: {}]
  %s8 = inlined_call_operand.vmem [shape: f32[1,320], index: 8, kind: input, shape index: {}]
  %s9 = inlined_call_operand.vmem [shape: f32[960,48], index: 9, kind: input, shape index: {}]
  %s10 = inlined_call_operand.vmem [shape: f32[1,48], index: 10, kind: input, shape index: {}]
  %s11 = inlined_call_operand.vmem [shape: f32[240,16], index: 11, kind: input, shape index: {}]
  %s12 = inlined_call_operand.vmem [shape: f32[1,16], index: 12, kind: input, shape index: {}]
  %s13 = inlined_call_operand.hbm [shape: f32[2,16,16], index: 13, kind: output, shape index: {}]
  %s14 = sld [smem:[#allocation0]]
  $region62: #{torch_conv_model_forward.1} parent=0
    _
  %s16 = ssub.s32 1, %s14
  %s17 = scalar_select 0, %s16, %s14
  $region1: #{torch_conv_model_forward.1} parent=0
    #allocation2 [shape = 'u8[16384]{0}', space=vmem, size = 0x4000, scoped, tag = 'output window, operand 0, single buffered']
    #allocation3 [shape = 's32[1]{0}', space=sflag, size = 0x4, scoped, tag = 'scoped memory for torch_conv_model_forward.1']
    %18 = vsyncpa [#allocation3], 0
    // Predicated region
    $region2: #{torch_conv_model_forward.1} parent=1 // pred_check
      _
    $region3: #{torch_conv_model_forward.1} parent=1 // pred_check_branch
      %20 = sbr.rel (0) target = $region5
    $region4: #{torch_conv_model_forward.1} parent=1 // pred_region
      _
    $region5: #{torch_conv_model_forward.1} parent=1 // pred_fallthru
      _
    // Predicated region
    $region6: #{torch_conv_model_forward.1} parent=1 // pred_check
      _
    $region7: #{torch_conv_model_forward.1} parent=1 // pred_check_branch
      %22 = sbr.rel (0) target = $region9
    $region8: #{torch_conv_model_forward.1} parent=1 // pred_region
      _
    $region9: #{torch_conv_model_forward.1} parent=1 // pred_fallthru
      _
    // Predicated region
    $region10: #{torch_conv_model_forward.1} parent=1 // pred_check
      _
    $region11: #{torch_conv_model_forward.1} parent=1 // pred_check_branch
      %24 = sbr.rel (0) target = $region13
    $region12: #{torch_conv_model_forward.1} parent=1 // pred_region
      _
    $region13: #{torch_conv_model_forward.1} parent=1 // pred_fallthru
      _
    // Predicated region
    $region14: #{torch_conv_model_forward.1} parent=1 // pred_check
      _
    $region15: #{torch_conv_model_forward.1} parent=1 // pred_check_branch
      %26 = sbr.rel (0) target = $region17
    $region16: #{torch_conv_model_forward.1} parent=1 // pred_region
      _
    $region17: #{torch_conv_model_forward.1} parent=1 // pred_fallthru
      _
    // Predicated region
    $region18: #{torch_conv_model_forward.1} parent=1 // pred_check
      _
    $region19: #{torch_conv_model_forward.1} parent=1 // pred_check_branch
      %28 = sbr.rel (0) target = $region21
    $region20: #{torch_conv_model_forward.1} parent=1 // pred_region
      _
    $region21: #{torch_conv_model_forward.1} parent=1 // pred_fallthru
      _
    // Predicated region
    $region22: #{torch_conv_model_forward.1} parent=1 // pred_check
      _
    $region23: #{torch_conv_model_forward.1} parent=1 // pred_check_branch
      %30 = sbr.rel (0) target = $region25
    $region24: #{torch_conv_model_forward.1} parent=1 // pred_region
      _
    $region25: #{torch_conv_model_forward.1} parent=1 // pred_fallthru
      _
    // Predicated region
    $region26: #{torch_conv_model_forward.1} parent=1 // pred_check
      _
    $region27: #{torch_conv_model_forward.1} parent=1 // pred_check_branch
      %32 = sbr.rel (0) target = $region29
    $region28: #{torch_conv_model_forward.1} parent=1 // pred_region
      _
    $region29: #{torch_conv_model_forward.1} parent=1 // pred_fallthru
      _
    // Predicated region
    $region30: #{torch_conv_model_forward.1} parent=1 // pred_check
      _
    $region31: #{torch_conv_model_forward.1} parent=1 // pred_check_branch
      %34 = sbr.rel (0) target = $region33
    $region32: #{torch_conv_model_forward.1} parent=1 // pred_region
      _
    $region33: #{torch_conv_model_forward.1} parent=1 // pred_fallthru
      _
    // Predicated region
    $region34: #{torch_conv_model_forward.1} parent=1 // pred_check
      _
    $region35: #{torch_conv_model_forward.1} parent=1 // pred_check_branch
      %36 = sbr.rel (0) target = $region37
    $region36: #{torch_conv_model_forward.1} parent=1 // pred_region
      _
    $region37: #{torch_conv_model_forward.1} parent=1 // pred_fallthru
      _
    // Predicated region
    $region38: #{torch_conv_model_forward.1} parent=1 // pred_check
      _
    $region39: #{torch_conv_model_forward.1} parent=1 // pred_check_branch
      %38 = sbr.rel (0) target = $region41
    $region40: #{torch_conv_model_forward.1} parent=1 // pred_region
      _
    $region41: #{torch_conv_model_forward.1} parent=1 // pred_fallthru
      _
    // Predicated region
    $region42: #{torch_conv_model_forward.1} parent=1 // pred_check
      _
    $region43: #{torch_conv_model_forward.1} parent=1 // pred_check_branch
      %40 = sbr.rel (0) target = $region45
    $region44: #{torch_conv_model_forward.1} parent=1 // pred_region
      _
    $region45: #{torch_conv_model_forward.1} parent=1 // pred_fallthru
      _
    // Predicated region
    $region46: #{torch_conv_model_forward.1} parent=1 // pred_check
      _
    $region47: #{torch_conv_model_forward.1} parent=1 // pred_check_branch
      %42 = sbr.rel (0) target = $region49
    $region48: #{torch_conv_model_forward.1} parent=1 // pred_region
      _
    $region49: #{torch_conv_model_forward.1} parent=1 // pred_fallthru
      _
    // Predicated region
    $region50: #{torch_conv_model_forward.1} parent=1 // pred_check
      _
    $region51: #{torch_conv_model_forward.1} parent=1 // pred_check_branch
      %44 = sbr.rel (0) target = $region53
    $region52: #{torch_conv_model_forward.1} parent=1 // pred_region
      _
    $region53: #{torch_conv_model_forward.1} parent=1 // pred_fallthru
      _
    %v45 = vld [vmem:[%s0] sm:$0xff]
    %v46 = vld [vmem:[%s0 + $0x8] sm:$0xff]
    %s47 = scalar_lea.vmem %s0, 16
    %v48 = vld [vmem:[%s47] sm:$0xff]
    %v49 = vld [vmem:[%s47 + $0x8] sm:$0xff]
    %vm52 = vcmask 1046528
    %v53 = vrot.slane %v45, 1
    %v54 = vrot.slane %v46, 1
    %v55 = vsel %vm52, %v53, %v54
    %56 = vrot.lane.b32.xlu0 %v55, 16
    %v57 = vpop.permute.xlu0 %56
    %58 = vrot.lane.b32.xlu0 %v54, 16
    %v59 = vpop.permute.xlu0 %58
    %vm62 = vcmask 1045504
    %v63 = vrot.slane %v45, 2
    %v64 = vrot.slane %v46, 2
    %v65 = vsel %vm62, %v63, %v64
    %66 = vrot.lane.b32.xlu0 %v65, 32
    %v67 = vpop.permute.xlu0 %66
    %68 = vrot.lane.b32.xlu0 %v64, 32
    %v69 = vpop.permute.xlu0 %68
    %vm72 = vcmask 1044480
    %v73 = vrot.slane %v45, 3
    %v74 = vrot.slane %v46, 3
    %v75 = vsel %vm72, %v73, %v74
    %76 = vrot.lane.b32.xlu0 %v75, 48
    %v77 = vpop.permute.xlu0 %76
    %78 = vrot.lane.b32.xlu0 %v74, 48
    %v79 = vpop.permute.xlu0 %78
    %vm82 = vcmask 1043456
    %v83 = vrot.slane %v45, 4
    %v84 = vrot.slane %v46, 4
    %v85 = vsel %vm82, %v83, %v84
    %86 = vrot.lane.b32.xlu0 %v85, 64
    %v87 = vpop.permute.xlu0 %86
    %88 = vrot.lane.b32.xlu0 %v84, 64
    %v89 = vpop.permute.xlu0 %88
    %vm92 = vcmask 130048
    %v93 = vsel %vm92, %v45, %v57
    %v94 = vsel %vm92, %v46, %v59
    %vm95 = vcmask 261120
    %v96 = vsel %vm95, %v93, %v67
    %v97 = vsel %vm95, %v94, %v69
    %vm98 = vcmask 392192
    %v99 = vsel %vm98, %v96, %v77
    %v100 = vsel %vm98, %v97, %v79
    %vm101 = vcmask 523264
    %v102 = vsel %vm101, %v99, %v87
    %v103 = vsel %vm101, %v100, %v89
    %v106 = vrot.slane %v48, 1
    %v107 = vrot.slane %v49, 1
    %v108 = vsel %vm52, %v106, %v107
    %109 = vrot.lane.b32.xlu0 %v108, 16
    %v110 = vpop.permute.xlu0 %109
    %111 = vrot.lane.b32.xlu0 %v107, 16
    %v112 = vpop.permute.xlu0 %111
    %v115 = vrot.slane %v48, 2
    %v116 = vrot.slane %v49, 2
    %v117 = vsel %vm62, %v115, %v116
    %118 = vrot.lane.b32.xlu0 %v117, 32
    %v119 = vpop.permute.xlu0 %118
    %120 = vrot.lane.b32.xlu0 %v116, 32
    %v121 = vpop.permute.xlu0 %120
    %v124 = vrot.slane %v48, 3
    %v125 = vrot.slane %v49, 3
    %v126 = vsel %vm72, %v124, %v125
    %127 = vrot.lane.b32.xlu0 %v126, 48
    %v128 = vpop.permute.xlu0 %127
    %129 = vrot.lane.b32.xlu0 %v125, 48
    %v130 = vpop.permute.xlu0 %129
    %v133 = vrot.slane %v48, 4
    %v134 = vrot.slane %v49, 4
    %v135 = vsel %vm82, %v133, %v134
    %136 = vrot.lane.b32.xlu0 %v135, 64
    %v137 = vpop.permute.xlu0 %136
    %138 = vrot.lane.b32.xlu0 %v134, 64
    %v139 = vpop.permute.xlu0 %138
    %v142 = vsel %vm92, %v48, %v110
    %v143 = vsel %vm92, %v49, %v112
    %v144 = vsel %vm95, %v142, %v119
    %v145 = vsel %vm95, %v143, %v121
    %v146 = vsel %vm98, %v144, %v128
    %v147 = vsel %vm98, %v145, %v130
    %v148 = vsel %vm101, %v146, %v137
    %v149 = vsel %vm101, %v147, %v139
    %v152 = vrot.slane %v148, 4
    %v153 = vrot.slane %v149, 4
    %v154 = vsel %vm82, %v152, %v153
    %v156 = vsel %vm82, %v103, %v152
    %v157 = vld [vmem:[%s1] sm:$0xff]
    %v158 = vld [vmem:[%s1 + $0x8] sm:$0xff]
    %v159 = vld [vmem:[%s1 + $0x10] sm:$0xff]
    %v160 = vld [vmem:[%s1 + $0x18] sm:$0xff]
    %v161 = vld [vmem:[%s1 + $0x20] sm:$0xff]
    %v162 = vld [vmem:[%s1 + $0x28] sm:$0xff]
    %v163 = vld [vmem:[%s1 + $0x30] sm:$0xff]
    %v164 = vld [vmem:[%s1 + $0x38] sm:$0xff]
    %v165 = vld [vmem:[%s1 + $0x40] sm:$0xff]
    %v166 = vld [vmem:[%s1 + $0x48] sm:$0xff]
    %v167 = vld [vmem:[%s2] sm:$0x1]
    %v169 = vlaneseq
    %v170 = vshrl.u32 %v169, 7
    %v171 = vsub.s32 0, %v170
    %v172 = vrot.slane %v167, %v171
    %vm174 = vcmask 654336
    %v176 = vsel %vm174, %v102, 0
    %v179 = vsel %vm174, %v156, 0
    %v181 = vsel %vm174, %v154, 0
    %183 = vmatprep.subr.mxu0 0.0
    %184 = vmatpush1.msra.mxu0 %v157
    %185 = vmatprep.subr.mxu0 0.0
    %186 = vmatpush1.msra.mxu0 %v158
    %187 = vmatprep.subr.mxu0 0.0
    %188 = vmatpush1.msra.mxu0 %v159
    %189 = vmatprep.subr.mxu0 0.0
    %190 = vmatpush1.msra.mxu0 %v160
    %191 = vmatprep.subr.mxu0 0.0
    %192 = vmatpush1.msra.mxu0 %v161
    %193 = vmatprep.subr.mxu0 0.0
    %194 = vmatpush1.msra.mxu0 %v162
    %195 = vmatprep.subr.mxu0 0.0
    %196 = vmatpush1.msra.mxu0 %v163
    %197 = vmatprep.subr.mxu0 0.0
    %198 = vmatpush1.msra.mxu0 %v164
    %199 = vmatprep.subr.mxu0 0.0
    %200 = vmatpush1.msra.mxu0 %v165
    %201 = vmatprep.subr.mxu0 0.0
    %202 = vmatpush1.msra.mxu0 %v166
    %203 = vmatprep.subr.mxu0 0.0
    %204 = vmatpush1.msra.mxu0 0.0
    %205 = vmatprep.subr.mxu0 0.0
    %206 = vmatpush1.msra.mxu0 0.0
    %207 = vmatprep.subr.mxu0 0.0
    %208 = vmatpush1.msra.mxu0 0.0
    %209 = vmatprep.subr.mxu0 0.0
    %210 = vmatpush1.msra.mxu0 0.0
    %211 = vmatprep.subr.mxu0 0.0
    %212 = vmatpush1.msra.mxu0 0.0
    %213 = vmatprep.subr.mxu0 0.0
    %214 = vmatpush1.msra.mxu0 0.0
    %215 = vmatprep.subr.mxu0 0.0
    %216 = vmatpush1.msra.mxu0 0.0
    %217 = vmatprep.subr.mxu0 0.0
    %218 = vmatpush1.msra.mxu0 0.0
    %219 = vmatprep.subr.mxu0 0.0
    %220 = vmatpush1.msra.mxu0 0.0
    %221 = vmatprep.subr.mxu0 0.0
    %222 = vmatpush1.msra.mxu0 0.0
    %223 = vmatprep.subr.mxu0 0.0
    %224 = vmatpush1.msra.mxu0 0.0
    %225 = vmatprep.subr.mxu0 0.0
    %226 = vmatpush1.msra.mxu0 0.0
    %227 = vmatprep.subr.mxu0 0.0
    %228 = vmatpush1.msra.mxu0 0.0
    %229 = vmatprep.subr.mxu0 0.0
    %230 = vmatpush1.msra.mxu0 0.0
    %231 = vmatprep.subr.mxu0 0.0
    %232 = vmatpush1.msra.mxu0 0.0
    %233 = vmatprep.subr.mxu0 0.0
    %234 = vmatpush1.msra.mxu0 0.0
    %235 = vmatprep.subr.mxu0 0.0
    %236 = vmatpush1.msra.mxu0 0.0
    %237 = vmatprep.subr.mxu0 0.0
    %238 = vmatpush1.msra.mxu0 0.0
    %239 = vmatprep.subr.mxu0 0.0
    %240 = vmatpush1.msra.mxu0 0.0
    %241 = vmatprep.subr.mxu0 0.0
    %242 = vmatpush1.msra.mxu0 0.0
    %243 = vmatprep.subr.mxu0 0.0
    %244 = vmatpush1.msra.mxu0 0.0
    %245 = vmatprep.subr.mxu0 0.0
    %246 = vmatpush1.msra.mxu0 0.0
    %247 = vmatprep.mubr.f32.mxu0 0.0
    %248 = vmatmul.mubr.f32.gmra.mrb[0].mxu0 %v176
    %v249 = vpop.f32.mrb[0].mxu0
    %v250 = vadd.f32 %v172, %v249
    %v251 = vpop.f32.mrb[0].mxu0
    %252 = vmatprep.mubr.f32.mxu0 0.0
    %253 = vmatmul.mubr.f32.gmra.mrb[0].mxu0 %v179
    %v254 = vpop.f32.mrb[0].mxu0
    %v255 = vadd.f32 %v172, %v254
    %v256 = vpop.f32.mrb[0].mxu0
    %257 = vmatprep.mubr.f32.mxu0 0.0
    %258 = vmatmul.mubr.f32.gmra.mrb[0].mxu0 %v181
    %v259 = vpop.f32.mrb[0].mxu0
    %v260 = vadd.f32 %v172, %v259
    %v261 = vpop.f32.mrb[0].mxu0
    %262 = vdwg.mxu0
    %v263 = vmax.f32 %v250, 0.0
    %v264 = vmax.f32 %v255, 0.0
    %v265 = vmax.f32 %v260, 0.0
    %v268 = vrot.slane %v263, 1
    %v269 = vrot.slane %v264, 1
    %v270 = vsel %vm52, %v268, %v269
    %271 = vrot.lane.b32.xlu0 %v270, 48
    %v272 = vpop.permute.xlu0 %271
    %273 = vrot.lane.b32.xlu0 %v269, 48
    %v274 = vpop.permute.xlu0 %273
    %v277 = vrot.slane %v263, 2
    %v278 = vrot.slane %v264, 2
    %v279 = vsel %vm62, %v277, %v278
    %280 = vrot.lane.b32.xlu0 %v279, 96
    %v281 = vpop.permute.xlu0 %280
    %282 = vrot.lane.b32.xlu0 %v278, 96
    %v283 = vpop.permute.xlu0 %282
    %v286 = vsel %vm98, %v263, %v272
    %v287 = vsel %vm98, %v264, %v274
    %vm288 = vcmask 785408
    %v289 = vsel %vm288, %v286, %v281
    %v290 = vsel %vm288, %v287, %v283
    %v292 = vrot.slane %v265, 1
    %v293 = vsel %vm52, %v269, %v292
    %294 = vrot.lane.b32.xlu0 %v293, 48
    %v295 = vpop.permute.xlu0 %294
    %296 = vrot.lane.b32.xlu0 %v292, 48
    %v297 = vpop.permute.xlu0 %296
    %v300 = vrot.slane %v265, 2
    %v301 = vsel %vm62, %v278, %v300
    %302 = vrot.lane.b32.xlu0 %v301, 96
    %v303 = vpop.permute.xlu0 %302
    %304 = vrot.lane.b32.xlu0 %v300, 96
    %v305 = vpop.permute.xlu0 %304
    %v308 = vsel %vm98, %v264, %v295
    %v309 = vsel %vm98, %v265, %v297
    %v310 = vsel %vm288, %v308, %v303
    %v311 = vsel %vm288, %v309, %v305
    %v314 = vrot.slane %v310, 2
    %v315 = vrot.slane %v311, 2
    %v316 = vsel %vm62, %v314, %v315
    %v317 = vrot.slane %v303, 2
    %v318 = vrot.slane %v305, 2
    %v319 = vsel %vm62, %v317, %v318
    %vm323 = vcmask 1041408
    %v324 = vsel %vm323, %v290, %v316
    %v325 = vsel %vm323, %v283, %v319
    %v326 = vld [vmem:[%s3] sm:$0xff]
    %v327 = vld [vmem:[%s3 + $0x8] sm:$0xff]
    %v328 = vld [vmem:[%s3 + $0x10] sm:$0xff]
    %v329 = vld [vmem:[%s3 + $0x18] sm:$0xff]
    %v330 = vld [vmem:[%s3 + $0x20] sm:$0xff]
    %v331 = vld [vmem:[%s3 + $0x28] sm:$0xff]
    %v332 = vld [vmem:[%s3 + $0x30] sm:$0xff]
    %v333 = vld [vmem:[%s3 + $0x38] sm:$0xff]
    %v334 = vld [vmem:[%s3 + $0x40] sm:$0xff]
    %v335 = vld [vmem:[%s3 + $0x48] sm:$0xff]
    %v336 = vld [vmem:[%s3 + $0x50] sm:$0xff]
    %v337 = vld [vmem:[%s3 + $0x58] sm:$0xff]
    %v338 = vld [vmem:[%s3 + $0x60] sm:$0xff]
    %v339 = vld [vmem:[%s3 + $0x68] sm:$0xff]
    %v340 = vld [vmem:[%s3 + $0x70] sm:$0xff]
    %v341 = vld [vmem:[%s3 + $0x78] sm:$0xff]
    %v342 = vld [vmem:[%s3 + $0x80] sm:$0xff]
    %v343 = vld [vmem:[%s3 + $0x88] sm:$0xff]
    %v344 = vld [vmem:[%s3 + $0x90] sm:$0xff]
    %v345 = vld [vmem:[%s3 + $0x98] sm:$0xff]
    %v346 = vld [vmem:[%s3 + $0xa0] sm:$0xff]
    %v347 = vld [vmem:[%s3 + $0xa8] sm:$0xff]
    %v348 = vld [vmem:[%s3 + $0xb0] sm:$0xff]
    %v349 = vld [vmem:[%s3 + $0xb8] sm:$0xff]
    %v350 = vld [vmem:[%s3 + $0xc0] sm:$0xff]
    %v351 = vld [vmem:[%s3 + $0xc8] sm:$0xff]
    %v352 = vld [vmem:[%s3 + $0xd0] sm:$0xff]
    %v353 = vld [vmem:[%s3 + $0xd8] sm:$0xff]
    %v354 = vld [vmem:[%s3 + $0xe0] sm:$0xff]
    %v355 = vld [vmem:[%s3 + $0xe8] sm:$0xff]
    %v356 = vld [vmem:[%s3 + $0xf0] sm:$0xff]
    %v357 = vld [vmem:[%s3 + $0xf8] sm:$0xff]
    %v358 = vld [vmem:[%s3 + $0x100] sm:$0xff]
    %v359 = vld [vmem:[%s3 + $0x108] sm:$0xff]
    %v360 = vld [vmem:[%s3 + $0x110] sm:$0xff]
    %v361 = vld [vmem:[%s3 + $0x118] sm:$0xff]
    %v362 = vld [vmem:[%s3 + $0x120] sm:$0xff]
    %v363 = vld [vmem:[%s3 + $0x128] sm:$0xff]
    %v364 = vld [vmem:[%s3 + $0x130] sm:$0xff]
    %v365 = vld [vmem:[%s3 + $0x138] sm:$0xff]
    %v366 = vld [vmem:[%s3 + $0x140] sm:$0xff]
    %v367 = vld [vmem:[%s3 + $0x148] sm:$0xff]
    %v368 = vld [vmem:[%s3 + $0x150] sm:$0xff]
    %v369 = vld [vmem:[%s3 + $0x158] sm:$0xff]
    %v370 = vld [vmem:[%s3 + $0x160] sm:$0xff]
    %v371 = vld [vmem:[%s3 + $0x168] sm:$0xff]
    %v372 = vld [vmem:[%s3 + $0x170] sm:$0xff]
    %v373 = vld [vmem:[%s3 + $0x178] sm:$0xff]
    %v374 = vld [vmem:[%s3 + $0x180] sm:$0xff]
    %v375 = vld [vmem:[%s3 + $0x188] sm:$0xff]
    %v376 = vld [vmem:[%s3 + $0x190] sm:$0xff]
    %v377 = vld [vmem:[%s3 + $0x198] sm:$0xff]
    %v378 = vld [vmem:[%s3 + $0x1a0] sm:$0xff]
    %v379 = vld [vmem:[%s3 + $0x1a8] sm:$0xff]
    %v380 = vld [vmem:[%s4] sm:$0x7]
    %v382 = vlaneseq
    %v383 = vshrl.u32 %v382, 7
    %v384 = vsub.s32 0, %v383
    %v385 = vrot.slane %v380, %v384
    %v386 = vlaneseq
    %v387 = vshrl.u32 %v386, 7
    %v388 = vsub.s32 1, %v387
    %v389 = vrot.slane %v380, %v388
    %v390 = vlaneseq
    %v391 = vshrl.u32 %v390, 7
    %v392 = vsub.s32 2, %v391
    %v393 = vrot.slane %v380, %v392
    %v397 = vsel %vm92, %v281, 0
    %v400 = vsel %vm92, %v325, 0
    %v402 = vsel %vm92, %v318, 0
    %404 = vmatprep.subr.mxu0 %v327
    %405 = vmatpush1.msra.mxu0 %v326
    %406 = vmatprep.subr.mxu0 %v330
    %407 = vmatpush1.msra.mxu0 %v329
    %408 = vmatprep.subr.mxu0 %v333
    %409 = vmatpush1.msra.mxu0 %v332
    %410 = vmatprep.subr.mxu0 %v336
    %411 = vmatpush1.msra.mxu0 %v335
    %412 = vmatprep.subr.mxu0 %v339
    %413 = vmatpush1.msra.mxu0 %v338
    %414 = vmatprep.subr.mxu0 %v342
    %415 = vmatpush1.msra.mxu0 %v341
    %416 = vmatprep.subr.mxu0 %v345
    %417 = vmatpush1.msra.mxu0 %v344
    %418 = vmatprep.subr.mxu0 %v348
    %419 = vmatpush1.msra.mxu0 %v347
    %420 = vmatprep.subr.mxu0 %v351
    %421 = vmatpush1.msra.mxu0 %v350
    %422 = vmatprep.subr.mxu0 %v354
    %423 = vmatpush1.msra.mxu0 %v353
    %424 = vmatprep.subr.mxu0 %v357
    %425 = vmatpush1.msra.mxu0 %v356
    %426 = vmatprep.subr.mxu0 %v360
    %427 = vmatpush1.msra.mxu0 %v359
    %428 = vmatprep.subr.mxu0 %v363
    %429 = vmatpush1.msra.mxu0 %v362
    %430 = vmatprep.subr.mxu0 %v366
    %431 = vmatpush1.msra.mxu0 %v365
    %432 = vmatprep.subr.mxu0 %v369
    %433 = vmatpush1.msra.mxu0 %v368
    %434 = vmatprep.subr.mxu0 %v372
    %435 = vmatpush1.msra.mxu0 %v371
    %436 = vmatprep.subr.mxu0 %v375
    %437 = vmatpush1.msra.mxu0 %v374
    %438 = vmatprep.subr.mxu0 %v378
    %439 = vmatpush1.msra.mxu0 %v377
    %440 = vmatprep.subr.mxu0 0.0
    %441 = vmatpush1.msra.mxu0 0.0
    %442 = vmatprep.subr.mxu0 0.0
    %443 = vmatpush1.msra.mxu0 0.0
    %444 = vmatprep.subr.mxu0 0.0
    %445 = vmatpush1.msra.mxu0 0.0
    %446 = vmatprep.subr.mxu0 0.0
    %447 = vmatpush1.msra.mxu0 0.0
    %448 = vmatprep.subr.mxu0 0.0
    %449 = vmatpush1.msra.mxu0 0.0
    %450 = vmatprep.subr.mxu0 0.0
    %451 = vmatpush1.msra.mxu0 0.0
    %452 = vmatprep.subr.mxu0 0.0
    %453 = vmatpush1.msra.mxu0 0.0
    %454 = vmatprep.subr.mxu0 0.0
    %455 = vmatpush1.msra.mxu0 0.0
    %456 = vmatprep.subr.mxu0 0.0
    %457 = vmatpush1.msra.mxu0 0.0
    %458 = vmatprep.subr.mxu0 0.0
    %459 = vmatpush1.msra.mxu0 0.0
    %460 = vmatprep.subr.mxu0 0.0
    %461 = vmatpush1.msra.mxu0 0.0
    %462 = vmatprep.subr.mxu0 0.0
    %463 = vmatpush1.msra.mxu0 0.0
    %464 = vmatprep.subr.mxu0 0.0
    %465 = vmatpush1.msra.mxu0 0.0
    %466 = vmatprep.subr.mxu0 0.0
    %467 = vmatpush1.msra.mxu0 0.0
    %468 = vmatprep.mubr.f32.mxu0 %v397
    %469 = vmatmul.mubr.f32.gmra.mrb[0].mxu0 %v289
    %v470 = vpop.f32.mrb[0].mxu0
    %v471 = vadd.f32 %v385, %v470
    %v472 = vpop.f32.mrb[0].mxu0
    %v473 = vadd.f32 %v389, %v472
    %474 = vmatprep.mubr.f32.mxu0 %v400
    %475 = vmatmul.mubr.f32.gmra.mrb[0].mxu0 %v324
    %v476 = vpop.f32.mrb[0].mxu0
    %v477 = vadd.f32 %v385, %v476
    %v478 = vpop.f32.mrb[0].mxu0
    %v479 = vadd.f32 %v389, %v478
    %480 = vmatprep.mubr.f32.mxu0 %v402
    %481 = vmatmul.mubr.f32.gmra.mrb[0].mxu0 %v315
    %v482 = vpop.f32.mrb[0].mxu0
    %v483 = vadd.f32 %v385, %v482
    %v484 = vpop.f32.mrb[0].mxu0
    %v485 = vadd.f32 %v389, %v484
    %486 = vdwg.mxu0
    %487 = vmatprep.subr.mxu0 0.0
    %488 = vmatpush1.msra.mxu0 %v328
    %489 = vmatprep.subr.mxu0 0.0
    %490 = vmatpush1.msra.mxu0 %v331
    %491 = vmatprep.subr.mxu0 0.0
    %492 = vmatpush1.msra.mxu0 %v334
    %493 = vmatprep.subr.mxu0 0.0
    %494 = vmatpush1.msra.mxu0 %v337
    %495 = vmatprep.subr.mxu0 0.0
    %496 = vmatpush1.msra.mxu0 %v340
    %497 = vmatprep.subr.mxu0 0.0
    %498 = vmatpush1.msra.mxu0 %v343
    %499 = vmatprep.subr.mxu0 0.0
    %500 = vmatpush1.msra.mxu0 %v346
    %501 = vmatprep.subr.mxu0 0.0
    %502 = vmatpush1.msra.mxu0 %v349
    %503 = vmatprep.subr.mxu0 0.0
    %504 = vmatpush1.msra.mxu0 %v352
    %505 = vmatprep.subr.mxu0 0.0
    %506 = vmatpush1.msra.mxu0 %v355
    %507 = vmatprep.subr.mxu0 0.0
    %508 = vmatpush1.msra.mxu0 %v358
    %509 = vmatprep.subr.mxu0 0.0
    %510 = vmatpush1.msra.mxu0 %v361
    %511 = vmatprep.subr.mxu0 0.0
    %512 = vmatpush1.msra.mxu0 %v364
    %513 = vmatprep.subr.mxu0 0.0
    %514 = vmatpush1.msra.mxu0 %v367
    %515 = vmatprep.subr.mxu0 0.0
    %516 = vmatpush1.msra.mxu0 %v370
    %517 = vmatprep.subr.mxu0 0.0
    %518 = vmatpush1.msra.mxu0 %v373
    %519 = vmatprep.subr.mxu0 0.0
    %520 = vmatpush1.msra.mxu0 %v376
    %521 = vmatprep.subr.mxu0 0.0
    %522 = vmatpush1.msra.mxu0 %v379
    %523 = vmatprep.subr.mxu0 0.0
    %524 = vmatpush1.msra.mxu0 0.0
    %525 = vmatprep.subr.mxu0 0.0
    %526 = vmatpush1.msra.mxu0 0.0
    %527 = vmatprep.subr.mxu0 0.0
    %528 = vmatpush1.msra.mxu0 0.0
    %529 = vmatprep.subr.mxu0 0.0
    %530 = vmatpush1.msra.mxu0 0.0
    %531 = vmatprep.subr.mxu0 0.0
    %532 = vmatpush1.msra.mxu0 0.0
    %533 = vmatprep.subr.mxu0 0.0
    %534 = vmatpush1.msra.mxu0 0.0
    %535 = vmatprep.subr.mxu0 0.0
    %536 = vmatpush1.msra.mxu0 0.0
    %537 = vmatprep.subr.mxu0 0.0
    %538 = vmatpush1.msra.mxu0 0.0
    %539 = vmatprep.subr.mxu0 0.0
    %540 = vmatpush1.msra.mxu0 0.0
    %541 = vmatprep.subr.mxu0 0.0
    %542 = vmatpush1.msra.mxu0 0.0
    %543 = vmatprep.subr.mxu0 0.0
    %544 = vmatpush1.msra.mxu0 0.0
    %545 = vmatprep.subr.mxu0 0.0
    %546 = vmatpush1.msra.mxu0 0.0
    %547 = vmatprep.subr.mxu0 0.0
    %548 = vmatpush1.msra.mxu0 0.0
    %549 = vmatprep.subr.mxu0 0.0
    %550 = vmatpush1.msra.mxu0 0.0
    %551 = vmatprep.mubr.f32.mxu0 %v397
    %552 = vmatmul.mubr.f32.gmra.mrb[0].mxu0 %v289
    %v553 = vpop.f32.mrb[0].mxu0
    %v554 = vadd.f32 %v393, %v553
    %v555 = vpop.f32.mrb[0].mxu0
    %556 = vmatprep.mubr.f32.mxu0 %v400
    %557 = vmatmul.mubr.f32.gmra.mrb[0].mxu0 %v324
    %v558 = vpop.f32.mrb[0].mxu0
    %v559 = vadd.f32 %v393, %v558
    %v560 = vpop.f32.mrb[0].mxu0
    %561 = vmatprep.mubr.f32.mxu0 %v402
    %562 = vmatmul.mubr.f32.gmra.mrb[0].mxu0 %v315
    %v563 = vpop.f32.mrb[0].mxu0
    %v564 = vadd.f32 %v393, %v563
    %v565 = vpop.f32.mrb[0].mxu0
    %566 = vdwg.mxu0
    %v567 = vmax.f32 %v471, 0.0
    %v568 = vmax.f32 %v473, 0.0
    %v569 = vmax.f32 %v554, 0.0
    %v570 = vmax.f32 %v477, 0.0
    %v571 = vmax.f32 %v479, 0.0
    %v572 = vmax.f32 %v559, 0.0
    %v573 = vmax.f32 %v483, 0.0
    %v574 = vmax.f32 %v485, 0.0
    %v575 = vmax.f32 %v564, 0.0
    %v582 = vrot.slane %v567, 1
    %v583 = vrot.slane %v570, 1
    %v584 = vsel %vm52, %v582, %v583
    %v585 = vrot.slane %v568, 1
    %v586 = vrot.slane %v571, 1
    %v587 = vsel %vm52, %v585, %v586
    %v588 = vrot.slane %v569, 1
    %v589 = vrot.slane %v572, 1
    %v590 = vsel %vm52, %v588, %v589
    %591 = vrot.lane.b32.xlu0 %v584, 64
    %v592 = vpop.permute.xlu0 %591
    %593 = vrot.lane.b32.xlu0 %v587, 64
    %v594 = vpop.permute.xlu0 %593
    %595 = vrot.lane.b32.xlu0 %v590, 64
    %v596 = vpop.permute.xlu0 %595
    %v597 = vsel %vm101, %v592, %v594
    %v598 = vsel %vm101, %v594, %v596
    %v602 = vrot.slane %v567, 2
    %v603 = vrot.slane %v570, 2
    %v604 = vsel %vm62, %v602, %v603
    %v605 = vrot.slane %v568, 2
    %v606 = vrot.slane %v571, 2
    %v607 = vsel %vm62, %v605, %v606
    %v608 = vrot.slane %v569, 2
    %v609 = vrot.slane %v572, 2
    %v610 = vsel %vm62, %v608, %v609
    %v613 = vsel %vm101, %v569, %v592
    %v617 = vrot.slane %v573, 1
    %v618 = vsel %vm52, %v583, %v617
    %v619 = vrot.slane %v574, 1
    %v620 = vsel %vm52, %v586, %v619
    %v621 = vrot.slane %v575, 1
    %v622 = vsel %vm52, %v589, %v621
    %623 = vrot.lane.b32.xlu0 %v618, 64
    %v624 = vpop.permute.xlu0 %623
    %625 = vrot.lane.b32.xlu0 %v620, 64
    %v626 = vpop.permute.xlu0 %625
    %627 = vrot.lane.b32.xlu0 %v622, 64
    %v628 = vpop.permute.xlu0 %627
    %629 = vrot.lane.b32.xlu0 %v617, 64
    %v630 = vpop.permute.xlu0 %629
    %631 = vrot.lane.b32.xlu0 %v619, 64
    %v632 = vpop.permute.xlu0 %631
    %633 = vrot.lane.b32.xlu0 %v621, 64
    %v634 = vpop.permute.xlu0 %633
    %v635 = vsel %vm101, %v624, %v626
    %v636 = vsel %vm101, %v626, %v628
    %v637 = vsel %vm101, %v630, %v632
    %v638 = vsel %vm101, %v632, %v634
    %v641 = vrot.slane %v573, 2
    %v642 = vsel %vm62, %v603, %v641
    %v643 = vrot.slane %v574, 2
    %v644 = vsel %vm62, %v606, %v643
    %v645 = vrot.slane %v575, 2
    %v646 = vsel %vm62, %v609, %v645
    %v647 = vsel %vm101, %v572, %v624
    %v648 = vsel %vm101, %v575, %v630
    %v651 = vrot.slane %v647, 2
    %v652 = vrot.slane %v648, 2
    %v653 = vsel %vm62, %v651, %v652
    %v654 = vrot.slane %v635, 2
    %v655 = vrot.slane %v637, 2
    %v656 = vsel %vm62, %v654, %v655
    %v657 = vrot.slane %v636, 2
    %v658 = vrot.slane %v638, 2
    %v659 = vsel %vm62, %v657, %v658
    %v660 = vrot.slane %v642, 2
    %v661 = vrot.slane %v641, 2
    %v662 = vsel %vm62, %v660, %v661
    %v663 = vrot.slane %v644, 2
    %v664 = vrot.slane %v643, 2
    %v665 = vsel %vm62, %v663, %v664
    %v666 = vrot.slane %v646, 2
    %v667 = vrot.slane %v645, 2
    %v668 = vsel %vm62, %v666, %v667
    %v676 = vld [vmem:[%s5] sm:$0xff]
    %v677 = vld [vmem:[%s5 + $0x8] sm:$0xff]
    %v678 = vld [vmem:[%s5 + $0x10] sm:$0xff]
    %v679 = vld [vmem:[%s5 + $0x18] sm:$0xff]
    %v680 = vld [vmem:[%s5 + $0x20] sm:$0xff]
    %v681 = vld [vmem:[%s5 + $0x28] sm:$0xff]
    %v682 = vld [vmem:[%s5 + $0x30] sm:$0xff]
    %v683 = vld [vmem:[%s5 + $0x38] sm:$0xff]
    %v684 = vld [vmem:[%s5 + $0x40] sm:$0xff]
    %v685 = vld [vmem:[%s5 + $0x48] sm:$0xff]
    %v686 = vld [vmem:[%s5 + $0x50] sm:$0xff]
    %v687 = vld [vmem:[%s5 + $0x58] sm:$0xff]
    %v688 = vld [vmem:[%s5 + $0x60] sm:$0xff]
    %v689 = vld [vmem:[%s5 + $0x68] sm:$0xff]
    %v690 = vld [vmem:[%s5 + $0x70] sm:$0xff]
    %v691 = vld [vmem:[%s5 + $0x78] sm:$0xff]
    %v692 = vld [vmem:[%s5 + $0x80] sm:$0xff]
    %v693 = vld [vmem:[%s5 + $0x88] sm:$0xff]
    %v694 = vld [vmem:[%s5 + $0x90] sm:$0xff]
    %v695 = vld [vmem:[%s5 + $0x98] sm:$0xff]
    %v696 = vld [vmem:[%s5 + $0xa0] sm:$0xff]
    %v697 = vld [vmem:[%s5 + $0xa8] sm:$0xff]
    %v698 = vld [vmem:[%s5 + $0xb0] sm:$0xff]
    %v699 = vld [vmem:[%s5 + $0xb8] sm:$0xff]
    %v700 = vld [vmem:[%s5 + $0xc0] sm:$0xff]
    %v701 = vld [vmem:[%s5 + $0xc8] sm:$0xff]
    %v702 = vld [vmem:[%s5 + $0xd0] sm:$0xff]
    %v703 = vld [vmem:[%s5 + $0xd8] sm:$0xff]
    %v704 = vld [vmem:[%s5 + $0xe0] sm:$0xff]
    %v705 = vld [vmem:[%s5 + $0xe8] sm:$0xff]
    %v706 = vld [vmem:[%s5 + $0xf0] sm:$0xff]
    %v707 = vld [vmem:[%s5 + $0xf8] sm:$0xff]
    %v708 = vld [vmem:[%s5 + $0x100] sm:$0xff]
    %v709 = vld [vmem:[%s5 + $0x108] sm:$0xff]
    %v710 = vld [vmem:[%s5 + $0x110] sm:$0xff]
    %v711 = vld [vmem:[%s5 + $0x118] sm:$0xff]
    %v712 = vld [vmem:[%s5 + $0x120] sm:$0xff]
    %v713 = vld [vmem:[%s5 + $0x128] sm:$0xff]
    %v714 = vld [vmem:[%s5 + $0x130] sm:$0xff]
    %v715 = vld [vmem:[%s5 + $0x138] sm:$0xff]
    %v716 = vld [vmem:[%s5 + $0x140] sm:$0xff]
    %v717 = vld [vmem:[%s5 + $0x148] sm:$0xff]
    %v718 = vld [vmem:[%s5 + $0x150] sm:$0xff]
    %v719 = vld [vmem:[%s5 + $0x158] sm:$0xff]
    %v720 = vld [vmem:[%s5 + $0x160] sm:$0xff]
    %v721 = vld [vmem:[%s5 + $0x168] sm:$0xff]
    %v722 = vld [vmem:[%s5 + $0x170] sm:$0xff]
    %v723 = vld [vmem:[%s5 + $0x178] sm:$0xff]
    %v724 = vld [vmem:[%s5 + $0x180] sm:$0xff]
    %v725 = vld [vmem:[%s5 + $0x188] sm:$0xff]
    %v726 = vld [vmem:[%s5 + $0x190] sm:$0xff]
    %v727 = vld [vmem:[%s5 + $0x198] sm:$0xff]
    %v728 = vld [vmem:[%s5 + $0x1a0] sm:$0xff]
    %v729 = vld [vmem:[%s5 + $0x1a8] sm:$0xff]
    %v730 = vld [vmem:[%s5 + $0x1b0] sm:$0xff]
    %v731 = vld [vmem:[%s5 + $0x1b8] sm:$0xff]
    %v732 = vld [vmem:[%s5 + $0x1c0] sm:$0xff]
    %v733 = vld [vmem:[%s5 + $0x1c8] sm:$0xff]
    %v734 = vld [vmem:[%s5 + $0x1d0] sm:$0xff]
    %v735 = vld [vmem:[%s5 + $0x1d8] sm:$0xff]
    %v736 = vld [vmem:[%s5 + $0x1e0] sm:$0xff]
    %v737 = vld [vmem:[%s5 + $0x1e8] sm:$0xff]
    %v738 = vld [vmem:[%s5 + $0x1f0] sm:$0xff]
    %v739 = vld [vmem:[%s5 + $0x1f8] sm:$0xff]
    %v740 = vld [vmem:[%s5 + $0x200] sm:$0xff]
    %v741 = vld [vmem:[%s5 + $0x208] sm:$0xff]
    %v742 = vld [vmem:[%s5 + $0x210] sm:$0xff]
    %v743 = vld [vmem:[%s5 + $0x218] sm:$0xff]
    %v744 = vld [vmem:[%s5 + $0x220] sm:$0xff]
    %v745 = vld [vmem:[%s5 + $0x228] sm:$0xff]
    %v746 = vld [vmem:[%s5 + $0x230] sm:$0xff]
    %v747 = vld [vmem:[%s5 + $0x238] sm:$0xff]
    %v748 = vld [vmem:[%s5 + $0x240] sm:$0xff]
    %v749 = vld [vmem:[%s5 + $0x248] sm:$0xff]
    %v750 = vld [vmem:[%s5 + $0x250] sm:$0xff]
    %v751 = vld [vmem:[%s5 + $0x258] sm:$0xff]
    %v752 = vld [vmem:[%s5 + $0x260] sm:$0xff]
    %v753 = vld [vmem:[%s5 + $0x268] sm:$0xff]
    %v754 = vld [vmem:[%s5 + $0x270] sm:$0xff]
    %v755 = vld [vmem:[%s5 + $0x278] sm:$0xff]
    %v756 = vld [vmem:[%s5 + $0x280] sm:$0xff]
    %v757 = vld [vmem:[%s5 + $0x288] sm:$0xff]
    %v758 = vld [vmem:[%s5 + $0x290] sm:$0xff]
    %v759 = vld [vmem:[%s5 + $0x298] sm:$0xff]
    %v760 = vld [vmem:[%s5 + $0x2a0] sm:$0xff]
    %v761 = vld [vmem:[%s5 + $0x2a8] sm:$0xff]
    %v762 = vld [vmem:[%s5 + $0x2b0] sm:$0xff]
    %v763 = vld [vmem:[%s5 + $0x2b8] sm:$0xff]
    %v764 = vld [vmem:[%s5 + $0x2c0] sm:$0xff]
    %v765 = vld [vmem:[%s5 + $0x2c8] sm:$0xff]
    %v766 = vld [vmem:[%s5 + $0x2d0] sm:$0xff]
    %v767 = vld [vmem:[%s5 + $0x2d8] sm:$0xff]
    %v768 = vld [vmem:[%s5 + $0x2e0] sm:$0xff]
    %v769 = vld [vmem:[%s5 + $0x2e8] sm:$0xff]
    %v770 = vld [vmem:[%s5 + $0x2f0] sm:$0xff]
    %v771 = vld [vmem:[%s5 + $0x2f8] sm:$0xff]
    %v772 = vld [vmem:[%s5 + $0x300] sm:$0xff]
    %v773 = vld [vmem:[%s5 + $0x308] sm:$0xff]
    %v774 = vld [vmem:[%s5 + $0x310] sm:$0xff]
    %v775 = vld [vmem:[%s5 + $0x318] sm:$0xff]
    %v776 = vld [vmem:[%s5 + $0x320] sm:$0xff]
    %v777 = vld [vmem:[%s5 + $0x328] sm:$0xff]
    %v778 = vld [vmem:[%s5 + $0x330] sm:$0xff]
    %v779 = vld [vmem:[%s5 + $0x338] sm:$0xff]
    %v780 = vld [vmem:[%s5 + $0x340] sm:$0xff]
    %v781 = vld [vmem:[%s5 + $0x348] sm:$0xff]
    %v782 = vld [vmem:[%s5 + $0x350] sm:$0xff]
    %v783 = vld [vmem:[%s5 + $0x358] sm:$0xff]
    %v784 = vld [vmem:[%s5 + $0x360] sm:$0xff]
    %v785 = vld [vmem:[%s5 + $0x368] sm:$0xff]
    %v786 = vld [vmem:[%s5 + $0x370] sm:$0xff]
    %v787 = vld [vmem:[%s5 + $0x378] sm:$0xff]
    %v788 = vld [vmem:[%s5 + $0x380] sm:$0xff]
    %v789 = vld [vmem:[%s5 + $0x388] sm:$0xff]
    %v790 = vld [vmem:[%s5 + $0x390] sm:$0xff]
    %v791 = vld [vmem:[%s5 + $0x398] sm:$0xff]
    %v792 = vld [vmem:[%s5 + $0x3a0] sm:$0xff]
    %v793 = vld [vmem:[%s5 + $0x3a8] sm:$0xff]
    %v794 = vld [vmem:[%s5 + $0x3b0] sm:$0xff]
    %v795 = vld [vmem:[%s5 + $0x3b8] sm:$0xff]
    %v796 = vld [vmem:[%s5 + $0x3c0] sm:$0xff]
    %v797 = vld [vmem:[%s5 + $0x3c8] sm:$0xff]
    %v798 = vld [vmem:[%s5 + $0x3d0] sm:$0xff]
    %v799 = vld [vmem:[%s5 + $0x3d8] sm:$0xff]
    %v800 = vld [vmem:[%s5 + $0x3e0] sm:$0xff]
    %v801 = vld [vmem:[%s5 + $0x3e8] sm:$0xff]
    %v802 = vld [vmem:[%s5 + $0x3f0] sm:$0xff]
    %v803 = vld [vmem:[%s5 + $0x3f8] sm:$0xff]
    %v804 = vld [vmem:[%s5 + $0x400] sm:$0xff]
    %v805 = vld [vmem:[%s5 + $0x408] sm:$0xff]
    %v806 = vld [vmem:[%s5 + $0x410] sm:$0xff]
    %v807 = vld [vmem:[%s5 + $0x418] sm:$0xff]
    %v808 = vld [vmem:[%s5 + $0x420] sm:$0xff]
    %v809 = vld [vmem:[%s5 + $0x428] sm:$0xff]
    %v810 = vld [vmem:[%s5 + $0x430] sm:$0xff]
    %v811 = vld [vmem:[%s5 + $0x438] sm:$0xff]
    %v812 = vld [vmem:[%s5 + $0x440] sm:$0xff]
    %v813 = vld [vmem:[%s5 + $0x448] sm:$0xff]
    %v814 = vld [vmem:[%s5 + $0x450] sm:$0xff]
    %v815 = vld [vmem:[%s5 + $0x458] sm:$0xff]
    %v816 = vld [vmem:[%s5 + $0x460] sm:$0xff]
    %v817 = vld [vmem:[%s5 + $0x468] sm:$0xff]
    %v818 = vld [vmem:[%s5 + $0x470] sm:$0xff]
    %v819 = vld [vmem:[%s5 + $0x478] sm:$0xff]
    %v820 = vld [vmem:[%s5 + $0x480] sm:$0xff]
    %v821 = vld [vmem:[%s5 + $0x488] sm:$0xff]
    %v822 = vld [vmem:[%s5 + $0x490] sm:$0xff]
    %v823 = vld [vmem:[%s5 + $0x498] sm:$0xff]
    %v824 = vld [vmem:[%s5 + $0x4a0] sm:$0xff]
    %v825 = vld [vmem:[%s5 + $0x4a8] sm:$0xff]
    %v826 = vld [vmem:[%s5 + $0x4b0] sm:$0xff]
    %v827 = vld [vmem:[%s5 + $0x4b8] sm:$0xff]
    %v828 = vld [vmem:[%s5 + $0x4c0] sm:$0xff]
    %v829 = vld [vmem:[%s5 + $0x4c8] sm:$0xff]
    %v830 = vld [vmem:[%s5 + $0x4d0] sm:$0xff]
    %v831 = vld [vmem:[%s5 + $0x4d8] sm:$0xff]
    %v832 = vld [vmem:[%s5 + $0x4e0] sm:$0xff]
    %v833 = vld [vmem:[%s5 + $0x4e8] sm:$0xff]
    %v834 = vld [vmem:[%s5 + $0x4f0] sm:$0xff]
    %v835 = vld [vmem:[%s5 + $0x4f8] sm:$0xff]
    %v836 = vld [vmem:[%s5 + $0x500] sm:$0xff]
    %v837 = vld [vmem:[%s5 + $0x508] sm:$0xff]
    %v838 = vld [vmem:[%s5 + $0x510] sm:$0xff]
    %v839 = vld [vmem:[%s5 + $0x518] sm:$0xff]
    %v840 = vld [vmem:[%s5 + $0x520] sm:$0xff]
    %v841 = vld [vmem:[%s5 + $0x528] sm:$0xff]
    %v842 = vld [vmem:[%s5 + $0x530] sm:$0xff]
    %v843 = vld [vmem:[%s5 + $0x538] sm:$0xff]
    %v844 = vld [vmem:[%s5 + $0x540] sm:$0xff]
    %v845 = vld [vmem:[%s5 + $0x548] sm:$0xff]
    %v846 = vld [vmem:[%s5 + $0x550] sm:$0xff]
    %v847 = vld [vmem:[%s5 + $0x558] sm:$0xff]
    %v848 = vld [vmem:[%s5 + $0x560] sm:$0xff]
    %v849 = vld [vmem:[%s5 + $0x568] sm:$0xff]
    %v850 = vld [vmem:[%s5 + $0x570] sm:$0xff]
    %v851 = vld [vmem:[%s5 + $0x578] sm:$0xff]
    %v852 = vld [vmem:[%s5 + $0x580] sm:$0xff]
    %v853 = vld [vmem:[%s5 + $0x588] sm:$0xff]
    %v854 = vld [vmem:[%s5 + $0x590] sm:$0xff]
    %v855 = vld [vmem:[%s5 + $0x598] sm:$0xff]
    %v856 = vld [vmem:[%s5 + $0x5a0] sm:$0xff]
    %v857 = vld [vmem:[%s5 + $0x5a8] sm:$0xff]
    %v858 = vld [vmem:[%s5 + $0x5b0] sm:$0xff]
    %v859 = vld [vmem:[%s5 + $0x5b8] sm:$0xff]
    %v860 = vld [vmem:[%s5 + $0x5c0] sm:$0xff]
    %v861 = vld [vmem:[%s5 + $0x5c8] sm:$0xff]
    %v862 = vld [vmem:[%s5 + $0x5d0] sm:$0xff]
    %v863 = vld [vmem:[%s5 + $0x5d8] sm:$0xff]
    %v864 = vld [vmem:[%s5 + $0x5e0] sm:$0xff]
    %v865 = vld [vmem:[%s5 + $0x5e8] sm:$0xff]
    %v866 = vld [vmem:[%s5 + $0x5f0] sm:$0xff]
    %v867 = vld [vmem:[%s5 + $0x5f8] sm:$0xff]
    %v868 = vld [vmem:[%s5 + $0x600] sm:$0xff]
    %v869 = vld [vmem:[%s5 + $0x608] sm:$0xff]
    %v870 = vld [vmem:[%s5 + $0x610] sm:$0xff]
    %v871 = vld [vmem:[%s5 + $0x618] sm:$0xff]
    %v872 = vld [vmem:[%s5 + $0x620] sm:$0xff]
    %v873 = vld [vmem:[%s5 + $0x628] sm:$0xff]
    %v874 = vld [vmem:[%s5 + $0x630] sm:$0xff]
    %v875 = vld [vmem:[%s5 + $0x638] sm:$0xff]
    %v876 = vld [vmem:[%s5 + $0x640] sm:$0xff]
    %v877 = vld [vmem:[%s5 + $0x648] sm:$0xff]
    %v878 = vld [vmem:[%s5 + $0x650] sm:$0xff]
    %v879 = vld [vmem:[%s5 + $0x658] sm:$0xff]
    %v880 = vld [vmem:[%s5 + $0x660] sm:$0xff]
    %v881 = vld [vmem:[%s5 + $0x668] sm:$0xff]
    %v882 = vld [vmem:[%s5 + $0x670] sm:$0xff]
    %v883 = vld [vmem:[%s5 + $0x678] sm:$0xff]
    %v884 = vld [vmem:[%s5 + $0x680] sm:$0xff]
    %v885 = vld [vmem:[%s5 + $0x688] sm:$0xff]
    %v886 = vld [vmem:[%s5 + $0x690] sm:$0xff]
    %v887 = vld [vmem:[%s5 + $0x698] sm:$0xff]
    %v888 = vld [vmem:[%s5 + $0x6a0] sm:$0xff]
    %v889 = vld [vmem:[%s5 + $0x6a8] sm:$0xff]
    %v890 = vld [vmem:[%s5 + $0x6b0] sm:$0xff]
    %v891 = vld [vmem:[%s5 + $0x6b8] sm:$0xff]
    %v892 = vld [vmem:[%s5 + $0x6c0] sm:$0xff]
    %v893 = vld [vmem:[%s5 + $0x6c8] sm:$0xff]
    %v894 = vld [vmem:[%s5 + $0x6d0] sm:$0xff]
    %v895 = vld [vmem:[%s5 + $0x6d8] sm:$0xff]
    %v896 = vld [vmem:[%s5 + $0x6e0] sm:$0xff]
    %v897 = vld [vmem:[%s5 + $0x6e8] sm:$0xff]
    %v898 = vld [vmem:[%s5 + $0x6f0] sm:$0xff]
    %v899 = vld [vmem:[%s5 + $0x6f8] sm:$0xff]
    %v900 = vld [vmem:[%s5 + $0x700] sm:$0xff]
    %v901 = vld [vmem:[%s5 + $0x708] sm:$0xff]
    %v902 = vld [vmem:[%s5 + $0x710] sm:$0xff]
    %v903 = vld [vmem:[%s5 + $0x718] sm:$0xff]
    %v904 = vld [vmem:[%s5 + $0x720] sm:$0xff]
    %v905 = vld [vmem:[%s5 + $0x728] sm:$0xff]
    %v906 = vld [vmem:[%s5 + $0x730] sm:$0xff]
    %v907 = vld [vmem:[%s5 + $0x738] sm:$0xff]
    %v908 = vld [vmem:[%s5 + $0x740] sm:$0xff]
    %v909 = vld [vmem:[%s5 + $0x748] sm:$0xff]
    %v910 = vld [vmem:[%s5 + $0x750] sm:$0xff]
    %v911 = vld [vmem:[%s5 + $0x758] sm:$0xff]
    %v912 = vld [vmem:[%s5 + $0x760] sm:$0xff]
    %v913 = vld [vmem:[%s5 + $0x768] sm:$0xff]
    %v914 = vld [vmem:[%s5 + $0x770] sm:$0xff]
    %v915 = vld [vmem:[%s5 + $0x778] sm:$0xff]
    %v916 = vld [vmem:[%s5 + $0x780] sm:$0xff]
    %v917 = vld [vmem:[%s5 + $0x788] sm:$0xff]
    %v918 = vld [vmem:[%s5 + $0x790] sm:$0xff]
    %v919 = vld [vmem:[%s5 + $0x798] sm:$0xff]
    %v920 = vld [vmem:[%s5 + $0x7a0] sm:$0xff]
    %v921 = vld [vmem:[%s5 + $0x7a8] sm:$0xff]
    %v922 = vld [vmem:[%s5 + $0x7b0] sm:$0xff]
    %v923 = vld [vmem:[%s5 + $0x7b8] sm:$0xff]
    %v924 = vld [vmem:[%s5 + $0x7c0] sm:$0xff]
    %v925 = vld [vmem:[%s5 + $0x7c8] sm:$0xff]
    %v926 = vld [vmem:[%s5 + $0x7d0] sm:$0xff]
    %v927 = vld [vmem:[%s5 + $0x7d8] sm:$0xff]
    %v928 = vld [vmem:[%s5 + $0x7e0] sm:$0xff]
    %v929 = vld [vmem:[%s5 + $0x7e8] sm:$0xff]
    %v930 = vld [vmem:[%s5 + $0x7f0] sm:$0xff]
    %v931 = vld [vmem:[%s5 + $0x7f8] sm:$0xff]
    %v932 = vld [vmem:[%s5 + $0x800] sm:$0xff]
    %v933 = vld [vmem:[%s5 + $0x808] sm:$0xff]
    %v934 = vld [vmem:[%s5 + $0x810] sm:$0xff]
    %v935 = vld [vmem:[%s5 + $0x818] sm:$0xff]
    %v936 = vld [vmem:[%s5 + $0x820] sm:$0xff]
    %v937 = vld [vmem:[%s5 + $0x828] sm:$0xff]
    %v938 = vld [vmem:[%s5 + $0x830] sm:$0xff]
    %v939 = vld [vmem:[%s5 + $0x838] sm:$0xff]
    %v940 = vld [vmem:[%s5 + $0x840] sm:$0xff]
    %v941 = vld [vmem:[%s5 + $0x848] sm:$0xff]
    %v942 = vld [vmem:[%s5 + $0x850] sm:$0xff]
    %v943 = vld [vmem:[%s5 + $0x858] sm:$0xff]
    %v944 = vld [vmem:[%s5 + $0x860] sm:$0xff]
    %v945 = vld [vmem:[%s5 + $0x868] sm:$0xff]
    %v946 = vld [vmem:[%s5 + $0x870] sm:$0xff]
    %v947 = vld [vmem:[%s5 + $0x878] sm:$0xff]
    %v948 = vld [vmem:[%s5 + $0x880] sm:$0xff]
    %v949 = vld [vmem:[%s5 + $0x888] sm:$0xff]
    %v950 = vld [vmem:[%s5 + $0x890] sm:$0xff]
    %v951 = vld [vmem:[%s5 + $0x898] sm:$0xff]
    %v952 = vld [vmem:[%s5 + $0x8a0] sm:$0xff]
    %v953 = vld [vmem:[%s5 + $0x8a8] sm:$0xff]
    %v954 = vld [vmem:[%s5 + $0x8b0] sm:$0xff]
    %v955 = vld [vmem:[%s5 + $0x8b8] sm:$0xff]
    %v956 = vld [vmem:[%s5 + $0x8c0] sm:$0xff]
    %v957 = vld [vmem:[%s5 + $0x8c8] sm:$0xff]
    %v958 = vld [vmem:[%s5 + $0x8d0] sm:$0xff]
    %v959 = vld [vmem:[%s5 + $0x8d8] sm:$0xff]
    %v960 = vld [vmem:[%s5 + $0x8e0] sm:$0xff]
    %v961 = vld [vmem:[%s5 + $0x8e8] sm:$0xff]
    %v962 = vld [vmem:[%s5 + $0x8f0] sm:$0xff]
    %v963 = vld [vmem:[%s5 + $0x8f8] sm:$0xff]
    %v964 = vld [vmem:[%s5 + $0x900] sm:$0xff]
    %v965 = vld [vmem:[%s5 + $0x908] sm:$0xff]
    %v966 = vld [vmem:[%s5 + $0x910] sm:$0xff]
    %v967 = vld [vmem:[%s5 + $0x918] sm:$0xff]
    %v968 = vld [vmem:[%s5 + $0x920] sm:$0xff]
    %v969 = vld [vmem:[%s5 + $0x928] sm:$0xff]
    %v970 = vld [vmem:[%s5 + $0x930] sm:$0xff]
    %v971 = vld [vmem:[%s5 + $0x938] sm:$0xff]
    %v972 = vld [vmem:[%s5 + $0x940] sm:$0xff]
    %v973 = vld [vmem:[%s5 + $0x948] sm:$0xff]
    %v974 = vld [vmem:[%s5 + $0x950] sm:$0xff]
    %v975 = vld [vmem:[%s5 + $0x958] sm:$0xff]
    %v976 = vld [vmem:[%s5 + $0x960] sm:$0xff]
    %v977 = vld [vmem:[%s5 + $0x968] sm:$0xff]
    %v978 = vld [vmem:[%s5 + $0x970] sm:$0xff]
    %v979 = vld [vmem:[%s5 + $0x978] sm:$0xff]
    %v980 = vld [vmem:[%s5 + $0x980] sm:$0xff]
    %v981 = vld [vmem:[%s5 + $0x988] sm:$0xff]
    %v982 = vld [vmem:[%s5 + $0x990] sm:$0xff]
    %v983 = vld [vmem:[%s5 + $0x998] sm:$0xff]
    %v984 = vld [vmem:[%s5 + $0x9a0] sm:$0xff]
    %v985 = vld [vmem:[%s5 + $0x9a8] sm:$0xff]
    %v986 = vld [vmem:[%s5 + $0x9b0] sm:$0xff]
    %v987 = vld [vmem:[%s5 + $0x9b8] sm:$0xff]
    %v988 = vld [vmem:[%s5 + $0x9c0] sm:$0xff]
    %v989 = vld [vmem:[%s5 + $0x9c8] sm:$0xff]
    %v990 = vld [vmem:[%s5 + $0x9d0] sm:$0xff]
    %v991 = vld [vmem:[%s5 + $0x9d8] sm:$0xff]
    %v992 = vld [vmem:[%s5 + $0x9e0] sm:$0xff]
    %v993 = vld [vmem:[%s5 + $0x9e8] sm:$0xff]
    %v994 = vld [vmem:[%s5 + $0x9f0] sm:$0xff]
    %v995 = vld [vmem:[%s5 + $0x9f8] sm:$0xff]
    %v996 = vld [vmem:[%s5 + $0xa00] sm:$0xff]
    %v997 = vld [vmem:[%s5 + $0xa08] sm:$0xff]
    %v998 = vld [vmem:[%s5 + $0xa10] sm:$0xff]
    %v999 = vld [vmem:[%s5 + $0xa18] sm:$0xff]
    %v1000 = vld [vmem:[%s5 + $0xa20] sm:$0xff]
    %v1001 = vld [vmem:[%s5 + $0xa28] sm:$0xff]
    %v1002 = vld [vmem:[%s5 + $0xa30] sm:$0xff]
    %v1003 = vld [vmem:[%s5 + $0xa38] sm:$0xff]
    %v1004 = vld [vmem:[%s5 + $0xa40] sm:$0xff]
    %v1005 = vld [vmem:[%s5 + $0xa48] sm:$0xff]
    %v1006 = vld [vmem:[%s5 + $0xa50] sm:$0xff]
    %v1007 = vld [vmem:[%s5 + $0xa58] sm:$0xff]
    %v1008 = vld [vmem:[%s5 + $0xa60] sm:$0xff]
    %v1009 = vld [vmem:[%s5 + $0xa68] sm:$0xff]
    %v1010 = vld [vmem:[%s5 + $0xa70] sm:$0xff]
    %v1011 = vld [vmem:[%s5 + $0xa78] sm:$0xff]
    %v1012 = vld [vmem:[%s5 + $0xa80] sm:$0xff]
    %v1013 = vld [vmem:[%s5 + $0xa88] sm:$0xff]
    %v1014 = vld [vmem:[%s5 + $0xa90] sm:$0xff]
    %v1015 = vld [vmem:[%s5 + $0xa98] sm:$0xff]
    %v1016 = vld [vmem:[%s5 + $0xaa0] sm:$0xff]
    %v1017 = vld [vmem:[%s5 + $0xaa8] sm:$0xff]
    %v1018 = vld [vmem:[%s5 + $0xab0] sm:$0xff]
    %v1019 = vld [vmem:[%s5 + $0xab8] sm:$0xff]
    %v1020 = vld [vmem:[%s5 + $0xac0] sm:$0xff]
    %v1021 = vld [vmem:[%s5 + $0xac8] sm:$0xff]
    %v1022 = vld [vmem:[%s5 + $0xad0] sm:$0xff]
    %v1023 = vld [vmem:[%s5 + $0xad8] sm:$0xff]
    %v1024 = vld [vmem:[%s5 + $0xae0] sm:$0xff]
    %v1025 = vld [vmem:[%s5 + $0xae8] sm:$0xff]
    %v1026 = vld [vmem:[%s5 + $0xaf0] sm:$0xff]
    %v1027 = vld [vmem:[%s5 + $0xaf8] sm:$0xff]
    %v1028 = vld [vmem:[%s5 + $0xb00] sm:$0xff]
    %v1029 = vld [vmem:[%s5 + $0xb08] sm:$0xff]
    %v1030 = vld [vmem:[%s5 + $0xb10] sm:$0xff]
    %v1031 = vld [vmem:[%s5 + $0xb18] sm:$0xff]
    %v1032 = vld [vmem:[%s5 + $0xb20] sm:$0xff]
    %v1033 = vld [vmem:[%s5 + $0xb28] sm:$0xff]
    %v1034 = vld [vmem:[%s5 + $0xb30] sm:$0xff]
    %v1035 = vld [vmem:[%s5 + $0xb38] sm:$0xff]
    %v1036 = vld [vmem:[%s5 + $0xb40] sm:$0xff]
    %v1037 = vld [vmem:[%s5 + $0xb48] sm:$0xff]
    %v1038 = vld [vmem:[%s5 + $0xb50] sm:$0xff]
    %v1039 = vld [vmem:[%s5 + $0xb58] sm:$0xff]
    %v1040 = vld [vmem:[%s5 + $0xb60] sm:$0xff]
    %v1041 = vld [vmem:[%s5 + $0xb68] sm:$0xff]
    %v1042 = vld [vmem:[%s5 + $0xb70] sm:$0xff]
    %v1043 = vld [vmem:[%s5 + $0xb78] sm:$0xff]
    %v1044 = vld [vmem:[%s5 + $0xb80] sm:$0xff]
    %v1045 = vld [vmem:[%s5 + $0xb88] sm:$0xff]
    %v1046 = vld [vmem:[%s5 + $0xb90] sm:$0xff]
    %v1047 = vld [vmem:[%s5 + $0xb98] sm:$0xff]
    %v1048 = vld [vmem:[%s5 + $0xba0] sm:$0xff]
    %v1049 = vld [vmem:[%s5 + $0xba8] sm:$0xff]
    %v1050 = vld [vmem:[%s5 + $0xbb0] sm:$0xff]
    %v1051 = vld [vmem:[%s5 + $0xbb8] sm:$0xff]
    %v1052 = vld [vmem:[%s5 + $0xbc0] sm:$0xff]
    %v1053 = vld [vmem:[%s5 + $0xbc8] sm:$0xff]
    %v1054 = vld [vmem:[%s5 + $0xbd0] sm:$0xff]
    %v1055 = vld [vmem:[%s5 + $0xbd8] sm:$0xff]
    %v1056 = vld [vmem:[%s5 + $0xbe0] sm:$0xff]
    %v1057 = vld [vmem:[%s5 + $0xbe8] sm:$0xff]
    %v1058 = vld [vmem:[%s5 + $0xbf0] sm:$0xff]
    %v1059 = vld [vmem:[%s5 + $0xbf8] sm:$0xff]
    %v1060 = vld [vmem:[%s5 + $0xc00] sm:$0xff]
    %v1061 = vld [vmem:[%s5 + $0xc08] sm:$0xff]
    %v1062 = vld [vmem:[%s5 + $0xc10] sm:$0xff]
    %v1063 = vld [vmem:[%s5 + $0xc18] sm:$0xff]
    %v1064 = vld [vmem:[%s5 + $0xc20] sm:$0xff]
    %v1065 = vld [vmem:[%s5 + $0xc28] sm:$0xff]
    %v1066 = vld [vmem:[%s5 + $0xc30] sm:$0xff]
    %v1067 = vld [vmem:[%s5 + $0xc38] sm:$0xff]
    %v1068 = vld [vmem:[%s5 + $0xc40] sm:$0xff]
    %v1069 = vld [vmem:[%s5 + $0xc48] sm:$0xff]
    %v1070 = vld [vmem:[%s5 + $0xc50] sm:$0xff]
    %v1071 = vld [vmem:[%s5 + $0xc58] sm:$0xff]
    %v1072 = vld [vmem:[%s5 + $0xc60] sm:$0xff]
    %v1073 = vld [vmem:[%s5 + $0xc68] sm:$0xff]
    %v1074 = vld [vmem:[%s5 + $0xc70] sm:$0xff]
    %v1075 = vld [vmem:[%s5 + $0xc78] sm:$0xff]
    %v1076 = vld [vmem:[%s5 + $0xc80] sm:$0xff]
    %v1077 = vld [vmem:[%s5 + $0xc88] sm:$0xff]
    %v1078 = vld [vmem:[%s5 + $0xc90] sm:$0xff]
    %v1079 = vld [vmem:[%s5 + $0xc98] sm:$0xff]
    %v1080 = vld [vmem:[%s5 + $0xca0] sm:$0xff]
    %v1081 = vld [vmem:[%s5 + $0xca8] sm:$0xff]
    %v1082 = vld [vmem:[%s5 + $0xcb0] sm:$0xff]
    %v1083 = vld [vmem:[%s5 + $0xcb8] sm:$0xff]
    %v1084 = vld [vmem:[%s5 + $0xcc0] sm:$0xff]
    %v1085 = vld [vmem:[%s5 + $0xcc8] sm:$0xff]
    %v1086 = vld [vmem:[%s5 + $0xcd0] sm:$0xff]
    %v1087 = vld [vmem:[%s5 + $0xcd8] sm:$0xff]
    %v1088 = vld [vmem:[%s5 + $0xce0] sm:$0xff]
    %v1089 = vld [vmem:[%s5 + $0xce8] sm:$0xff]
    %v1090 = vld [vmem:[%s5 + $0xcf0] sm:$0xff]
    %v1091 = vld [vmem:[%s5 + $0xcf8] sm:$0xff]
    %v1092 = vld [vmem:[%s5 + $0xd00] sm:$0xff]
    %v1093 = vld [vmem:[%s5 + $0xd08] sm:$0xff]
    %v1094 = vld [vmem:[%s5 + $0xd10] sm:$0xff]
    %v1095 = vld [vmem:[%s5 + $0xd18] sm:$0xff]
    %v1096 = vld [vmem:[%s5 + $0xd20] sm:$0xff]
    %v1097 = vld [vmem:[%s5 + $0xd28] sm:$0xff]
    %v1098 = vld [vmem:[%s5 + $0xd30] sm:$0xff]
    %v1099 = vld [vmem:[%s5 + $0xd38] sm:$0xff]
    %v1100 = vld [vmem:[%s5 + $0xd40] sm:$0xff]
    %v1101 = vld [vmem:[%s5 + $0xd48] sm:$0xff]
    %v1102 = vld [vmem:[%s5 + $0xd50] sm:$0xff]
    %v1103 = vld [vmem:[%s5 + $0xd58] sm:$0xff]
    %v1104 = vld [vmem:[%s5 + $0xd60] sm:$0xff]
    %v1105 = vld [vmem:[%s5 + $0xd68] sm:$0xff]
    %v1106 = vld [vmem:[%s5 + $0xd70] sm:$0xff]
    %v1107 = vld [vmem:[%s5 + $0xd78] sm:$0xff]
    %v1108 = vld [vmem:[%s5 + $0xd80] sm:$0xff]
    %v1109 = vld [vmem:[%s5 + $0xd88] sm:$0xff]
    %v1110 = vld [vmem:[%s5 + $0xd90] sm:$0xff]
    %v1111 = vld [vmem:[%s5 + $0xd98] sm:$0xff]
    %v1112 = vld [vmem:[%s5 + $0xda0] sm:$0xff]
    %v1113 = vld [vmem:[%s5 + $0xda8] sm:$0xff]
    %v1114 = vld [vmem:[%s5 + $0xdb0] sm:$0xff]
    %v1115 = vld [vmem:[%s5 + $0xdb8] sm:$0xff]
    %v1116 = vld [vmem:[%s5 + $0xdc0] sm:$0xff]
    %v1117 = vld [vmem:[%s5 + $0xdc8] sm:$0xff]
    %v1118 = vld [vmem:[%s5 + $0xdd0] sm:$0xff]
    %v1119 = vld [vmem:[%s5 + $0xdd8] sm:$0xff]
    %v1120 = vld [vmem:[%s5 + $0xde0] sm:$0xff]
    %v1121 = vld [vmem:[%s5 + $0xde8] sm:$0xff]
    %v1122 = vld [vmem:[%s5 + $0xdf0] sm:$0xff]
    %v1123 = vld [vmem:[%s5 + $0xdf8] sm:$0xff]
    %v1124 = vld [vmem:[%s5 + $0xe00] sm:$0xff]
    %v1125 = vld [vmem:[%s5 + $0xe08] sm:$0xff]
    %v1126 = vld [vmem:[%s5 + $0xe10] sm:$0xff]
    %v1127 = vld [vmem:[%s5 + $0xe18] sm:$0xff]
    %v1128 = vld [vmem:[%s5 + $0xe20] sm:$0xff]
    %v1129 = vld [vmem:[%s5 + $0xe28] sm:$0xff]
    %v1130 = vld [vmem:[%s5 + $0xe30] sm:$0xff]
    %v1131 = vld [vmem:[%s5 + $0xe38] sm:$0xff]
    %v1132 = vld [vmem:[%s5 + $0xe40] sm:$0xff]
    %v1133 = vld [vmem:[%s5 + $0xe48] sm:$0xff]
    %v1134 = vld [vmem:[%s5 + $0xe50] sm:$0xff]
    %v1135 = vld [vmem:[%s5 + $0xe58] sm:$0xff]
    %v1136 = vld [vmem:[%s5 + $0xe60] sm:$0xff]
    %v1137 = vld [vmem:[%s5 + $0xe68] sm:$0xff]
    %v1138 = vld [vmem:[%s5 + $0xe70] sm:$0xff]
    %v1139 = vld [vmem:[%s5 + $0xe78] sm:$0xff]
    %v1140 = vld [vmem:[%s5 + $0xe80] sm:$0xff]
    %v1141 = vld [vmem:[%s5 + $0xe88] sm:$0xff]
    %v1142 = vld [vmem:[%s5 + $0xe90] sm:$0xff]
    %v1143 = vld [vmem:[%s5 + $0xe98] sm:$0xff]
    %v1144 = vld [vmem:[%s5 + $0xea0] sm:$0xff]
    %v1145 = vld [vmem:[%s5 + $0xea8] sm:$0xff]
    %v1146 = vld [vmem:[%s5 + $0xeb0] sm:$0xff]
    %v1147 = vld [vmem:[%s5 + $0xeb8] sm:$0xff]
    %v1148 = vld [vmem:[%s5 + $0xec0] sm:$0xff]
    %v1149 = vld [vmem:[%s5 + $0xec8] sm:$0xff]
    %v1150 = vld [vmem:[%s5 + $0xed0] sm:$0xff]
    %v1151 = vld [vmem:[%s5 + $0xed8] sm:$0xff]
    %v1152 = vld [vmem:[%s5 + $0xee0] sm:$0xff]
    %v1153 = vld [vmem:[%s5 + $0xee8] sm:$0xff]
    %v1154 = vld [vmem:[%s5 + $0xef0] sm:$0xff]
    %v1155 = vld [vmem:[%s5 + $0xef8] sm:$0xff]
    %v1156 = vld [vmem:[%s6] sm:$0xf]
    %v1158 = vlaneseq
    %v1159 = vshrl.u32 %v1158, 7
    %v1160 = vsub.s32 0, %v1159
    %v1161 = vrot.slane %v1156, %v1160
    %v1162 = vlaneseq
    %v1163 = vshrl.u32 %v1162, 7
    %v1164 = vsub.s32 1, %v1163
    %v1165 = vrot.slane %v1156, %v1164
    %v1166 = vlaneseq
    %v1167 = vshrl.u32 %v1166, 7
    %v1168 = vsub.s32 2, %v1167
    %v1169 = vrot.slane %v1156, %v1168
    %v1170 = vlaneseq
    %v1171 = vshrl.u32 %v1170, 7
    %v1172 = vsub.s32 3, %v1171
    %v1173 = vrot.slane %v1156, %v1172
    %v1178 = vsel %vm101, %v610, 0
    %v1180 = vsel %vm101, %v668, 0
    %1182 = vmatprep.subr.mxu0 %v677
    %1183 = vmatpush1.msra.mxu0 %v676
    %1184 = vmatprep.subr.mxu0 %v681
    %1185 = vmatpush1.msra.mxu0 %v680
    %1186 = vmatprep.subr.mxu0 %v685
    %1187 = vmatpush1.msra.mxu0 %v684
    %1188 = vmatprep.subr.mxu0 %v689
    %1189 = vmatpush1.msra.mxu0 %v688
    %1190 = vmatprep.subr.mxu0 %v693
    %1191 = vmatpush1.msra.mxu0 %v692
    %1192 = vmatprep.subr.mxu0 %v697
    %1193 = vmatpush1.msra.mxu0 %v696
    %1194 = vmatprep.subr.mxu0 %v701
    %1195 = vmatpush1.msra.mxu0 %v700
    %1196 = vmatprep.subr.mxu0 %v705
    %1197 = vmatpush1.msra.mxu0 %v704
    %1198 = vmatprep.subr.mxu0 %v709
    %1199 = vmatpush1.msra.mxu0 %v708
    %1200 = vmatprep.subr.mxu0 %v713
    %1201 = vmatpush1.msra.mxu0 %v712
    %1202 = vmatprep.subr.mxu0 %v717
    %1203 = vmatpush1.msra.mxu0 %v716
    %1204 = vmatprep.subr.mxu0 %v721
    %1205 = vmatpush1.msra.mxu0 %v720
    %1206 = vmatprep.subr.mxu0 %v725
    %1207 = vmatpush1.msra.mxu0 %v724
    %1208 = vmatprep.subr.mxu0 %v729
    %1209 = vmatpush1.msra.mxu0 %v728
    %1210 = vmatprep.subr.mxu0 %v733
    %1211 = vmatpush1.msra.mxu0 %v732
    %1212 = vmatprep.subr.mxu0 %v737
    %1213 = vmatpush1.msra.mxu0 %v736
    %1214 = vmatprep.subr.mxu0 %v741
    %1215 = vmatpush1.msra.mxu0 %v740
    %1216 = vmatprep.subr.mxu0 %v745
    %1217 = vmatpush1.msra.mxu0 %v744
    %1218 = vmatprep.subr.mxu0 %v749
    %1219 = vmatpush1.msra.mxu0 %v748
    %1220 = vmatprep.subr.mxu0 %v753
    %1221 = vmatpush1.msra.mxu0 %v752
    %1222 = vmatprep.subr.mxu0 %v757
    %1223 = vmatpush1.msra.mxu0 %v756
    %1224 = vmatprep.subr.mxu0 %v761
    %1225 = vmatpush1.msra.mxu0 %v760
    %1226 = vmatprep.subr.mxu0 %v765
    %1227 = vmatpush1.msra.mxu0 %v764
    %1228 = vmatprep.subr.mxu0 %v769
    %1229 = vmatpush1.msra.mxu0 %v768
    %1230 = vmatprep.subr.mxu0 %v773
    %1231 = vmatpush1.msra.mxu0 %v772
    %1232 = vmatprep.subr.mxu0 %v777
    %1233 = vmatpush1.msra.mxu0 %v776
    %1234 = vmatprep.subr.mxu0 %v781
    %1235 = vmatpush1.msra.mxu0 %v780
    %1236 = vmatprep.subr.mxu0 %v785
    %1237 = vmatpush1.msra.mxu0 %v784
    %1238 = vmatprep.subr.mxu0 %v789
    %1239 = vmatpush1.msra.mxu0 %v788
    %1240 = vmatprep.subr.mxu0 %v793
    %1241 = vmatpush1.msra.mxu0 %v792
    %1242 = vmatprep.subr.mxu0 %v797
    %1243 = vmatpush1.msra.mxu0 %v796
    %1244 = vmatprep.subr.mxu0 %v801
    %1245 = vmatpush1.msra.mxu0 %v800
    %1246 = vmatprep.mubr.f32.mxu0 %v568
    %1247 = vmatmul.mubr.f32.gmra.mrb[0].mxu0 %v567
    %v1248 = vpop.f32.mrb[0].mxu0
    %v1249 = vadd.f32 %v1161, %v1248
    %v1250 = vpop.f32.mrb[0].mxu0
    %v1251 = vadd.f32 %v1165, %v1250
    %1252 = vmatprep.mubr.f32.mxu0 %v644
    %1253 = vmatmul.mubr.f32.gmra.mrb[0].mxu0 %v642
    %v1254 = vpop.f32.mrb[0].mxu0
    %v1255 = vadd.f32 %v1161, %v1254
    %v1256 = vpop.f32.mrb[0].mxu0
    %v1257 = vadd.f32 %v1165, %v1256
    %1258 = vdwg.mxu0
    %1259 = vmatprep.subr.mxu0 %v805
    %1260 = vmatpush1.msra.mxu0 %v804
    %1261 = vmatprep.subr.mxu0 %v809
    %1262 = vmatpush1.msra.mxu0 %v808
    %1263 = vmatprep.subr.mxu0 %v813
    %1264 = vmatpush1.msra.mxu0 %v812
    %1265 = vmatprep.subr.mxu0 %v817
    %1266 = vmatpush1.msra.mxu0 %v816
    %1267 = vmatprep.subr.mxu0 %v821
    %1268 = vmatpush1.msra.mxu0 %v820
    %1269 = vmatprep.subr.mxu0 %v825
    %1270 = vmatpush1.msra.mxu0 %v824
    %1271 = vmatprep.subr.mxu0 %v829
    %1272 = vmatpush1.msra.mxu0 %v828
    %1273 = vmatprep.subr.mxu0 %v833
    %1274 = vmatpush1.msra.mxu0 %v832
    %1275 = vmatprep.subr.mxu0 %v837
    %1276 = vmatpush1.msra.mxu0 %v836
    %1277 = vmatprep.subr.mxu0 %v841
    %1278 = vmatpush1.msra.mxu0 %v840
    %1279 = vmatprep.subr.mxu0 %v845
    %1280 = vmatpush1.msra.mxu0 %v844
    %1281 = vmatprep.subr.mxu0 %v849
    %1282 = vmatpush1.msra.mxu0 %v848
    %1283 = vmatprep.subr.mxu0 %v853
    %1284 = vmatpush1.msra.mxu0 %v852
    %1285 = vmatprep.subr.mxu0 %v857
    %1286 = vmatpush1.msra.mxu0 %v856
    %1287 = vmatprep.subr.mxu0 %v861
    %1288 = vmatpush1.msra.mxu0 %v860
    %1289 = vmatprep.subr.mxu0 %v865
    %1290 = vmatpush1.msra.mxu0 %v864
    %1291 = vmatprep.subr.mxu0 %v869
    %1292 = vmatpush1.msra.mxu0 %v868
    %1293 = vmatprep.subr.mxu0 %v873
    %1294 = vmatpush1.msra.mxu0 %v872
    %1295 = vmatprep.subr.mxu0 %v877
    %1296 = vmatpush1.msra.mxu0 %v876
    %1297 = vmatprep.subr.mxu0 %v881
    %1298 = vmatpush1.msra.mxu0 %v880
    %1299 = vmatprep.subr.mxu0 %v885
    %1300 = vmatpush1.msra.mxu0 %v884
    %1301 = vmatprep.subr.mxu0 %v889
    %1302 = vmatpush1.msra.mxu0 %v888
    %1303 = vmatprep.subr.mxu0 %v893
    %1304 = vmatpush1.msra.mxu0 %v892
    %1305 = vmatprep.subr.mxu0 %v897
    %1306 = vmatpush1.msra.mxu0 %v896
    %1307 = vmatprep.subr.mxu0 %v901
    %1308 = vmatpush1.msra.mxu0 %v900
    %1309 = vmatprep.subr.mxu0 %v905
    %1310 = vmatpush1.msra.mxu0 %v904
    %1311 = vmatprep.subr.mxu0 %v909
    %1312 = vmatpush1.msra.mxu0 %v908
    %1313 = vmatprep.subr.mxu0 %v913
    %1314 = vmatpush1.msra.mxu0 %v912
    %1315 = vmatprep.subr.mxu0 %v917
    %1316 = vmatpush1.msra.mxu0 %v916
    %1317 = vmatprep.subr.mxu0 %v921
    %1318 = vmatpush1.msra.mxu0 %v920
    %1319 = vmatprep.subr.mxu0 %v925
    %1320 = vmatpush1.msra.mxu0 %v924
    %1321 = vmatprep.subr.mxu0 %v929
    %1322 = vmatpush1.msra.mxu0 %v928
    %1323 = vmatprep.mubr.f32.mxu0 %v597
    %1324 = vmatmul.mubr.f32.gmra.mrb[0].mxu0 %v613
    %v1325 = vpop.f32.mrb[0].mxu0
    %v1326 = vadd.f32 %v1249, %v1325
    %v1327 = vpop.f32.mrb[0].mxu0
    %v1328 = vadd.f32 %v1251, %v1327
    %1329 = vmatprep.mubr.f32.mxu0 %v656
    %1330 = vmatmul.mubr.f32.gmra.mrb[0].mxu0 %v653
    %v1331 = vpop.f32.mrb[0].mxu0
    %v1332 = vadd.f32 %v1255, %v1331
    %v1333 = vpop.f32.mrb[0].mxu0
    %v1334 = vadd.f32 %v1257, %v1333
    %1335 = vdwg.mxu0
    %1336 = vmatprep.subr.mxu0 %v933
    %1337 = vmatpush1.msra.mxu0 %v932
    %1338 = vmatprep.subr.mxu0 %v937
    %1339 = vmatpush1.msra.mxu0 %v936
    %1340 = vmatprep.subr.mxu0 %v941
    %1341 = vmatpush1.msra.mxu0 %v940
    %1342 = vmatprep.subr.mxu0 %v945
    %1343 = vmatpush1.msra.mxu0 %v944
    %1344 = vmatprep.subr.mxu0 %v949
    %1345 = vmatpush1.msra.mxu0 %v948
    %1346 = vmatprep.subr.mxu0 %v953
    %1347 = vmatpush1.msra.mxu0 %v952
    %1348 = vmatprep.subr.mxu0 %v957
    %1349 = vmatpush1.msra.mxu0 %v956
    %1350 = vmatprep.subr.mxu0 %v961
    %1351 = vmatpush1.msra.mxu0 %v960
    %1352 = vmatprep.subr.mxu0 %v965
    %1353 = vmatpush1.msra.mxu0 %v964
    %1354 = vmatprep.subr.mxu0 %v969
    %1355 = vmatpush1.msra.mxu0 %v968
    %1356 = vmatprep.subr.mxu0 %v973
    %1357 = vmatpush1.msra.mxu0 %v972
    %1358 = vmatprep.subr.mxu0 %v977
    %1359 = vmatpush1.msra.mxu0 %v976
    %1360 = vmatprep.subr.mxu0 %v981
    %1361 = vmatpush1.msra.mxu0 %v980
    %1362 = vmatprep.subr.mxu0 %v985
    %1363 = vmatpush1.msra.mxu0 %v984
    %1364 = vmatprep.subr.mxu0 %v989
    %1365 = vmatpush1.msra.mxu0 %v988
    %1366 = vmatprep.subr.mxu0 %v993
    %1367 = vmatpush1.msra.mxu0 %v992
    %1368 = vmatprep.subr.mxu0 %v997
    %1369 = vmatpush1.msra.mxu0 %v996
    %1370 = vmatprep.subr.mxu0 %v1001
    %1371 = vmatpush1.msra.mxu0 %v1000
    %1372 = vmatprep.subr.mxu0 %v1005
    %1373 = vmatpush1.msra.mxu0 %v1004
    %1374 = vmatprep.subr.mxu0 %v1009
    %1375 = vmatpush1.msra.mxu0 %v1008
    %1376 = vmatprep.subr.mxu0 %v1013
    %1377 = vmatpush1.msra.mxu0 %v1012
    %1378 = vmatprep.subr.mxu0 %v1017
    %1379 = vmatpush1.msra.mxu0 %v1016
    %1380 = vmatprep.subr.mxu0 %v1021
    %1381 = vmatpush1.msra.mxu0 %v1020
    %1382 = vmatprep.subr.mxu0 %v1025
    %1383 = vmatpush1.msra.mxu0 %v1024
    %1384 = vmatprep.subr.mxu0 %v1029
    %1385 = vmatpush1.msra.mxu0 %v1028
    %1386 = vmatprep.subr.mxu0 %v1033
    %1387 = vmatpush1.msra.mxu0 %v1032
    %1388 = vmatprep.subr.mxu0 %v1037
    %1389 = vmatpush1.msra.mxu0 %v1036
    %1390 = vmatprep.subr.mxu0 %v1041
    %1391 = vmatpush1.msra.mxu0 %v1040
    %1392 = vmatprep.subr.mxu0 %v1045
    %1393 = vmatpush1.msra.mxu0 %v1044
    %1394 = vmatprep.subr.mxu0 %v1049
    %1395 = vmatpush1.msra.mxu0 %v1048
    %1396 = vmatprep.subr.mxu0 %v1053
    %1397 = vmatpush1.msra.mxu0 %v1052
    %1398 = vmatprep.subr.mxu0 %v1057
    %1399 = vmatpush1.msra.mxu0 %v1056
    %1400 = vmatprep.mubr.f32.mxu0 %v604
    %1401 = vmatmul.mubr.f32.gmra.mrb[0].mxu0 %v598
    %v1402 = vpop.f32.mrb[0].mxu0
    %v1403 = vadd.f32 %v1326, %v1402
    %v1404 = vpop.f32.mrb[0].mxu0
    %v1405 = vadd.f32 %v1328, %v1404
    %1406 = vmatprep.mubr.f32.mxu0 %v662
    %1407 = vmatmul.mubr.f32.gmra.mrb[0].mxu0 %v659
    %v1408 = vpop.f32.mrb[0].mxu0
    %v1409 = vadd.f32 %v1332, %v1408
    %v1410 = vpop.f32.mrb[0].mxu0
    %v1411 = vadd.f32 %v1334, %v1410
    %1412 = vdwg.mxu0
    %1413 = vmatprep.subr.mxu0 %v1061
    %1414 = vmatpush1.msra.mxu0 %v1060
    %1415 = vmatprep.subr.mxu0 %v1065
    %1416 = vmatpush1.msra.mxu0 %v1064
    %1417 = vmatprep.subr.mxu0 %v1069
    %1418 = vmatpush1.msra.mxu0 %v1068
    %1419 = vmatprep.subr.mxu0 %v1073
    %1420 = vmatpush1.msra.mxu0 %v1072
    %1421 = vmatprep.subr.mxu0 %v1077
    %1422 = vmatpush1.msra.mxu0 %v1076
    %1423 = vmatprep.subr.mxu0 %v1081
    %1424 = vmatpush1.msra.mxu0 %v1080
    %1425 = vmatprep.subr.mxu0 %v1085
    %1426 = vmatpush1.msra.mxu0 %v1084
    %1427 = vmatprep.subr.mxu0 %v1089
    %1428 = vmatpush1.msra.mxu0 %v1088
    %1429 = vmatprep.subr.mxu0 %v1093
    %1430 = vmatpush1.msra.mxu0 %v1092
    %1431 = vmatprep.subr.mxu0 %v1097
    %1432 = vmatpush1.msra.mxu0 %v1096
    %1433 = vmatprep.subr.mxu0 %v1101
    %1434 = vmatpush1.msra.mxu0 %v1100
    %1435 = vmatprep.subr.mxu0 %v1105
    %1436 = vmatpush1.msra.mxu0 %v1104
    %1437 = vmatprep.subr.mxu0 %v1109
    %1438 = vmatpush1.msra.mxu0 %v1108
    %1439 = vmatprep.subr.mxu0 %v1113
    %1440 = vmatpush1.msra.mxu0 %v1112
    %1441 = vmatprep.subr.mxu0 %v1117
    %1442 = vmatpush1.msra.mxu0 %v1116
    %1443 = vmatprep.subr.mxu0 %v1121
    %1444 = vmatpush1.msra.mxu0 %v1120
    %1445 = vmatprep.subr.mxu0 %v1125
    %1446 = vmatpush1.msra.mxu0 %v1124
    %1447 = vmatprep.subr.mxu0 %v1129
    %1448 = vmatpush1.msra.mxu0 %v1128
    %1449 = vmatprep.subr.mxu0 %v1133
    %1450 = vmatpush1.msra.mxu0 %v1132
    %1451 = vmatprep.subr.mxu0 %v1137
    %1452 = vmatpush1.msra.mxu0 %v1136
    %1453 = vmatprep.subr.mxu0 %v1141
    %1454 = vmatpush1.msra.mxu0 %v1140
    %1455 = vmatprep.subr.mxu0 %v1145
    %1456 = vmatpush1.msra.mxu0 %v1144
    %1457 = vmatprep.subr.mxu0 %v1149
    %1458 = vmatpush1.msra.mxu0 %v1148
    %1459 = vmatprep.subr.mxu0 %v1153
    %1460 = vmatpush1.msra.mxu0 %v1152
    %1461 = vmatprep.subr.mxu0 0.0
    %1462 = vmatpush1.msra.mxu0 0.0
    %1463 = vmatprep.subr.mxu0 0.0
    %1464 = vmatpush1.msra.mxu0 0.0
    %1465 = vmatprep.subr.mxu0 0.0
    %1466 = vmatpush1.msra.mxu0 0.0
    %1467 = vmatprep.subr.mxu0 0.0
    %1468 = vmatpush1.msra.mxu0 0.0
    %1469 = vmatprep.subr.mxu0 0.0
    %1470 = vmatpush1.msra.mxu0 0.0
    %1471 = vmatprep.subr.mxu0 0.0
    %1472 = vmatpush1.msra.mxu0 0.0
    %1473 = vmatprep.subr.mxu0 0.0
    %1474 = vmatpush1.msra.mxu0 0.0
    %1475 = vmatprep.subr.mxu0 0.0
    %1476 = vmatpush1.msra.mxu0 0.0
    %1477 = vmatprep.mubr.f32.mxu0 %v1178
    %1478 = vmatmul.mubr.f32.gmra.mrb[0].mxu0 %v607
    %v1479 = vpop.f32.mrb[0].mxu0
    %v1480 = vadd.f32 %v1403, %v1479
    %v1481 = vpop.f32.mrb[0].mxu0
    %v1482 = vadd.f32 %v1405, %v1481
    %1483 = vmatprep.mubr.f32.mxu0 %v1180
    %1484 = vmatmul.mubr.f32.gmra.mrb[0].mxu0 %v665
    %v1485 = vpop.f32.mrb[0].mxu0
    %v1486 = vadd.f32 %v1409, %v1485
    %v1487 = vpop.f32.mrb[0].mxu0
    %v1488 = vadd.f32 %v1411, %v1487
    %1489 = vdwg.mxu0
    %1490 = vmatprep.subr.mxu0 %v679
    %1491 = vmatpush1.msra.mxu0 %v678
    %1492 = vmatprep.subr.mxu0 %v683
    %1493 = vmatpush1.msra.mxu0 %v682
    %1494 = vmatprep.subr.mxu0 %v687
    %1495 = vmatpush1.msra.mxu0 %v686
    %1496 = vmatprep.subr.mxu0 %v691
    %1497 = vmatpush1.msra.mxu0 %v690
    %1498 = vmatprep.subr.mxu0 %v695
    %1499 = vmatpush1.msra.mxu0 %v694
    %1500 = vmatprep.subr.mxu0 %v699
    %1501 = vmatpush1.msra.mxu0 %v698
    %1502 = vmatprep.subr.mxu0 %v703
    %1503 = vmatpush1.msra.mxu0 %v702
    %1504 = vmatprep.subr.mxu0 %v707
    %1505 = vmatpush1.msra.mxu0 %v706
    %1506 = vmatprep.subr.mxu0 %v711
    %1507 = vmatpush1.msra.mxu0 %v710
    %1508 = vmatprep.subr.mxu0 %v715
    %1509 = vmatpush1.msra.mxu0 %v714
    %1510 = vmatprep.subr.mxu0 %v719
    %1511 = vmatpush1.msra.mxu0 %v718
    %1512 = vmatprep.subr.mxu0 %v723
    %1513 = vmatpush1.msra.mxu0 %v722
    %1514 = vmatprep.subr.mxu0 %v727
    %1515 = vmatpush1.msra.mxu0 %v726
    %1516 = vmatprep.subr.mxu0 %v731
    %1517 = vmatpush1.msra.mxu0 %v730
    %1518 = vmatprep.subr.mxu0 %v735
    %1519 = vmatpush1.msra.mxu0 %v734
    %1520 = vmatprep.subr.mxu0 %v739
    %1521 = vmatpush1.msra.mxu0 %v738
    %1522 = vmatprep.subr.mxu0 %v743
    %1523 = vmatpush1.msra.mxu0 %v742
    %1524 = vmatprep.subr.mxu0 %v747
    %1525 = vmatpush1.msra.mxu0 %v746
    %1526 = vmatprep.subr.mxu0 %v751
    %1527 = vmatpush1.msra.mxu0 %v750
    %1528 = vmatprep.subr.mxu0 %v755
    %1529 = vmatpush1.msra.mxu0 %v754
    %1530 = vmatprep.subr.mxu0 %v759
    %1531 = vmatpush1.msra.mxu0 %v758
    %1532 = vmatprep.subr.mxu0 %v763
    %1533 = vmatpush1.msra.mxu0 %v762
    %1534 = vmatprep.subr.mxu0 %v767
    %1535 = vmatpush1.msra.mxu0 %v766
    %1536 = vmatprep.subr.mxu0 %v771
    %1537 = vmatpush1.msra.mxu0 %v770
    %1538 = vmatprep.subr.mxu0 %v775
    %1539 = vmatpush1.msra.mxu0 %v774
    %1540 = vmatprep.subr.mxu0 %v779
    %1541 = vmatpush1.msra.mxu0 %v778
    %1542 = vmatprep.subr.mxu0 %v783
    %1543 = vmatpush1.msra.mxu0 %v782
    %1544 = vmatprep.subr.mxu0 %v787
    %1545 = vmatpush1.msra.mxu0 %v786
    %1546 = vmatprep.subr.mxu0 %v791
    %1547 = vmatpush1.msra.mxu0 %v790
    %1548 = vmatprep.subr.mxu0 %v795
    %1549 = vmatpush1.msra.mxu0 %v794
    %1550 = vmatprep.subr.mxu0 %v799
    %1551 = vmatpush1.msra.mxu0 %v798
    %1552 = vmatprep.subr.mxu0 %v803
    %1553 = vmatpush1.msra.mxu0 %v802
    %1554 = vmatprep.mubr.f32.mxu0 %v568
    %1555 = vmatmul.mubr.f32.gmra.mrb[0].mxu0 %v567
    %v1556 = vpop.f32.mrb[0].mxu0
    %v1557 = vadd.f32 %v1169, %v1556
    %v1558 = vpop.f32.mrb[0].mxu0
    %v1559 = vadd.f32 %v1173, %v1558
    %1560 = vmatprep.mubr.f32.mxu0 %v644
    %1561 = vmatmul.mubr.f32.gmra.mrb[0].mxu0 %v642
    %v1562 = vpop.f32.mrb[0].mxu0
    %v1563 = vadd.f32 %v1169, %v1562
    %v1564 = vpop.f32.mrb[0].mxu0
    %v1565 = vadd.f32 %v1173, %v1564
    %1566 = vdwg.mxu0
    %1567 = vmatprep.subr.mxu0 %v807
    %1568 = vmatpush1.msra.mxu0 %v806
    %1569 = vmatprep.subr.mxu0 %v811
    %1570 = vmatpush1.msra.mxu0 %v810
    %1571 = vmatprep.subr.mxu0 %v815
    %1572 = vmatpush1.msra.mxu0 %v814
    %1573 = vmatprep.subr.mxu0 %v819
    %1574 = vmatpush1.msra.mxu0 %v818
    %1575 = vmatprep.subr.mxu0 %v823
    %1576 = vmatpush1.msra.mxu0 %v822
    %1577 = vmatprep.subr.mxu0 %v827
    %1578 = vmatpush1.msra.mxu0 %v826
    %1579 = vmatprep.subr.mxu0 %v831
    %1580 = vmatpush1.msra.mxu0 %v830
    %1581 = vmatprep.subr.mxu0 %v835
    %1582 = vmatpush1.msra.mxu0 %v834
    %1583 = vmatprep.subr.mxu0 %v839
    %1584 = vmatpush1.msra.mxu0 %v838
    %1585 = vmatprep.subr.mxu0 %v843
    %1586 = vmatpush1.msra.mxu0 %v842
    %1587 = vmatprep.subr.mxu0 %v847
    %1588 = vmatpush1.msra.mxu0 %v846
    %1589 = vmatprep.subr.mxu0 %v851
    %1590 = vmatpush1.msra.mxu0 %v850
    %1591 = vmatprep.subr.mxu0 %v855
    %1592 = vmatpush1.msra.mxu0 %v854
    %1593 = vmatprep.subr.mxu0 %v859
    %1594 = vmatpush1.msra.mxu0 %v858
    %1595 = vmatprep.subr.mxu0 %v863
    %1596 = vmatpush1.msra.mxu0 %v862
    %1597 = vmatprep.subr.mxu0 %v867
    %1598 = vmatpush1.msra.mxu0 %v866
    %1599 = vmatprep.subr.mxu0 %v871
    %1600 = vmatpush1.msra.mxu0 %v870
    %1601 = vmatprep.subr.mxu0 %v875
    %1602 = vmatpush1.msra.mxu0 %v874
    %1603 = vmatprep.subr.mxu0 %v879
    %1604 = vmatpush1.msra.mxu0 %v878
    %1605 = vmatprep.subr.mxu0 %v883
    %1606 = vmatpush1.msra.mxu0 %v882
    %1607 = vmatprep.subr.mxu0 %v887
    %1608 = vmatpush1.msra.mxu0 %v886
    %1609 = vmatprep.subr.mxu0 %v891
    %1610 = vmatpush1.msra.mxu0 %v890
    %1611 = vmatprep.subr.mxu0 %v895
    %1612 = vmatpush1.msra.mxu0 %v894
    %1613 = vmatprep.subr.mxu0 %v899
    %1614 = vmatpush1.msra.mxu0 %v898
    %1615 = vmatprep.subr.mxu0 %v903
    %1616 = vmatpush1.msra.mxu0 %v902
    %1617 = vmatprep.subr.mxu0 %v907
    %1618 = vmatpush1.msra.mxu0 %v906
    %1619 = vmatprep.subr.mxu0 %v911
    %1620 = vmatpush1.msra.mxu0 %v910
    %1621 = vmatprep.subr.mxu0 %v915
    %1622 = vmatpush1.msra.mxu0 %v914
    %1623 = vmatprep.subr.mxu0 %v919
    %1624 = vmatpush1.msra.mxu0 %v918
    %1625 = vmatprep.subr.mxu0 %v923
    %1626 = vmatpush1.msra.mxu0 %v922
    %1627 = vmatprep.subr.mxu0 %v927
    %1628 = vmatpush1.msra.mxu0 %v926
    %1629 = vmatprep.subr.mxu0 %v931
    %1630 = vmatpush1.msra.mxu0 %v930
    %1631 = vmatprep.mubr.f32.mxu0 %v597
    %1632 = vmatmul.mubr.f32.gmra.mrb[0].mxu0 %v613
    %v1633 = vpop.f32.mrb[0].mxu0
    %v1634 = vadd.f32 %v1557, %v1633
    %v1635 = vpop.f32.mrb[0].mxu0
    %v1636 = vadd.f32 %v1559, %v1635
    %1637 = vmatprep.mubr.f32.mxu0 %v656
    %1638 = vmatmul.mubr.f32.gmra.mrb[0].mxu0 %v653
    %v1639 = vpop.f32.mrb[0].mxu0
    %v1640 = vadd.f32 %v1563, %v1639
    %v1641 = vpop.f32.mrb[0].mxu0
    %v1642 = vadd.f32 %v1565, %v1641
    %1643 = vdwg.mxu0
    %1644 = vmatprep.subr.mxu0 %v935
    %1645 = vmatpush1.msra.mxu0 %v934
    %1646 = vmatprep.subr.mxu0 %v939
    %1647 = vmatpush1.msra.mxu0 %v938
    %1648 = vmatprep.subr.mxu0 %v943
    %1649 = vmatpush1.msra.mxu0 %v942
    %1650 = vmatprep.subr.mxu0 %v947
    %1651 = vmatpush1.msra.mxu0 %v946
    %1652 = vmatprep.subr.mxu0 %v951
    %1653 = vmatpush1.msra.mxu0 %v950
    %1654 = vmatprep.subr.mxu0 %v955
    %1655 = vmatpush1.msra.mxu0 %v954
    %1656 = vmatprep.subr.mxu0 %v959
    %1657 = vmatpush1.msra.mxu0 %v958
    %1658 = vmatprep.subr.mxu0 %v963
    %1659 = vmatpush1.msra.mxu0 %v962
    %1660 = vmatprep.subr.mxu0 %v967
    %1661 = vmatpush1.msra.mxu0 %v966
    %1662 = vmatprep.subr.mxu0 %v971
    %1663 = vmatpush1.msra.mxu0 %v970
    %1664 = vmatprep.subr.mxu0 %v975
    %1665 = vmatpush1.msra.mxu0 %v974
    %1666 = vmatprep.subr.mxu0 %v979
    %1667 = vmatpush1.msra.mxu0 %v978
    %1668 = vmatprep.subr.mxu0 %v983
    %1669 = vmatpush1.msra.mxu0 %v982
    %1670 = vmatprep.subr.mxu0 %v987
    %1671 = vmatpush1.msra.mxu0 %v986
    %1672 = vmatprep.subr.mxu0 %v991
    %1673 = vmatpush1.msra.mxu0 %v990
    %1674 = vmatprep.subr.mxu0 %v995
    %1675 = vmatpush1.msra.mxu0 %v994
    %1676 = vmatprep.subr.mxu0 %v999
    %1677 = vmatpush1.msra.mxu0 %v998
    %1678 = vmatprep.subr.mxu0 %v1003
    %1679 = vmatpush1.msra.mxu0 %v1002
    %1680 = vmatprep.subr.mxu0 %v1007
    %1681 = vmatpush1.msra.mxu0 %v1006
    %1682 = vmatprep.subr.mxu0 %v1011
    %1683 = vmatpush1.msra.mxu0 %v1010
    %1684 = vmatprep.subr.mxu0 %v1015
    %1685 = vmatpush1.msra.mxu0 %v1014
    %1686 = vmatprep.subr.mxu0 %v1019
    %1687 = vmatpush1.msra.mxu0 %v1018
    %1688 = vmatprep.subr.mxu0 %v1023
    %1689 = vmatpush1.msra.mxu0 %v1022
    %1690 = vmatprep.subr.mxu0 %v1027
    %1691 = vmatpush1.msra.mxu0 %v1026
    %1692 = vmatprep.subr.mxu0 %v1031
    %1693 = vmatpush1.msra.mxu0 %v1030
    %1694 = vmatprep.subr.mxu0 %v1035
    %1695 = vmatpush1.msra.mxu0 %v1034
    %1696 = vmatprep.subr.mxu0 %v1039
    %1697 = vmatpush1.msra.mxu0 %v1038
    %1698 = vmatprep.subr.mxu0 %v1043
    %1699 = vmatpush1.msra.mxu0 %v1042
    %1700 = vmatprep.subr.mxu0 %v1047
    %1701 = vmatpush1.msra.mxu0 %v1046
    %1702 = vmatprep.subr.mxu0 %v1051
    %1703 = vmatpush1.msra.mxu0 %v1050
    %1704 = vmatprep.subr.mxu0 %v1055
    %1705 = vmatpush1.msra.mxu0 %v1054
    %1706 = vmatprep.subr.mxu0 %v1059
    %1707 = vmatpush1.msra.mxu0 %v1058
    %1708 = vmatprep.mubr.f32.mxu0 %v604
    %1709 = vmatmul.mubr.f32.gmra.mrb[0].mxu0 %v598
    %v1710 = vpop.f32.mrb[0].mxu0
    %v1711 = vadd.f32 %v1634, %v1710
    %v1712 = vpop.f32.mrb[0].mxu0
    %v1713 = vadd.f32 %v1636, %v1712
    %1714 = vmatprep.mubr.f32.mxu0 %v662
    %1715 = vmatmul.mubr.f32.gmra.mrb[0].mxu0 %v659
    %v1716 = vpop.f32.mrb[0].mxu0
    %v1717 = vadd.f32 %v1640, %v1716
    %v1718 = vpop.f32.mrb[0].mxu0
    %v1719 = vadd.f32 %v1642, %v1718
    %1720 = vdwg.mxu0
    %1721 = vmatprep.subr.mxu0 %v1063
    %1722 = vmatpush1.msra.mxu0 %v1062
    %1723 = vmatprep.subr.mxu0 %v1067
    %1724 = vmatpush1.msra.mxu0 %v1066
    %1725 = vmatprep.subr.mxu0 %v1071
    %1726 = vmatpush1.msra.mxu0 %v1070
    %1727 = vmatprep.subr.mxu0 %v1075
    %1728 = vmatpush1.msra.mxu0 %v1074
    %1729 = vmatprep.subr.mxu0 %v1079
    %1730 = vmatpush1.msra.mxu0 %v1078
    %1731 = vmatprep.subr.mxu0 %v1083
    %1732 = vmatpush1.msra.mxu0 %v1082
    %1733 = vmatprep.subr.mxu0 %v1087
    %1734 = vmatpush1.msra.mxu0 %v1086
    %1735 = vmatprep.subr.mxu0 %v1091
    %1736 = vmatpush1.msra.mxu0 %v1090
    %1737 = vmatprep.subr.mxu0 %v1095
    %1738 = vmatpush1.msra.mxu0 %v1094
    %1739 = vmatprep.subr.mxu0 %v1099
    %1740 = vmatpush1.msra.mxu0 %v1098
    %1741 = vmatprep.subr.mxu0 %v1103
    %1742 = vmatpush1.msra.mxu0 %v1102
    %1743 = vmatprep.subr.mxu0 %v1107
    %1744 = vmatpush1.msra.mxu0 %v1106
    %1745 = vmatprep.subr.mxu0 %v1111
    %1746 = vmatpush1.msra.mxu0 %v1110
    %1747 = vmatprep.subr.mxu0 %v1115
    %1748 = vmatpush1.msra.mxu0 %v1114
    %1749 = vmatprep.subr.mxu0 %v1119
    %1750 = vmatpush1.msra.mxu0 %v1118
    %1751 = vmatprep.subr.mxu0 %v1123
    %1752 = vmatpush1.msra.mxu0 %v1122
    %1753 = vmatprep.subr.mxu0 %v1127
    %1754 = vmatpush1.msra.mxu0 %v1126
    %1755 = vmatprep.subr.mxu0 %v1131
    %1756 = vmatpush1.msra.mxu0 %v1130
    %1757 = vmatprep.subr.mxu0 %v1135
    %1758 = vmatpush1.msra.mxu0 %v1134
    %1759 = vmatprep.subr.mxu0 %v1139
    %1760 = vmatpush1.msra.mxu0 %v1138
    %1761 = vmatprep.subr.mxu0 %v1143
    %1762 = vmatpush1.msra.mxu0 %v1142
    %1763 = vmatprep.subr.mxu0 %v1147
    %1764 = vmatpush1.msra.mxu0 %v1146
    %1765 = vmatprep.subr.mxu0 %v1151
    %1766 = vmatpush1.msra.mxu0 %v1150
    %1767 = vmatprep.subr.mxu0 %v1155
    %1768 = vmatpush1.msra.mxu0 %v1154
    %1769 = vmatprep.subr.mxu0 0.0
    %1770 = vmatpush1.msra.mxu0 0.0
    %1771 = vmatprep.subr.mxu0 0.0
    %1772 = vmatpush1.msra.mxu0 0.0
    %1773 = vmatprep.subr.mxu0 0.0
    %1774 = vmatpush1.msra.mxu0 0.0
    %1775 = vmatprep.subr.mxu0 0.0
    %1776 = vmatpush1.msra.mxu0 0.0
    %1777 = vmatprep.subr.mxu0 0.0
    %1778 = vmatpush1.msra.mxu0 0.0
    %1779 = vmatprep.subr.mxu0 0.0
    %1780 = vmatpush1.msra.mxu0 0.0
    %1781 = vmatprep.subr.mxu0 0.0
    %1782 = vmatpush1.msra.mxu0 0.0
    %1783 = vmatprep.subr.mxu0 0.0
    %1784 = vmatpush1.msra.mxu0 0.0
    %1785 = vmatprep.mubr.f32.mxu0 %v1178
    %1786 = vmatmul.mubr.f32.gmra.mrb[0].mxu0 %v607
    %v1787 = vpop.f32.mrb[0].mxu0
    %v1788 = vadd.f32 %v1711, %v1787
    %v1789 = vpop.f32.mrb[0].mxu0
    %v1790 = vadd.f32 %v1713, %v1789
    %1791 = vmatprep.mubr.f32.mxu0 %v1180
    %1792 = vmatmul.mubr.f32.gmra.mrb[0].mxu0 %v665
    %v1793 = vpop.f32.mrb[0].mxu0
    %v1794 = vadd.f32 %v1717, %v1793
    %v1795 = vpop.f32.mrb[0].mxu0
    %v1796 = vadd.f32 %v1719, %v1795
    %1797 = vdwg.mxu0
    %v1798 = vmax.f32 %v1480, 0.0
    %v1799 = vmax.f32 %v1482, 0.0
    %v1800 = vmax.f32 %v1788, 0.0
    %v1801 = vmax.f32 %v1790, 0.0
    %v1802 = vmax.f32 %v1486, 0.0
    %v1803 = vmax.f32 %v1488, 0.0
    %v1804 = vmax.f32 %v1794, 0.0
    %v1805 = vmax.f32 %v1796, 0.0
    %v1810 = vrot.slane %v1798, 6
    %v1811 = vrot.slane %v1799, 6
    %v1812 = vrot.slane %v1800, 6
    %v1813 = vrot.slane %v1801, 6
    %v1818 = vsel %vm323, 0.0, %v1810
    %v1819 = vsel %vm323, 0.0, %v1811
    %v1820 = vsel %vm323, 0.0, %v1812
    %v1821 = vsel %vm323, 0.0, %v1813
    %v1822 = vsel %vm323, %v1810, 0.0
    %v1823 = vsel %vm323, %v1811, 0.0
    %v1824 = vsel %vm323, %v1812, 0.0
    %v1825 = vsel %vm323, %v1813, 0.0
    %v1830 = vrot.slane %v1802, 6
    %v1831 = vrot.slane %v1803, 6
    %v1832 = vrot.slane %v1804, 6
    %v1833 = vrot.slane %v1805, 6
    %v1838 = vsel %vm323, 0.0, %v1830
    %v1839 = vsel %vm323, 0.0, %v1831
    %v1840 = vsel %vm323, 0.0, %v1832
    %v1841 = vsel %vm323, 0.0, %v1833
    %v1842 = vsel %vm323, %v1830, 0.0
    %v1843 = vsel %vm323, %v1831, 0.0
    %v1844 = vsel %vm323, %v1832, 0.0
    %v1845 = vsel %vm323, %v1833, 0.0
    %v1854 = vrot.slane %v1818, 1
    %v1855 = vrot.slane %v1822, 1
    %v1856 = vsel %vm52, %v1854, %v1855
    %v1857 = vrot.slane %v1819, 1
    %v1858 = vrot.slane %v1823, 1
    %v1859 = vsel %vm52, %v1857, %v1858
    %v1860 = vrot.slane %v1820, 1
    %v1861 = vrot.slane %v1824, 1
    %v1862 = vsel %vm52, %v1860, %v1861
    %v1863 = vrot.slane %v1821, 1
    %v1864 = vrot.slane %v1825, 1
    %v1865 = vsel %vm52, %v1863, %v1864
    %v1874 = vrot.slane %v1818, 2
    %v1875 = vrot.slane %v1822, 2
    %v1876 = vsel %vm62, %v1874, %v1875
    %v1877 = vrot.slane %v1819, 2
    %v1878 = vrot.slane %v1823, 2
    %v1879 = vsel %vm62, %v1877, %v1878
    %v1880 = vrot.slane %v1820, 2
    %v1881 = vrot.slane %v1824, 2
    %v1882 = vsel %vm62, %v1880, %v1881
    %v1883 = vrot.slane %v1821, 2
    %v1884 = vrot.slane %v1825, 2
    %v1885 = vsel %vm62, %v1883, %v1884
    %v1902 = vrot.slane %v1838, 1
    %v1903 = vrot.slane %v1842, 1
    %v1904 = vsel %vm52, %v1902, %v1903
    %v1905 = vrot.slane %v1839, 1
    %v1906 = vrot.slane %v1843, 1
    %v1907 = vsel %vm52, %v1905, %v1906
    %v1908 = vrot.slane %v1840, 1
    %v1909 = vrot.slane %v1844, 1
    %v1910 = vsel %vm52, %v1908, %v1909
    %v1911 = vrot.slane %v1841, 1
    %v1912 = vrot.slane %v1845, 1
    %v1913 = vsel %vm52, %v1911, %v1912
    %v1914 = vrot.slane %v1838, 2
    %v1915 = vrot.slane %v1842, 2
    %v1916 = vsel %vm62, %v1914, %v1915
    %v1917 = vrot.slane %v1839, 2
    %v1918 = vrot.slane %v1843, 2
    %v1919 = vsel %vm62, %v1917, %v1918
    %v1920 = vrot.slane %v1840, 2
    %v1921 = vrot.slane %v1844, 2
    %v1922 = vsel %vm62, %v1920, %v1921
    %v1923 = vrot.slane %v1841, 2
    %v1924 = vrot.slane %v1845, 2
    %v1925 = vsel %vm62, %v1923, %v1924
    %v1926 = vrot.slane %v1838, 6
    %v1927 = vrot.slane %v1839, 6
    %v1928 = vrot.slane %v1840, 6
    %v1929 = vrot.slane %v1841, 6
    %v1930 = vrot.slane %v1904, 6
    %v1931 = vrot.slane %v1907, 6
    %v1932 = vrot.slane %v1910, 6
    %v1933 = vrot.slane %v1913, 6
    %v1934 = vrot.slane %v1916, 6
    %v1935 = vrot.slane %v1919, 6
    %v1936 = vrot.slane %v1922, 6
    %v1937 = vrot.slane %v1925, 6
    %v1938 = vrot.slane %v1842, 6
    %v1939 = vsel %vm323, %v1926, %v1938
    %v1940 = vrot.slane %v1843, 6
    %v1941 = vsel %vm323, %v1927, %v1940
    %v1942 = vrot.slane %v1844, 6
    %v1943 = vsel %vm323, %v1928, %v1942
    %v1944 = vrot.slane %v1845, 6
    %v1945 = vsel %vm323, %v1929, %v1944
    %v1946 = vrot.slane %v1903, 6
    %v1947 = vsel %vm323, %v1930, %v1946
    %v1948 = vrot.slane %v1906, 6
    %v1949 = vsel %vm323, %v1931, %v1948
    %v1950 = vrot.slane %v1909, 6
    %v1951 = vsel %vm323, %v1932, %v1950
    %v1952 = vrot.slane %v1912, 6
    %v1953 = vsel %vm323, %v1933, %v1952
    %v1954 = vrot.slane %v1915, 6
    %v1955 = vsel %vm323, %v1934, %v1954
    %v1956 = vrot.slane %v1918, 6
    %v1957 = vsel %vm323, %v1935, %v1956
    %v1958 = vrot.slane %v1921, 6
    %v1959 = vsel %vm323, %v1936, %v1958
    %v1960 = vrot.slane %v1924, 6
    %v1961 = vsel %vm323, %v1937, %v1960
    %v1986 = vsel %vm323, %v1822, %v1926
    %v1987 = vsel %vm323, %v1823, %v1927
    %v1988 = vsel %vm323, %v1824, %v1928
    %v1989 = vsel %vm323, %v1825, %v1929
    %v1990 = vsel %vm323, %v1855, %v1930
    %v1991 = vsel %vm323, %v1858, %v1931
    %v1992 = vsel %vm323, %v1861, %v1932
    %v1993 = vsel %vm323, %v1864, %v1933
    %v1994 = vsel %vm323, %v1875, %v1934
    %v1995 = vsel %vm323, %v1878, %v1935
    %v1996 = vsel %vm323, %v1881, %v1936
    %v1997 = vsel %vm323, %v1884, %v1937
    %v1998 = vld [vmem:[%s7] sm:$0xff]
    %v1999 = vld [vmem:[%s7 + $0x8] sm:$0xff]
    %v2000 = vld [vmem:[%s7 + $0x10] sm:$0xff]
    %v2001 = vld [vmem:[%s7 + $0x18] sm:$0xff]
    %v2002 = vld [vmem:[%s7 + $0x20] sm:$0xff]
    %v2003 = vld [vmem:[%s7 + $0x28] sm:$0xff]
    %v2004 = vld [vmem:[%s7 + $0x30] sm:$0xff]
    %v2005 = vld [vmem:[%s7 + $0x38] sm:$0xff]
    %v2006 = vld [vmem:[%s7 + $0x40] sm:$0xff]
    %v2007 = vld [vmem:[%s7 + $0x48] sm:$0xff]
    %v2008 = vld [vmem:[%s7 + $0x50] sm:$0xff]
    %v2009 = vld [vmem:[%s7 + $0x58] sm:$0xff]
    %v2010 = vld [vmem:[%s7 + $0x60] sm:$0xff]
    %v2011 = vld [vmem:[%s7 + $0x68] sm:$0xff]
    %v2012 = vld [vmem:[%s7 + $0x70] sm:$0xff]
    %v2013 = vld [vmem:[%s7 + $0x78] sm:$0xff]
    %v2014 = vld [vmem:[%s7 + $0x80] sm:$0xff]
    %v2015 = vld [vmem:[%s7 + $0x88] sm:$0xff]
    %v2016 = vld [vmem:[%s7 + $0x90] sm:$0xff]
    %v2017 = vld [vmem:[%s7 + $0x98] sm:$0xff]
    %v2018 = vld [vmem:[%s7 + $0xa0] sm:$0xff]
    %v2019 = vld [vmem:[%s7 + $0xa8] sm:$0xff]
    %v2020 = vld [vmem:[%s7 + $0xb0] sm:$0xff]
    %v2021 = vld [vmem:[%s7 + $0xb8] sm:$0xff]
    %v2022 = vld [vmem:[%s7 + $0xc0] sm:$0xff]
    %v2023 = vld [vmem:[%s7 + $0xc8] sm:$0xff]
    %v2024 = vld [vmem:[%s7 + $0xd0] sm:$0xff]
    %v2025 = vld [vmem:[%s7 + $0xd8] sm:$0xff]
    %v2026 = vld [vmem:[%s7 + $0xe0] sm:$0xff]
    %v2027 = vld [vmem:[%s7 + $0xe8] sm:$0xff]
    %v2028 = vld [vmem:[%s7 + $0xf0] sm:$0xff]
    %v2029 = vld [vmem:[%s7 + $0xf8] sm:$0xff]
    %v2030 = vld [vmem:[%s7 + $0x100] sm:$0xff]
    %v2031 = vld [vmem:[%s7 + $0x108] sm:$0xff]
    %v2032 = vld [vmem:[%s7 + $0x110] sm:$0xff]
    %v2033 = vld [vmem:[%s7 + $0x118] sm:$0xff]
    %v2034 = vld [vmem:[%s7 + $0x120] sm:$0xff]
    %v2035 = vld [vmem:[%s7 + $0x128] sm:$0xff]
    %v2036 = vld [vmem:[%s7 + $0x130] sm:$0xff]
    %v2037 = vld [vmem:[%s7 + $0x138] sm:$0xff]
    %v2038 = vld [vmem:[%s7 + $0x140] sm:$0xff]
    %v2039 = vld [vmem:[%s7 + $0x148] sm:$0xff]
    %v2040 = vld [vmem:[%s7 + $0x150] sm:$0xff]
    %v2041 = vld [vmem:[%s7 + $0x158] sm:$0xff]
    %v2042 = vld [vmem:[%s7 + $0x160] sm:$0xff]
    %v2043 = vld [vmem:[%s7 + $0x168] sm:$0xff]
    %v2044 = vld [vmem:[%s7 + $0x170] sm:$0xff]
    %v2045 = vld [vmem:[%s7 + $0x178] sm:$0xff]
    %v2046 = vld [vmem:[%s7 + $0x180] sm:$0xff]
    %v2047 = vld [vmem:[%s7 + $0x188] sm:$0xff]
    %v2048 = vld [vmem:[%s7 + $0x190] sm:$0xff]
    %v2049 = vld [vmem:[%s7 + $0x198] sm:$0xff]
    %v2050 = vld [vmem:[%s7 + $0x1a0] sm:$0xff]
    %v2051 = vld [vmem:[%s7 + $0x1a8] sm:$0xff]
    %v2052 = vld [vmem:[%s7 + $0x1b0] sm:$0xff]
    %v2053 = vld [vmem:[%s7 + $0x1b8] sm:$0xff]
    %v2054 = vld [vmem:[%s7 + $0x1c0] sm:$0xff]
    %v2055 = vld [vmem:[%s7 + $0x1c8] sm:$0xff]
    %v2056 = vld [vmem:[%s7 + $0x1d0] sm:$0xff]
    %v2057 = vld [vmem:[%s7 + $0x1d8] sm:$0xff]
    %v2058 = vld [vmem:[%s7 + $0x1e0] sm:$0xff]
    %v2059 = vld [vmem:[%s7 + $0x1e8] sm:$0xff]
    %v2060 = vld [vmem:[%s7 + $0x1f0] sm:$0xff]
    %v2061 = vld [vmem:[%s7 + $0x1f8] sm:$0xff]
    %v2062 = vld [vmem:[%s7 + $0x200] sm:$0xff]
    %v2063 = vld [vmem:[%s7 + $0x208] sm:$0xff]
    %v2064 = vld [vmem:[%s7 + $0x210] sm:$0xff]
    %v2065 = vld [vmem:[%s7 + $0x218] sm:$0xff]
    %v2066 = vld [vmem:[%s7 + $0x220] sm:$0xff]
    %v2067 = vld [vmem:[%s7 + $0x228] sm:$0xff]
    %v2068 = vld [vmem:[%s7 + $0x230] sm:$0xff]
    %v2069 = vld [vmem:[%s7 + $0x238] sm:$0xff]
    %v2070 = vld [vmem:[%s7 + $0x240] sm:$0xff]
    %v2071 = vld [vmem:[%s7 + $0x248] sm:$0xff]
    %v2072 = vld [vmem:[%s7 + $0x250] sm:$0xff]
    %v2073 = vld [vmem:[%s7 + $0x258] sm:$0xff]
    %v2074 = vld [vmem:[%s7 + $0x260] sm:$0xff]
    %v2075 = vld [vmem:[%s7 + $0x268] sm:$0xff]
    %v2076 = vld [vmem:[%s7 + $0x270] sm:$0xff]
    %v2077 = vld [vmem:[%s7 + $0x278] sm:$0xff]
    %v2078 = vld [vmem:[%s7 + $0x280] sm:$0xff]
    %v2079 = vld [vmem:[%s7 + $0x288] sm:$0xff]
    %v2080 = vld [vmem:[%s7 + $0x290] sm:$0xff]
    %v2081 = vld [vmem:[%s7 + $0x298] sm:$0xff]
    %v2082 = vld [vmem:[%s7 + $0x2a0] sm:$0xff]
    %v2083 = vld [vmem:[%s7 + $0x2a8] sm:$0xff]
    %v2084 = vld [vmem:[%s7 + $0x2b0] sm:$0xff]
    %v2085 = vld [vmem:[%s7 + $0x2b8] sm:$0xff]
    %v2086 = vld [vmem:[%s7 + $0x2c0] sm:$0xff]
    %v2087 = vld [vmem:[%s7 + $0x2c8] sm:$0xff]
    %v2088 = vld [vmem:[%s7 + $0x2d0] sm:$0xff]
    %v2089 = vld [vmem:[%s7 + $0x2d8] sm:$0xff]
    %v2090 = vld [vmem:[%s7 + $0x2e0] sm:$0xff]
    %v2091 = vld [vmem:[%s7 + $0x2e8] sm:$0xff]
    %v2092 = vld [vmem:[%s7 + $0x2f0] sm:$0xff]
    %v2093 = vld [vmem:[%s7 + $0x2f8] sm:$0xff]
    %v2094 = vld [vmem:[%s7 + $0x300] sm:$0xff]
    %v2095 = vld [vmem:[%s7 + $0x308] sm:$0xff]
    %v2096 = vld [vmem:[%s7 + $0x310] sm:$0xff]
    %v2097 = vld [vmem:[%s7 + $0x318] sm:$0xff]
    %v2098 = vld [vmem:[%s7 + $0x320] sm:$0xff]
    %v2099 = vld [vmem:[%s7 + $0x328] sm:$0xff]
    %v2100 = vld [vmem:[%s7 + $0x330] sm:$0xff]
    %v2101 = vld [vmem:[%s7 + $0x338] sm:$0xff]
    %v2102 = vld [vmem:[%s7 + $0x340] sm:$0xff]
    %v2103 = vld [vmem:[%s7 + $0x348] sm:$0xff]
    %v2104 = vld [vmem:[%s7 + $0x350] sm:$0xff]
    %v2105 = vld [vmem:[%s7 + $0x358] sm:$0xff]
    %v2106 = vld [vmem:[%s7 + $0x360] sm:$0xff]
    %v2107 = vld [vmem:[%s7 + $0x368] sm:$0xff]
    %v2108 = vld [vmem:[%s7 + $0x370] sm:$0xff]
    %v2109 = vld [vmem:[%s7 + $0x378] sm:$0xff]
    %v2110 = vld [vmem:[%s7 + $0x380] sm:$0xff]
    %v2111 = vld [vmem:[%s7 + $0x388] sm:$0xff]
    %v2112 = vld [vmem:[%s7 + $0x390] sm:$0xff]
    %v2113 = vld [vmem:[%s7 + $0x398] sm:$0xff]
    %v2114 = vld [vmem:[%s7 + $0x3a0] sm:$0xff]
    %v2115 = vld [vmem:[%s7 + $0x3a8] sm:$0xff]
    %v2116 = vld [vmem:[%s7 + $0x3b0] sm:$0xff]
    %v2117 = vld [vmem:[%s7 + $0x3b8] sm:$0xff]
    %v2118 = vld [vmem:[%s7 + $0x3c0] sm:$0xff]
    %v2119 = vld [vmem:[%s7 + $0x3c8] sm:$0xff]
    %v2120 = vld [vmem:[%s7 + $0x3d0] sm:$0xff]
    %v2121 = vld [vmem:[%s7 + $0x3d8] sm:$0xff]
    %v2122 = vld [vmem:[%s7 + $0x3e0] sm:$0xff]
    %v2123 = vld [vmem:[%s7 + $0x3e8] sm:$0xff]
    %v2124 = vld [vmem:[%s7 + $0x3f0] sm:$0xff]
    %v2125 = vld [vmem:[%s7 + $0x3f8] sm:$0xff]
    %v2126 = vld [vmem:[%s7 + $0x400] sm:$0xff]
    %v2127 = vld [vmem:[%s7 + $0x408] sm:$0xff]
    %v2128 = vld [vmem:[%s7 + $0x410] sm:$0xff]
    %v2129 = vld [vmem:[%s7 + $0x418] sm:$0xff]
    %v2130 = vld [vmem:[%s7 + $0x420] sm:$0xff]
    %v2131 = vld [vmem:[%s7 + $0x428] sm:$0xff]
    %v2132 = vld [vmem:[%s7 + $0x430] sm:$0xff]
    %v2133 = vld [vmem:[%s7 + $0x438] sm:$0xff]
    %v2134 = vld [vmem:[%s7 + $0x440] sm:$0xff]
    %v2135 = vld [vmem:[%s7 + $0x448] sm:$0xff]
    %v2136 = vld [vmem:[%s7 + $0x450] sm:$0xff]
    %v2137 = vld [vmem:[%s7 + $0x458] sm:$0xff]
    %v2138 = vld [vmem:[%s7 + $0x460] sm:$0xff]
    %v2139 = vld [vmem:[%s7 + $0x468] sm:$0xff]
    %v2140 = vld [vmem:[%s7 + $0x470] sm:$0xff]
    %v2141 = vld [vmem:[%s7 + $0x478] sm:$0xff]
    %v2142 = vld [vmem:[%s7 + $0x480] sm:$0xff]
    %v2143 = vld [vmem:[%s7 + $0x488] sm:$0xff]
    %v2144 = vld [vmem:[%s7 + $0x490] sm:$0xff]
    %v2145 = vld [vmem:[%s7 + $0x498] sm:$0xff]
    %v2146 = vld [vmem:[%s7 + $0x4a0] sm:$0xff]
    %v2147 = vld [vmem:[%s7 + $0x4a8] sm:$0xff]
    %v2148 = vld [vmem:[%s7 + $0x4b0] sm:$0xff]
    %v2149 = vld [vmem:[%s7 + $0x4b8] sm:$0xff]
    %v2150 = vld [vmem:[%s7 + $0x4c0] sm:$0xff]
    %v2151 = vld [vmem:[%s7 + $0x4c8] sm:$0xff]
    %v2152 = vld [vmem:[%s7 + $0x4d0] sm:$0xff]
    %v2153 = vld [vmem:[%s7 + $0x4d8] sm:$0xff]
    %v2154 = vld [vmem:[%s7 + $0x4e0] sm:$0xff]
    %v2155 = vld [vmem:[%s7 + $0x4e8] sm:$0xff]
    %v2156 = vld [vmem:[%s7 + $0x4f0] sm:$0xff]
    %v2157 = vld [vmem:[%s7 + $0x4f8] sm:$0xff]
    %v2158 = vld [vmem:[%s7 + $0x500] sm:$0xff]
    %v2159 = vld [vmem:[%s7 + $0x508] sm:$0xff]
    %v2160 = vld [vmem:[%s7 + $0x510] sm:$0xff]
    %v2161 = vld [vmem:[%s7 + $0x518] sm:$0xff]
    %v2162 = vld [vmem:[%s7 + $0x520] sm:$0xff]
    %v2163 = vld [vmem:[%s7 + $0x528] sm:$0xff]
    %v2164 = vld [vmem:[%s7 + $0x530] sm:$0xff]
    %v2165 = vld [vmem:[%s7 + $0x538] sm:$0xff]
    %v2166 = vld [vmem:[%s7 + $0x540] sm:$0xff]
    %v2167 = vld [vmem:[%s7 + $0x548] sm:$0xff]
    %v2168 = vld [vmem:[%s7 + $0x550] sm:$0xff]
    %v2169 = vld [vmem:[%s7 + $0x558] sm:$0xff]
    %v2170 = vld [vmem:[%s7 + $0x560] sm:$0xff]
    %v2171 = vld [vmem:[%s7 + $0x568] sm:$0xff]
    %v2172 = vld [vmem:[%s7 + $0x570] sm:$0xff]
    %v2173 = vld [vmem:[%s7 + $0x578] sm:$0xff]
    %v2174 = vld [vmem:[%s7 + $0x580] sm:$0xff]
    %v2175 = vld [vmem:[%s7 + $0x588] sm:$0xff]
    %v2176 = vld [vmem:[%s7 + $0x590] sm:$0xff]
    %v2177 = vld [vmem:[%s7 + $0x598] sm:$0xff]
    %v2178 = vld [vmem:[%s7 + $0x5a0] sm:$0xff]
    %v2179 = vld [vmem:[%s7 + $0x5a8] sm:$0xff]
    %v2180 = vld [vmem:[%s7 + $0x5b0] sm:$0xff]
    %v2181 = vld [vmem:[%s7 + $0x5b8] sm:$0xff]
    %v2182 = vld [vmem:[%s7 + $0x5c0] sm:$0xff]
    %v2183 = vld [vmem:[%s7 + $0x5c8] sm:$0xff]
    %v2184 = vld [vmem:[%s7 + $0x5d0] sm:$0xff]
    %v2185 = vld [vmem:[%s7 + $0x5d8] sm:$0xff]
    %v2186 = vld [vmem:[%s7 + $0x5e0] sm:$0xff]
    %v2187 = vld [vmem:[%s7 + $0x5e8] sm:$0xff]
    %v2188 = vld [vmem:[%s7 + $0x5f0] sm:$0xff]
    %v2189 = vld [vmem:[%s7 + $0x5f8] sm:$0xff]
    %v2190 = vld [vmem:[%s7 + $0x600] sm:$0xff]
    %v2191 = vld [vmem:[%s7 + $0x608] sm:$0xff]
    %v2192 = vld [vmem:[%s7 + $0x610] sm:$0xff]
    %v2193 = vld [vmem:[%s7 + $0x618] sm:$0xff]
    %v2194 = vld [vmem:[%s7 + $0x620] sm:$0xff]
    %v2195 = vld [vmem:[%s7 + $0x628] sm:$0xff]
    %v2196 = vld [vmem:[%s7 + $0x630] sm:$0xff]
    %v2197 = vld [vmem:[%s7 + $0x638] sm:$0xff]
    %v2198 = vld [vmem:[%s7 + $0x640] sm:$0xff]
    %v2199 = vld [vmem:[%s7 + $0x648] sm:$0xff]
    %v2200 = vld [vmem:[%s7 + $0x650] sm:$0xff]
    %v2201 = vld [vmem:[%s7 + $0x658] sm:$0xff]
    %v2202 = vld [vmem:[%s7 + $0x660] sm:$0xff]
    %v2203 = vld [vmem:[%s7 + $0x668] sm:$0xff]
    %v2204 = vld [vmem:[%s7 + $0x670] sm:$0xff]
    %v2205 = vld [vmem:[%s7 + $0x678] sm:$0xff]
    %v2206 = vld [vmem:[%s7 + $0x680] sm:$0xff]
    %v2207 = vld [vmem:[%s7 + $0x688] sm:$0xff]
    %v2208 = vld [vmem:[%s7 + $0x690] sm:$0xff]
    %v2209 = vld [vmem:[%s7 + $0x698] sm:$0xff]
    %v2210 = vld [vmem:[%s7 + $0x6a0] sm:$0xff]
    %v2211 = vld [vmem:[%s7 + $0x6a8] sm:$0xff]
    %v2212 = vld [vmem:[%s7 + $0x6b0] sm:$0xff]
    %v2213 = vld [vmem:[%s7 + $0x6b8] sm:$0xff]
    %v2214 = vld [vmem:[%s7 + $0x6c0] sm:$0xff]
    %v2215 = vld [vmem:[%s7 + $0x6c8] sm:$0xff]
    %v2216 = vld [vmem:[%s7 + $0x6d0] sm:$0xff]
    %v2217 = vld [vmem:[%s7 + $0x6d8] sm:$0xff]
    %v2218 = vld [vmem:[%s7 + $0x6e0] sm:$0xff]
    %v2219 = vld [vmem:[%s7 + $0x6e8] sm:$0xff]
    %v2220 = vld [vmem:[%s7 + $0x6f0] sm:$0xff]
    %v2221 = vld [vmem:[%s7 + $0x6f8] sm:$0xff]
    %v2222 = vld [vmem:[%s7 + $0x700] sm:$0xff]
    %v2223 = vld [vmem:[%s7 + $0x708] sm:$0xff]
    %v2224 = vld [vmem:[%s7 + $0x710] sm:$0xff]
    %v2225 = vld [vmem:[%s7 + $0x718] sm:$0xff]
    %v2226 = vld [vmem:[%s7 + $0x720] sm:$0xff]
    %v2227 = vld [vmem:[%s7 + $0x728] sm:$0xff]
    %v2228 = vld [vmem:[%s7 + $0x730] sm:$0xff]
    %v2229 = vld [vmem:[%s7 + $0x738] sm:$0xff]
    %v2230 = vld [vmem:[%s7 + $0x740] sm:$0xff]
    %v2231 = vld [vmem:[%s7 + $0x748] sm:$0xff]
    %v2232 = vld [vmem:[%s7 + $0x750] sm:$0xff]
    %v2233 = vld [vmem:[%s7 + $0x758] sm:$0xff]
    %v2234 = vld [vmem:[%s7 + $0x760] sm:$0xff]
    %v2235 = vld [vmem:[%s7 + $0x768] sm:$0xff]
    %v2236 = vld [vmem:[%s7 + $0x770] sm:$0xff]
    %v2237 = vld [vmem:[%s7 + $0x778] sm:$0xff]
    %v2238 = vld [vmem:[%s7 + $0x780] sm:$0xff]
    %v2239 = vld [vmem:[%s7 + $0x788] sm:$0xff]
    %v2240 = vld [vmem:[%s7 + $0x790] sm:$0xff]
    %v2241 = vld [vmem:[%s7 + $0x798] sm:$0xff]
    %v2242 = vld [vmem:[%s7 + $0x7a0] sm:$0xff]
    %v2243 = vld [vmem:[%s7 + $0x7a8] sm:$0xff]
    %v2244 = vld [vmem:[%s7 + $0x7b0] sm:$0xff]
    %v2245 = vld [vmem:[%s7 + $0x7b8] sm:$0xff]
    %v2246 = vld [vmem:[%s7 + $0x7c0] sm:$0xff]
    %v2247 = vld [vmem:[%s7 + $0x7c8] sm:$0xff]
    %v2248 = vld [vmem:[%s7 + $0x7d0] sm:$0xff]
    %v2249 = vld [vmem:[%s7 + $0x7d8] sm:$0xff]
    %v2250 = vld [vmem:[%s7 + $0x7e0] sm:$0xff]
    %v2251 = vld [vmem:[%s7 + $0x7e8] sm:$0xff]
    %v2252 = vld [vmem:[%s7 + $0x7f0] sm:$0xff]
    %v2253 = vld [vmem:[%s7 + $0x7f8] sm:$0xff]
    %v2254 = vld [vmem:[%s7 + $0x800] sm:$0xff]
    %v2255 = vld [vmem:[%s7 + $0x808] sm:$0xff]
    %v2256 = vld [vmem:[%s7 + $0x810] sm:$0xff]
    %v2257 = vld [vmem:[%s7 + $0x818] sm:$0xff]
    %v2258 = vld [vmem:[%s7 + $0x820] sm:$0xff]
    %v2259 = vld [vmem:[%s7 + $0x828] sm:$0xff]
    %v2260 = vld [vmem:[%s7 + $0x830] sm:$0xff]
    %v2261 = vld [vmem:[%s7 + $0x838] sm:$0xff]
    %v2262 = vld [vmem:[%s7 + $0x840] sm:$0xff]
    %v2263 = vld [vmem:[%s7 + $0x848] sm:$0xff]
    %v2264 = vld [vmem:[%s7 + $0x850] sm:$0xff]
    %v2265 = vld [vmem:[%s7 + $0x858] sm:$0xff]
    %v2266 = vld [vmem:[%s7 + $0x860] sm:$0xff]
    %v2267 = vld [vmem:[%s7 + $0x868] sm:$0xff]
    %v2268 = vld [vmem:[%s7 + $0x870] sm:$0xff]
    %v2269 = vld [vmem:[%s7 + $0x878] sm:$0xff]
    %v2270 = vld [vmem:[%s7 + $0x880] sm:$0xff]
    %v2271 = vld [vmem:[%s7 + $0x888] sm:$0xff]
    %v2272 = vld [vmem:[%s7 + $0x890] sm:$0xff]
    %v2273 = vld [vmem:[%s7 + $0x898] sm:$0xff]
    %v2274 = vld [vmem:[%s7 + $0x8a0] sm:$0xff]
    %v2275 = vld [vmem:[%s7 + $0x8a8] sm:$0xff]
    %v2276 = vld [vmem:[%s7 + $0x8b0] sm:$0xff]
    %v2277 = vld [vmem:[%s7 + $0x8b8] sm:$0xff]
    %v2278 = vld [vmem:[%s7 + $0x8c0] sm:$0xff]
    %v2279 = vld [vmem:[%s7 + $0x8c8] sm:$0xff]
    %v2280 = vld [vmem:[%s7 + $0x8d0] sm:$0xff]
    %v2281 = vld [vmem:[%s7 + $0x8d8] sm:$0xff]
    %v2282 = vld [vmem:[%s7 + $0x8e0] sm:$0xff]
    %v2283 = vld [vmem:[%s7 + $0x8e8] sm:$0xff]
    %v2284 = vld [vmem:[%s7 + $0x8f0] sm:$0xff]
    %v2285 = vld [vmem:[%s7 + $0x8f8] sm:$0xff]
    %v2286 = vld [vmem:[%s7 + $0x900] sm:$0xff]
    %v2287 = vld [vmem:[%s7 + $0x908] sm:$0xff]
    %v2288 = vld [vmem:[%s7 + $0x910] sm:$0xff]
    %v2289 = vld [vmem:[%s7 + $0x918] sm:$0xff]
    %v2290 = vld [vmem:[%s7 + $0x920] sm:$0xff]
    %v2291 = vld [vmem:[%s7 + $0x928] sm:$0xff]
    %v2292 = vld [vmem:[%s7 + $0x930] sm:$0xff]
    %v2293 = vld [vmem:[%s7 + $0x938] sm:$0xff]
    %v2294 = vld [vmem:[%s7 + $0x940] sm:$0xff]
    %v2295 = vld [vmem:[%s7 + $0x948] sm:$0xff]
    %v2296 = vld [vmem:[%s7 + $0x950] sm:$0xff]
    %v2297 = vld [vmem:[%s7 + $0x958] sm:$0xff]
    %v2298 = vld [vmem:[%s7 + $0x960] sm:$0xff]
    %v2299 = vld [vmem:[%s7 + $0x968] sm:$0xff]
    %v2300 = vld [vmem:[%s7 + $0x970] sm:$0xff]
    %v2301 = vld [vmem:[%s7 + $0x978] sm:$0xff]
    %v2302 = vld [vmem:[%s7 + $0x980] sm:$0xff]
    %v2303 = vld [vmem:[%s7 + $0x988] sm:$0xff]
    %v2304 = vld [vmem:[%s7 + $0x990] sm:$0xff]
    %v2305 = vld [vmem:[%s7 + $0x998] sm:$0xff]
    %v2306 = vld [vmem:[%s7 + $0x9a0] sm:$0xff]
    %v2307 = vld [vmem:[%s7 + $0x9a8] sm:$0xff]
    %v2308 = vld [vmem:[%s7 + $0x9b0] sm:$0xff]
    %v2309 = vld [vmem:[%s7 + $0x9b8] sm:$0xff]
    %v2310 = vld [vmem:[%s7 + $0x9c0] sm:$0xff]
    %v2311 = vld [vmem:[%s7 + $0x9c8] sm:$0xff]
    %v2312 = vld [vmem:[%s7 + $0x9d0] sm:$0xff]
    %v2313 = vld [vmem:[%s7 + $0x9d8] sm:$0xff]
    %v2314 = vld [vmem:[%s7 + $0x9e0] sm:$0xff]
    %v2315 = vld [vmem:[%s7 + $0x9e8] sm:$0xff]
    %v2316 = vld [vmem:[%s7 + $0x9f0] sm:$0xff]
    %v2317 = vld [vmem:[%s7 + $0x9f8] sm:$0xff]
    %v2318 = vld [vmem:[%s7 + $0xa00] sm:$0xff]
    %v2319 = vld [vmem:[%s7 + $0xa08] sm:$0xff]
    %v2320 = vld [vmem:[%s7 + $0xa10] sm:$0xff]
    %v2321 = vld [vmem:[%s7 + $0xa18] sm:$0xff]
    %v2322 = vld [vmem:[%s7 + $0xa20] sm:$0xff]
    %v2323 = vld [vmem:[%s7 + $0xa28] sm:$0xff]
    %v2324 = vld [vmem:[%s7 + $0xa30] sm:$0xff]
    %v2325 = vld [vmem:[%s7 + $0xa38] sm:$0xff]
    %v2326 = vld [vmem:[%s7 + $0xa40] sm:$0xff]
    %v2327 = vld [vmem:[%s7 + $0xa48] sm:$0xff]
    %v2328 = vld [vmem:[%s7 + $0xa50] sm:$0xff]
    %v2329 = vld [vmem:[%s7 + $0xa58] sm:$0xff]
    %v2330 = vld [vmem:[%s7 + $0xa60] sm:$0xff]
    %v2331 = vld [vmem:[%s7 + $0xa68] sm:$0xff]
    %v2332 = vld [vmem:[%s7 + $0xa70] sm:$0xff]
    %v2333 = vld [vmem:[%s7 + $0xa78] sm:$0xff]
    %v2334 = vld [vmem:[%s7 + $0xa80] sm:$0xff]
    %v2335 = vld [vmem:[%s7 + $0xa88] sm:$0xff]
    %v2336 = vld [vmem:[%s7 + $0xa90] sm:$0xff]
    %v2337 = vld [vmem:[%s7 + $0xa98] sm:$0xff]
    %v2338 = vld [vmem:[%s7 + $0xaa0] sm:$0xff]
    %v2339 = vld [vmem:[%s7 + $0xaa8] sm:$0xff]
    %v2340 = vld [vmem:[%s7 + $0xab0] sm:$0xff]
    %v2341 = vld [vmem:[%s7 + $0xab8] sm:$0xff]
    %v2342 = vld [vmem:[%s7 + $0xac0] sm:$0xff]
    %v2343 = vld [vmem:[%s7 + $0xac8] sm:$0xff]
    %v2344 = vld [vmem:[%s7 + $0xad0] sm:$0xff]
    %v2345 = vld [vmem:[%s7 + $0xad8] sm:$0xff]
    %v2346 = vld [vmem:[%s7 + $0xae0] sm:$0xff]
    %v2347 = vld [vmem:[%s7 + $0xae8] sm:$0xff]
    %v2348 = vld [vmem:[%s7 + $0xaf0] sm:$0xff]
    %v2349 = vld [vmem:[%s7 + $0xaf8] sm:$0xff]
    %v2350 = vld [vmem:[%s7 + $0xb00] sm:$0xff]
    %v2351 = vld [vmem:[%s7 + $0xb08] sm:$0xff]
    %v2352 = vld [vmem:[%s7 + $0xb10] sm:$0xff]
    %v2353 = vld [vmem:[%s7 + $0xb18] sm:$0xff]
    %v2354 = vld [vmem:[%s7 + $0xb20] sm:$0xff]
    %v2355 = vld [vmem:[%s7 + $0xb28] sm:$0xff]
    %v2356 = vld [vmem:[%s7 + $0xb30] sm:$0xff]
    %v2357 = vld [vmem:[%s7 + $0xb38] sm:$0xff]
    %v2358 = vld [vmem:[%s7 + $0xb40] sm:$0xff]
    %v2359 = vld [vmem:[%s7 + $0xb48] sm:$0xff]
    %v2360 = vld [vmem:[%s7 + $0xb50] sm:$0xff]
    %v2361 = vld [vmem:[%s7 + $0xb58] sm:$0xff]
    %v2362 = vld [vmem:[%s7 + $0xb60] sm:$0xff]
    %v2363 = vld [vmem:[%s7 + $0xb68] sm:$0xff]
    %v2364 = vld [vmem:[%s7 + $0xb70] sm:$0xff]
    %v2365 = vld [vmem:[%s7 + $0xb78] sm:$0xff]
    %v2366 = vld [vmem:[%s7 + $0xb80] sm:$0xff]
    %v2367 = vld [vmem:[%s7 + $0xb88] sm:$0xff]
    %v2368 = vld [vmem:[%s7 + $0xb90] sm:$0xff]
    %v2369 = vld [vmem:[%s7 + $0xb98] sm:$0xff]
    %v2370 = vld [vmem:[%s7 + $0xba0] sm:$0xff]
    %v2371 = vld [vmem:[%s7 + $0xba8] sm:$0xff]
    %v2372 = vld [vmem:[%s7 + $0xbb0] sm:$0xff]
    %v2373 = vld [vmem:[%s7 + $0xbb8] sm:$0xff]
    %v2374 = vld [vmem:[%s7 + $0xbc0] sm:$0xff]
    %v2375 = vld [vmem:[%s7 + $0xbc8] sm:$0xff]
    %v2376 = vld [vmem:[%s7 + $0xbd0] sm:$0xff]
    %v2377 = vld [vmem:[%s7 + $0xbd8] sm:$0xff]
    %v2378 = vld [vmem:[%s7 + $0xbe0] sm:$0xff]
    %v2379 = vld [vmem:[%s7 + $0xbe8] sm:$0xff]
    %v2380 = vld [vmem:[%s7 + $0xbf0] sm:$0xff]
    %v2381 = vld [vmem:[%s7 + $0xbf8] sm:$0xff]
    %v2382 = vld [vmem:[%s7 + $0xc00] sm:$0xff]
    %v2383 = vld [vmem:[%s7 + $0xc08] sm:$0xff]
    %v2384 = vld [vmem:[%s7 + $0xc10] sm:$0xff]
    %v2385 = vld [vmem:[%s7 + $0xc18] sm:$0xff]
    %v2386 = vld [vmem:[%s7 + $0xc20] sm:$0xff]
    %v2387 = vld [vmem:[%s7 + $0xc28] sm:$0xff]
    %v2388 = vld [vmem:[%s7 + $0xc30] sm:$0xff]
    %v2389 = vld [vmem:[%s7 + $0xc38] sm:$0xff]
    %v2390 = vld [vmem:[%s7 + $0xc40] sm:$0xff]
    %v2391 = vld [vmem:[%s7 + $0xc48] sm:$0xff]
    %v2392 = vld [vmem:[%s7 + $0xc50] sm:$0xff]
    %v2393 = vld [vmem:[%s7 + $0xc58] sm:$0xff]
    %v2394 = vld [vmem:[%s7 + $0xc60] sm:$0xff]
    %v2395 = vld [vmem:[%s7 + $0xc68] sm:$0xff]
    %v2396 = vld [vmem:[%s7 + $0xc70] sm:$0xff]
    %v2397 = vld [vmem:[%s7 + $0xc78] sm:$0xff]
    %v2398 = vld [vmem:[%s7 + $0xc80] sm:$0xff]
    %v2399 = vld [vmem:[%s7 + $0xc88] sm:$0xff]
    %v2400 = vld [vmem:[%s7 + $0xc90] sm:$0xff]
    %v2401 = vld [vmem:[%s7 + $0xc98] sm:$0xff]
    %v2402 = vld [vmem:[%s7 + $0xca0] sm:$0xff]
    %v2403 = vld [vmem:[%s7 + $0xca8] sm:$0xff]
    %v2404 = vld [vmem:[%s7 + $0xcb0] sm:$0xff]
    %v2405 = vld [vmem:[%s7 + $0xcb8] sm:$0xff]
    %v2406 = vld [vmem:[%s7 + $0xcc0] sm:$0xff]
    %v2407 = vld [vmem:[%s7 + $0xcc8] sm:$0xff]
    %v2408 = vld [vmem:[%s7 + $0xcd0] sm:$0xff]
    %v2409 = vld [vmem:[%s7 + $0xcd8] sm:$0xff]
    %v2410 = vld [vmem:[%s7 + $0xce0] sm:$0xff]
    %v2411 = vld [vmem:[%s7 + $0xce8] sm:$0xff]
    %v2412 = vld [vmem:[%s7 + $0xcf0] sm:$0xff]
    %v2413 = vld [vmem:[%s7 + $0xcf8] sm:$0xff]
    %v2414 = vld [vmem:[%s7 + $0xd00] sm:$0xff]
    %v2415 = vld [vmem:[%s7 + $0xd08] sm:$0xff]
    %v2416 = vld [vmem:[%s7 + $0xd10] sm:$0xff]
    %v2417 = vld [vmem:[%s7 + $0xd18] sm:$0xff]
    %v2418 = vld [vmem:[%s7 + $0xd20] sm:$0xff]
    %v2419 = vld [vmem:[%s7 + $0xd28] sm:$0xff]
    %v2420 = vld [vmem:[%s7 + $0xd30] sm:$0xff]
    %v2421 = vld [vmem:[%s7 + $0xd38] sm:$0xff]
    %v2422 = vld [vmem:[%s7 + $0xd40] sm:$0xff]
    %v2423 = vld [vmem:[%s7 + $0xd48] sm:$0xff]
    %v2424 = vld [vmem:[%s7 + $0xd50] sm:$0xff]
    %v2425 = vld [vmem:[%s7 + $0xd58] sm:$0xff]
    %v2426 = vld [vmem:[%s7 + $0xd60] sm:$0xff]
    %v2427 = vld [vmem:[%s7 + $0xd68] sm:$0xff]
    %v2428 = vld [vmem:[%s7 + $0xd70] sm:$0xff]
    %v2429 = vld [vmem:[%s7 + $0xd78] sm:$0xff]
    %v2430 = vld [vmem:[%s7 + $0xd80] sm:$0xff]
    %v2431 = vld [vmem:[%s7 + $0xd88] sm:$0xff]
    %v2432 = vld [vmem:[%s7 + $0xd90] sm:$0xff]
    %v2433 = vld [vmem:[%s7 + $0xd98] sm:$0xff]
    %v2434 = vld [vmem:[%s7 + $0xda0] sm:$0xff]
    %v2435 = vld [vmem:[%s7 + $0xda8] sm:$0xff]
    %v2436 = vld [vmem:[%s7 + $0xdb0] sm:$0xff]
    %v2437 = vld [vmem:[%s7 + $0xdb8] sm:$0xff]
    %v2438 = vld [vmem:[%s7 + $0xdc0] sm:$0xff]
    %v2439 = vld [vmem:[%s7 + $0xdc8] sm:$0xff]
    %v2440 = vld [vmem:[%s7 + $0xdd0] sm:$0xff]
    %v2441 = vld [vmem:[%s7 + $0xdd8] sm:$0xff]
    %v2442 = vld [vmem:[%s7 + $0xde0] sm:$0xff]
    %v2443 = vld [vmem:[%s7 + $0xde8] sm:$0xff]
    %v2444 = vld [vmem:[%s7 + $0xdf0] sm:$0xff]
    %v2445 = vld [vmem:[%s7 + $0xdf8] sm:$0xff]
    %v2446 = vld [vmem:[%s7 + $0xe00] sm:$0xff]
    %v2447 = vld [vmem:[%s7 + $0xe08] sm:$0xff]
    %v2448 = vld [vmem:[%s7 + $0xe10] sm:$0xff]
    %v2449 = vld [vmem:[%s7 + $0xe18] sm:$0xff]
    %v2450 = vld [vmem:[%s7 + $0xe20] sm:$0xff]
    %v2451 = vld [vmem:[%s7 + $0xe28] sm:$0xff]
    %v2452 = vld [vmem:[%s7 + $0xe30] sm:$0xff]
    %v2453 = vld [vmem:[%s7 + $0xe38] sm:$0xff]
    %v2454 = vld [vmem:[%s7 + $0xe40] sm:$0xff]
    %v2455 = vld [vmem:[%s7 + $0xe48] sm:$0xff]
    %v2456 = vld [vmem:[%s7 + $0xe50] sm:$0xff]
    %v2457 = vld [vmem:[%s7 + $0xe58] sm:$0xff]
    %v2458 = vld [vmem:[%s7 + $0xe60] sm:$0xff]
    %v2459 = vld [vmem:[%s7 + $0xe68] sm:$0xff]
    %v2460 = vld [vmem:[%s7 + $0xe70] sm:$0xff]
    %v2461 = vld [vmem:[%s7 + $0xe78] sm:$0xff]
    %v2462 = vld [vmem:[%s7 + $0xe80] sm:$0xff]
    %v2463 = vld [vmem:[%s7 + $0xe88] sm:$0xff]
    %v2464 = vld [vmem:[%s7 + $0xe90] sm:$0xff]
    %v2465 = vld [vmem:[%s7 + $0xe98] sm:$0xff]
    %v2466 = vld [vmem:[%s7 + $0xea0] sm:$0xff]
    %v2467 = vld [vmem:[%s7 + $0xea8] sm:$0xff]
    %v2468 = vld [vmem:[%s7 + $0xeb0] sm:$0xff]
    %v2469 = vld [vmem:[%s7 + $0xeb8] sm:$0xff]
    %v2470 = vld [vmem:[%s7 + $0xec0] sm:$0xff]
    %v2471 = vld [vmem:[%s7 + $0xec8] sm:$0xff]
    %v2472 = vld [vmem:[%s7 + $0xed0] sm:$0xff]
    %v2473 = vld [vmem:[%s7 + $0xed8] sm:$0xff]
    %v2474 = vld [vmem:[%s7 + $0xee0] sm:$0xff]
    %v2475 = vld [vmem:[%s7 + $0xee8] sm:$0xff]
    %v2476 = vld [vmem:[%s7 + $0xef0] sm:$0xff]
    %v2477 = vld [vmem:[%s7 + $0xef8] sm:$0xff]
    %v2478 = vld [vmem:[%s7 + $0xf00] sm:$0xff]
    %v2479 = vld [vmem:[%s7 + $0xf08] sm:$0xff]
    %v2480 = vld [vmem:[%s7 + $0xf10] sm:$0xff]
    %v2481 = vld [vmem:[%s7 + $0xf18] sm:$0xff]
    %v2482 = vld [vmem:[%s7 + $0xf20] sm:$0xff]
    %v2483 = vld [vmem:[%s7 + $0xf28] sm:$0xff]
    %v2484 = vld [vmem:[%s7 + $0xf30] sm:$0xff]
    %v2485 = vld [vmem:[%s7 + $0xf38] sm:$0xff]
    %v2486 = vld [vmem:[%s7 + $0xf40] sm:$0xff]
    %v2487 = vld [vmem:[%s7 + $0xf48] sm:$0xff]
    %v2488 = vld [vmem:[%s7 + $0xf50] sm:$0xff]
    %v2489 = vld [vmem:[%s7 + $0xf58] sm:$0xff]
    %v2490 = vld [vmem:[%s7 + $0xf60] sm:$0xff]
    %v2491 = vld [vmem:[%s7 + $0xf68] sm:$0xff]
    %v2492 = vld [vmem:[%s7 + $0xf70] sm:$0xff]
    %v2493 = vld [vmem:[%s7 + $0xf78] sm:$0xff]
    %v2494 = vld [vmem:[%s7 + $0xf80] sm:$0xff]
    %v2495 = vld [vmem:[%s7 + $0xf88] sm:$0xff]
    %v2496 = vld [vmem:[%s7 + $0xf90] sm:$0xff]
    %v2497 = vld [vmem:[%s7 + $0xf98] sm:$0xff]
    %v2498 = vld [vmem:[%s7 + $0xfa0] sm:$0xff]
    %v2499 = vld [vmem:[%s7 + $0xfa8] sm:$0xff]
    %v2500 = vld [vmem:[%s7 + $0xfb0] sm:$0xff]
    %v2501 = vld [vmem:[%s7 + $0xfb8] sm:$0xff]
    %v2502 = vld [vmem:[%s7 + $0xfc0] sm:$0xff]
    %v2503 = vld [vmem:[%s7 + $0xfc8] sm:$0xff]
    %v2504 = vld [vmem:[%s7 + $0xfd0] sm:$0xff]
    %v2505 = vld [vmem:[%s7 + $0xfd8] sm:$0xff]
    %v2506 = vld [vmem:[%s7 + $0xfe0] sm:$0xff]
    %v2507 = vld [vmem:[%s7 + $0xfe8] sm:$0xff]
    %v2508 = vld [vmem:[%s7 + $0xff0] sm:$0xff]
    %v2509 = vld [vmem:[%s7 + $0xff8] sm:$0xff]
    %v2510 = vld [vmem:[%s7 + $0x1000] sm:$0xff]
    %v2511 = vld [vmem:[%s7 + $0x1008] sm:$0xff]
    %v2512 = vld [vmem:[%s7 + $0x1010] sm:$0xff]
    %v2513 = vld [vmem:[%s7 + $0x1018] sm:$0xff]
    %v2514 = vld [vmem:[%s7 + $0x1020] sm:$0xff]
    %v2515 = vld [vmem:[%s7 + $0x1028] sm:$0xff]
    %v2516 = vld [vmem:[%s7 + $0x1030] sm:$0xff]
    %v2517 = vld [vmem:[%s7 + $0x1038] sm:$0xff]
    %v2518 = vld [vmem:[%s7 + $0x1040] sm:$0xff]
    %v2519 = vld [vmem:[%s7 + $0x1048] sm:$0xff]
    %v2520 = vld [vmem:[%s7 + $0x1050] sm:$0xff]
    %v2521 = vld [vmem:[%s7 + $0x1058] sm:$0xff]
    %v2522 = vld [vmem:[%s7 + $0x1060] sm:$0xff]
    %v2523 = vld [vmem:[%s7 + $0x1068] sm:$0xff]
    %v2524 = vld [vmem:[%s7 + $0x1070] sm:$0xff]
    %v2525 = vld [vmem:[%s7 + $0x1078] sm:$0xff]
    %v2526 = vld [vmem:[%s7 + $0x1080] sm:$0xff]
    %v2527 = vld [vmem:[%s7 + $0x1088] sm:$0xff]
    %v2528 = vld [vmem:[%s7 + $0x1090] sm:$0xff]
    %v2529 = vld [vmem:[%s7 + $0x1098] sm:$0xff]
    %v2530 = vld [vmem:[%s7 + $0x10a0] sm:$0xff]
    %v2531 = vld [vmem:[%s7 + $0x10a8] sm:$0xff]
    %v2532 = vld [vmem:[%s7 + $0x10b0] sm:$0xff]
    %v2533 = vld [vmem:[%s7 + $0x10b8] sm:$0xff]
    %v2534 = vld [vmem:[%s7 + $0x10c0] sm:$0xff]
    %v2535 = vld [vmem:[%s7 + $0x10c8] sm:$0xff]
    %v2536 = vld [vmem:[%s7 + $0x10d0] sm:$0xff]
    %v2537 = vld [vmem:[%s7 + $0x10d8] sm:$0xff]
    %v2538 = vld [vmem:[%s7 + $0x10e0] sm:$0xff]
    %v2539 = vld [vmem:[%s7 + $0x10e8] sm:$0xff]
    %v2540 = vld [vmem:[%s7 + $0x10f0] sm:$0xff]
    %v2541 = vld [vmem:[%s7 + $0x10f8] sm:$0xff]
    %v2542 = vld [vmem:[%s7 + $0x1100] sm:$0xff]
    %v2543 = vld [vmem:[%s7 + $0x1108] sm:$0xff]
    %v2544 = vld [vmem:[%s7 + $0x1110] sm:$0xff]
    %v2545 = vld [vmem:[%s7 + $0x1118] sm:$0xff]
    %v2546 = vld [vmem:[%s7 + $0x1120] sm:$0xff]
    %v2547 = vld [vmem:[%s7 + $0x1128] sm:$0xff]
    %v2548 = vld [vmem:[%s7 + $0x1130] sm:$0xff]
    %v2549 = vld [vmem:[%s7 + $0x1138] sm:$0xff]
    %v2550 = vld [vmem:[%s7 + $0x1140] sm:$0xff]
    %v2551 = vld [vmem:[%s7 + $0x1148] sm:$0xff]
    %v2552 = vld [vmem:[%s7 + $0x1150] sm:$0xff]
    %v2553 = vld [vmem:[%s7 + $0x1158] sm:$0xff]
    %v2554 = vld [vmem:[%s7 + $0x1160] sm:$0xff]
    %v2555 = vld [vmem:[%s7 + $0x1168] sm:$0xff]
    %v2556 = vld [vmem:[%s7 + $0x1170] sm:$0xff]
    %v2557 = vld [vmem:[%s7 + $0x1178] sm:$0xff]
    %v2558 = vld [vmem:[%s7 + $0x1180] sm:$0xff]
    %v2559 = vld [vmem:[%s7 + $0x1188] sm:$0xff]
    %v2560 = vld [vmem:[%s7 + $0x1190] sm:$0xff]
    %v2561 = vld [vmem:[%s7 + $0x1198] sm:$0xff]
    %v2562 = vld [vmem:[%s7 + $0x11a0] sm:$0xff]
    %v2563 = vld [vmem:[%s7 + $0x11a8] sm:$0xff]
    %v2564 = vld [vmem:[%s7 + $0x11b0] sm:$0xff]
    %v2565 = vld [vmem:[%s7 + $0x11b8] sm:$0xff]
    %v2566 = vld [vmem:[%s7 + $0x11c0] sm:$0xff]
    %v2567 = vld [vmem:[%s7 + $0x11c8] sm:$0xff]
    %v2568 = vld [vmem:[%s7 + $0x11d0] sm:$0xff]
    %v2569 = vld [vmem:[%s7 + $0x11d8] sm:$0xff]
    %v2570 = vld [vmem:[%s7 + $0x11e0] sm:$0xff]
    %v2571 = vld [vmem:[%s7 + $0x11e8] sm:$0xff]
    %v2572 = vld [vmem:[%s7 + $0x11f0] sm:$0xff]
    %v2573 = vld [vmem:[%s7 + $0x11f8] sm:$0xff]
    %v2574 = vld [vmem:[%s8] sm:$0x7]
    %v2576 = vlaneseq
    %v2577 = vshrl.u32 %v2576, 7
    %v2578 = vsub.s32 0, %v2577
    %v2579 = vrot.slane %v2574, %v2578
    %v2580 = vlaneseq
    %v2581 = vshrl.u32 %v2580, 7
    %v2582 = vsub.s32 1, %v2581
    %v2583 = vrot.slane %v2574, %v2582
    %v2584 = vlaneseq
    %v2585 = vshrl.u32 %v2584, 7
    %v2586 = vsub.s32 2, %v2585
    %v2587 = vrot.slane %v2574, %v2586
    %2591 = vmatprep.subr.mxu0 %v1999
    %2592 = vmatpush1.msra.mxu0 %v1998
    %2593 = vmatprep.subr.mxu0 %v2002
    %2594 = vmatpush1.msra.mxu0 %v2001
    %2595 = vmatprep.subr.mxu0 %v2005
    %2596 = vmatpush1.msra.mxu0 %v2004
    %2597 = vmatprep.subr.mxu0 %v2008
    %2598 = vmatpush1.msra.mxu0 %v2007
    %2599 = vmatprep.subr.mxu0 %v2011
    %2600 = vmatpush1.msra.mxu0 %v2010
    %2601 = vmatprep.subr.mxu0 %v2014
    %2602 = vmatpush1.msra.mxu0 %v2013
    %2603 = vmatprep.subr.mxu0 %v2017
    %2604 = vmatpush1.msra.mxu0 %v2016
    %2605 = vmatprep.subr.mxu0 %v2020
    %2606 = vmatpush1.msra.mxu0 %v2019
    %2607 = vmatprep.subr.mxu0 %v2023
    %2608 = vmatpush1.msra.mxu0 %v2022
    %2609 = vmatprep.subr.mxu0 %v2026
    %2610 = vmatpush1.msra.mxu0 %v2025
    %2611 = vmatprep.subr.mxu0 %v2029
    %2612 = vmatpush1.msra.mxu0 %v2028
    %2613 = vmatprep.subr.mxu0 %v2032
    %2614 = vmatpush1.msra.mxu0 %v2031
    %2615 = vmatprep.subr.mxu0 %v2035
    %2616 = vmatpush1.msra.mxu0 %v2034
    %2617 = vmatprep.subr.mxu0 %v2038
    %2618 = vmatpush1.msra.mxu0 %v2037
    %2619 = vmatprep.subr.mxu0 %v2041
    %2620 = vmatpush1.msra.mxu0 %v2040
    %2621 = vmatprep.subr.mxu0 %v2044
    %2622 = vmatpush1.msra.mxu0 %v2043
    %2623 = vmatprep.subr.mxu0 %v2047
    %2624 = vmatpush1.msra.mxu0 %v2046
    %2625 = vmatprep.subr.mxu0 %v2050
    %2626 = vmatpush1.msra.mxu0 %v2049
    %2627 = vmatprep.subr.mxu0 %v2053
    %2628 = vmatpush1.msra.mxu0 %v2052
    %2629 = vmatprep.subr.mxu0 %v2056
    %2630 = vmatpush1.msra.mxu0 %v2055
    %2631 = vmatprep.subr.mxu0 %v2059
    %2632 = vmatpush1.msra.mxu0 %v2058
    %2633 = vmatprep.subr.mxu0 %v2062
    %2634 = vmatpush1.msra.mxu0 %v2061
    %2635 = vmatprep.subr.mxu0 %v2065
    %2636 = vmatpush1.msra.mxu0 %v2064
    %2637 = vmatprep.subr.mxu0 %v2068
    %2638 = vmatpush1.msra.mxu0 %v2067
    %2639 = vmatprep.subr.mxu0 %v2071
    %2640 = vmatpush1.msra.mxu0 %v2070
    %2641 = vmatprep.subr.mxu0 %v2074
    %2642 = vmatpush1.msra.mxu0 %v2073
    %2643 = vmatprep.subr.mxu0 %v2077
    %2644 = vmatpush1.msra.mxu0 %v2076
    %2645 = vmatprep.subr.mxu0 %v2080
    %2646 = vmatpush1.msra.mxu0 %v2079
    %2647 = vmatprep.subr.mxu0 %v2083
    %2648 = vmatpush1.msra.mxu0 %v2082
    %2649 = vmatprep.subr.mxu0 %v2086
    %2650 = vmatpush1.msra.mxu0 %v2085
    %2651 = vmatprep.subr.mxu0 %v2089
    %2652 = vmatpush1.msra.mxu0 %v2088
    %2653 = vmatprep.subr.mxu0 %v2092
    %2654 = vmatpush1.msra.mxu0 %v2091
    %2655 = vmatprep.mubr.f32.mxu0 %v1819
    %2656 = vmatmul.mubr.f32.gmra.mrb[0].mxu0 %v1818
    %v2657 = vpop.f32.mrb[0].mxu0
    %v2658 = vadd.f32 %v2579, %v2657
    %v2659 = vpop.f32.mrb[0].mxu0
    %v2660 = vadd.f32 %v2583, %v2659
    %2661 = vmatprep.mubr.f32.mxu0 %v1987
    %2662 = vmatmul.mubr.f32.gmra.mrb[0].mxu0 %v1986
    %v2663 = vpop.f32.mrb[0].mxu0
    %v2664 = vadd.f32 %v2579, %v2663
    %v2665 = vpop.f32.mrb[0].mxu0
    %v2666 = vadd.f32 %v2583, %v2665
    %2667 = vmatprep.mubr.f32.mxu0 %v1941
    %2668 = vmatmul.mubr.f32.gmra.mrb[0].mxu0 %v1939
    %v2669 = vpop.f32.mrb[0].mxu0
    %v2670 = vadd.f32 %v2579, %v2669
    %v2671 = vpop.f32.mrb[0].mxu0
    %v2672 = vadd.f32 %v2583, %v2671
    %2673 = vdwg.mxu0
    %2674 = vmatprep.subr.mxu0 %v2095
    %2675 = vmatpush1.msra.mxu0 %v2094
    %2676 = vmatprep.subr.mxu0 %v2098
    %2677 = vmatpush1.msra.mxu0 %v2097
    %2678 = vmatprep.subr.mxu0 %v2101
    %2679 = vmatpush1.msra.mxu0 %v2100
    %2680 = vmatprep.subr.mxu0 %v2104
    %2681 = vmatpush1.msra.mxu0 %v2103
    %2682 = vmatprep.subr.mxu0 %v2107
    %2683 = vmatpush1.msra.mxu0 %v2106
    %2684 = vmatprep.subr.mxu0 %v2110
    %2685 = vmatpush1.msra.mxu0 %v2109
    %2686 = vmatprep.subr.mxu0 %v2113
    %2687 = vmatpush1.msra.mxu0 %v2112
    %2688 = vmatprep.subr.mxu0 %v2116
    %2689 = vmatpush1.msra.mxu0 %v2115
    %2690 = vmatprep.subr.mxu0 %v2119
    %2691 = vmatpush1.msra.mxu0 %v2118
    %2692 = vmatprep.subr.mxu0 %v2122
    %2693 = vmatpush1.msra.mxu0 %v2121
    %2694 = vmatprep.subr.mxu0 %v2125
    %2695 = vmatpush1.msra.mxu0 %v2124
    %2696 = vmatprep.subr.mxu0 %v2128
    %2697 = vmatpush1.msra.mxu0 %v2127
    %2698 = vmatprep.subr.mxu0 %v2131
    %2699 = vmatpush1.msra.mxu0 %v2130
    %2700 = vmatprep.subr.mxu0 %v2134
    %2701 = vmatpush1.msra.mxu0 %v2133
    %2702 = vmatprep.subr.mxu0 %v2137
    %2703 = vmatpush1.msra.mxu0 %v2136
    %2704 = vmatprep.subr.mxu0 %v2140
    %2705 = vmatpush1.msra.mxu0 %v2139
    %2706 = vmatprep.subr.mxu0 %v2143
    %2707 = vmatpush1.msra.mxu0 %v2142
    %2708 = vmatprep.subr.mxu0 %v2146
    %2709 = vmatpush1.msra.mxu0 %v2145
    %2710 = vmatprep.subr.mxu0 %v2149
    %2711 = vmatpush1.msra.mxu0 %v2148
    %2712 = vmatprep.subr.mxu0 %v2152
    %2713 = vmatpush1.msra.mxu0 %v2151
    %2714 = vmatprep.subr.mxu0 %v2155
    %2715 = vmatpush1.msra.mxu0 %v2154
    %2716 = vmatprep.subr.mxu0 %v2158
    %2717 = vmatpush1.msra.mxu0 %v2157
    %2718 = vmatprep.subr.mxu0 %v2161
    %2719 = vmatpush1.msra.mxu0 %v2160
    %2720 = vmatprep.subr.mxu0 %v2164
    %2721 = vmatpush1.msra.mxu0 %v2163
    %2722 = vmatprep.subr.mxu0 %v2167
    %2723 = vmatpush1.msra.mxu0 %v2166
    %2724 = vmatprep.subr.mxu0 %v2170
    %2725 = vmatpush1.msra.mxu0 %v2169
    %2726 = vmatprep.subr.mxu0 %v2173
    %2727 = vmatpush1.msra.mxu0 %v2172
    %2728 = vmatprep.subr.mxu0 %v2176
    %2729 = vmatpush1.msra.mxu0 %v2175
    %2730 = vmatprep.subr.mxu0 %v2179
    %2731 = vmatpush1.msra.mxu0 %v2178
    %2732 = vmatprep.subr.mxu0 %v2182
    %2733 = vmatpush1.msra.mxu0 %v2181
    %2734 = vmatprep.subr.mxu0 %v2185
    %2735 = vmatpush1.msra.mxu0 %v2184
    %2736 = vmatprep.subr.mxu0 %v2188
    %2737 = vmatpush1.msra.mxu0 %v2187
    %2738 = vmatprep.mubr.f32.mxu0 %v1821
    %2739 = vmatmul.mubr.f32.gmra.mrb[0].mxu0 %v1820
    %v2740 = vpop.f32.mrb[0].mxu0
    %v2741 = vadd.f32 %v2658, %v2740
    %v2742 = vpop.f32.mrb[0].mxu0
    %v2743 = vadd.f32 %v2660, %v2742
    %2744 = vmatprep.mubr.f32.mxu0 %v1989
    %2745 = vmatmul.mubr.f32.gmra.mrb[0].mxu0 %v1988
    %v2746 = vpop.f32.mrb[0].mxu0
    %v2747 = vadd.f32 %v2664, %v2746
    %v2748 = vpop.f32.mrb[0].mxu0
    %v2749 = vadd.f32 %v2666, %v2748
    %2750 = vmatprep.mubr.f32.mxu0 %v1945
    %2751 = vmatmul.mubr.f32.gmra.mrb[0].mxu0 %v1943
    %v2752 = vpop.f32.mrb[0].mxu0
    %v2753 = vadd.f32 %v2670, %v2752
    %v2754 = vpop.f32.mrb[0].mxu0
    %v2755 = vadd.f32 %v2672, %v2754
    %2756 = vdwg.mxu0
    %2757 = vmatprep.subr.mxu0 %v2191
    %2758 = vmatpush1.msra.mxu0 %v2190
    %2759 = vmatprep.subr.mxu0 %v2194
    %2760 = vmatpush1.msra.mxu0 %v2193
    %2761 = vmatprep.subr.mxu0 %v2197
    %2762 = vmatpush1.msra.mxu0 %v2196
    %2763 = vmatprep.subr.mxu0 %v2200
    %2764 = vmatpush1.msra.mxu0 %v2199
    %2765 = vmatprep.subr.mxu0 %v2203
    %2766 = vmatpush1.msra.mxu0 %v2202
    %2767 = vmatprep.subr.mxu0 %v2206
    %2768 = vmatpush1.msra.mxu0 %v2205
    %2769 = vmatprep.subr.mxu0 %v2209
    %2770 = vmatpush1.msra.mxu0 %v2208
    %2771 = vmatprep.subr.mxu0 %v2212
    %2772 = vmatpush1.msra.mxu0 %v2211
    %2773 = vmatprep.subr.mxu0 %v2215
    %2774 = vmatpush1.msra.mxu0 %v2214
    %2775 = vmatprep.subr.mxu0 %v2218
    %2776 = vmatpush1.msra.mxu0 %v2217
    %2777 = vmatprep.subr.mxu0 %v2221
    %2778 = vmatpush1.msra.mxu0 %v2220
    %2779 = vmatprep.subr.mxu0 %v2224
    %2780 = vmatpush1.msra.mxu0 %v2223
    %2781 = vmatprep.subr.mxu0 %v2227
    %2782 = vmatpush1.msra.mxu0 %v2226
    %2783 = vmatprep.subr.mxu0 %v2230
    %2784 = vmatpush1.msra.mxu0 %v2229
    %2785 = vmatprep.subr.mxu0 %v2233
    %2786 = vmatpush1.msra.mxu0 %v2232
    %2787 = vmatprep.subr.mxu0 %v2236
    %2788 = vmatpush1.msra.mxu0 %v2235
    %2789 = vmatprep.subr.mxu0 %v2239
    %2790 = vmatpush1.msra.mxu0 %v2238
    %2791 = vmatprep.subr.mxu0 %v2242
    %2792 = vmatpush1.msra.mxu0 %v2241
    %2793 = vmatprep.subr.mxu0 %v2245
    %2794 = vmatpush1.msra.mxu0 %v2244
    %2795 = vmatprep.subr.mxu0 %v2248
    %2796 = vmatpush1.msra.mxu0 %v2247
    %2797 = vmatprep.subr.mxu0 %v2251
    %2798 = vmatpush1.msra.mxu0 %v2250
    %2799 = vmatprep.subr.mxu0 %v2254
    %2800 = vmatpush1.msra.mxu0 %v2253
    %2801 = vmatprep.subr.mxu0 %v2257
    %2802 = vmatpush1.msra.mxu0 %v2256
    %2803 = vmatprep.subr.mxu0 %v2260
    %2804 = vmatpush1.msra.mxu0 %v2259
    %2805 = vmatprep.subr.mxu0 %v2263
    %2806 = vmatpush1.msra.mxu0 %v2262
    %2807 = vmatprep.subr.mxu0 %v2266
    %2808 = vmatpush1.msra.mxu0 %v2265
    %2809 = vmatprep.subr.mxu0 %v2269
    %2810 = vmatpush1.msra.mxu0 %v2268
    %2811 = vmatprep.subr.mxu0 %v2272
    %2812 = vmatpush1.msra.mxu0 %v2271
    %2813 = vmatprep.subr.mxu0 %v2275
    %2814 = vmatpush1.msra.mxu0 %v2274
    %2815 = vmatprep.subr.mxu0 %v2278
    %2816 = vmatpush1.msra.mxu0 %v2277
    %2817 = vmatprep.subr.mxu0 %v2281
    %2818 = vmatpush1.msra.mxu0 %v2280
    %2819 = vmatprep.subr.mxu0 %v2284
    %2820 = vmatpush1.msra.mxu0 %v2283
    %2821 = vmatprep.mubr.f32.mxu0 %v1859
    %2822 = vmatmul.mubr.f32.gmra.mrb[0].mxu0 %v1856
    %v2823 = vpop.f32.mrb[0].mxu0
    %v2824 = vadd.f32 %v2741, %v2823
    %v2825 = vpop.f32.mrb[0].mxu0
    %v2826 = vadd.f32 %v2743, %v2825
    %2827 = vmatprep.mubr.f32.mxu0 %v1991
    %2828 = vmatmul.mubr.f32.gmra.mrb[0].mxu0 %v1990
    %v2829 = vpop.f32.mrb[0].mxu0
    %v2830 = vadd.f32 %v2747, %v2829
    %v2831 = vpop.f32.mrb[0].mxu0
    %v2832 = vadd.f32 %v2749, %v2831
    %2833 = vmatprep.mubr.f32.mxu0 %v1949
    %2834 = vmatmul.mubr.f32.gmra.mrb[0].mxu0 %v1947
    %v2835 = vpop.f32.mrb[0].mxu0
    %v2836 = vadd.f32 %v2753, %v2835
    %v2837 = vpop.f32.mrb[0].mxu0
    %v2838 = vadd.f32 %v2755, %v2837
    %2839 = vdwg.mxu0
    %2840 = vmatprep.subr.mxu0 %v2287
    %2841 = vmatpush1.msra.mxu0 %v2286
    %2842 = vmatprep.subr.mxu0 %v2290
    %2843 = vmatpush1.msra.mxu0 %v2289
    %2844 = vmatprep.subr.mxu0 %v2293
    %2845 = vmatpush1.msra.mxu0 %v2292
    %2846 = vmatprep.subr.mxu0 %v2296
    %2847 = vmatpush1.msra.mxu0 %v2295
    %2848 = vmatprep.subr.mxu0 %v2299
    %2849 = vmatpush1.msra.mxu0 %v2298
    %2850 = vmatprep.subr.mxu0 %v2302
    %2851 = vmatpush1.msra.mxu0 %v2301
    %2852 = vmatprep.subr.mxu0 %v2305
    %2853 = vmatpush1.msra.mxu0 %v2304
    %2854 = vmatprep.subr.mxu0 %v2308
    %2855 = vmatpush1.msra.mxu0 %v2307
    %2856 = vmatprep.subr.mxu0 %v2311
    %2857 = vmatpush1.msra.mxu0 %v2310
    %2858 = vmatprep.subr.mxu0 %v2314
    %2859 = vmatpush1.msra.mxu0 %v2313
    %2860 = vmatprep.subr.mxu0 %v2317
    %2861 = vmatpush1.msra.mxu0 %v2316
    %2862 = vmatprep.subr.mxu0 %v2320
    %2863 = vmatpush1.msra.mxu0 %v2319
    %2864 = vmatprep.subr.mxu0 %v2323
    %2865 = vmatpush1.msra.mxu0 %v2322
    %2866 = vmatprep.subr.mxu0 %v2326
    %2867 = vmatpush1.msra.mxu0 %v2325
    %2868 = vmatprep.subr.mxu0 %v2329
    %2869 = vmatpush1.msra.mxu0 %v2328
    %2870 = vmatprep.subr.mxu0 %v2332
    %2871 = vmatpush1.msra.mxu0 %v2331
    %2872 = vmatprep.subr.mxu0 %v2335
    %2873 = vmatpush1.msra.mxu0 %v2334
    %2874 = vmatprep.subr.mxu0 %v2338
    %2875 = vmatpush1.msra.mxu0 %v2337
    %2876 = vmatprep.subr.mxu0 %v2341
    %2877 = vmatpush1.msra.mxu0 %v2340
    %2878 = vmatprep.subr.mxu0 %v2344
    %2879 = vmatpush1.msra.mxu0 %v2343
    %2880 = vmatprep.subr.mxu0 %v2347
    %2881 = vmatpush1.msra.mxu0 %v2346
    %2882 = vmatprep.subr.mxu0 %v2350
    %2883 = vmatpush1.msra.mxu0 %v2349
    %2884 = vmatprep.subr.mxu0 %v2353
    %2885 = vmatpush1.msra.mxu0 %v2352
    %2886 = vmatprep.subr.mxu0 %v2356
    %2887 = vmatpush1.msra.mxu0 %v2355
    %2888 = vmatprep.subr.mxu0 %v2359
    %2889 = vmatpush1.msra.mxu0 %v2358
    %2890 = vmatprep.subr.mxu0 %v2362
    %2891 = vmatpush1.msra.mxu0 %v2361
    %2892 = vmatprep.subr.mxu0 %v2365
    %2893 = vmatpush1.msra.mxu0 %v2364
    %2894 = vmatprep.subr.mxu0 %v2368
    %2895 = vmatpush1.msra.mxu0 %v2367
    %2896 = vmatprep.subr.mxu0 %v2371
    %2897 = vmatpush1.msra.mxu0 %v2370
    %2898 = vmatprep.subr.mxu0 %v2374
    %2899 = vmatpush1.msra.mxu0 %v2373
    %2900 = vmatprep.subr.mxu0 %v2377
    %2901 = vmatpush1.msra.mxu0 %v2376
    %2902 = vmatprep.subr.mxu0 %v2380
    %2903 = vmatpush1.msra.mxu0 %v2379
    %2904 = vmatprep.mubr.f32.mxu0 %v1865
    %2905 = vmatmul.mubr.f32.gmra.mrb[0].mxu0 %v1862
    %v2906 = vpop.f32.mrb[0].mxu0
    %v2907 = vadd.f32 %v2824, %v2906
    %v2908 = vpop.f32.mrb[0].mxu0
    %v2909 = vadd.f32 %v2826, %v2908
    %2910 = vmatprep.mubr.f32.mxu0 %v1993
    %2911 = vmatmul.mubr.f32.gmra.mrb[0].mxu0 %v1992
    %v2912 = vpop.f32.mrb[0].mxu0
    %v2913 = vadd.f32 %v2830, %v2912
    %v2914 = vpop.f32.mrb[0].mxu0
    %v2915 = vadd.f32 %v2832, %v2914
    %2916 = vmatprep.mubr.f32.mxu0 %v1953
    %2917 = vmatmul.mubr.f32.gmra.mrb[0].mxu0 %v1951
    %v2918 = vpop.f32.mrb[0].mxu0
    %v2919 = vadd.f32 %v2836, %v2918
    %v2920 = vpop.f32.mrb[0].mxu0
    %v2921 = vadd.f32 %v2838, %v2920
    %2922 = vdwg.mxu0
    %2923 = vmatprep.subr.mxu0 %v2383
    %2924 = vmatpush1.msra.mxu0 %v2382
    %2925 = vmatprep.subr.mxu0 %v2386
    %2926 = vmatpush1.msra.mxu0 %v2385
    %2927 = vmatprep.subr.mxu0 %v2389
    %2928 = vmatpush1.msra.mxu0 %v2388
    %2929 = vmatprep.subr.mxu0 %v2392
    %2930 = vmatpush1.msra.mxu0 %v2391
    %2931 = vmatprep.subr.mxu0 %v2395
    %2932 = vmatpush1.msra.mxu0 %v2394
    %2933 = vmatprep.subr.mxu0 %v2398
    %2934 = vmatpush1.msra.mxu0 %v2397
    %2935 = vmatprep.subr.mxu0 %v2401
    %2936 = vmatpush1.msra.mxu0 %v2400
    %2937 = vmatprep.subr.mxu0 %v2404
    %2938 = vmatpush1.msra.mxu0 %v2403
    %2939 = vmatprep.subr.mxu0 %v2407
    %2940 = vmatpush1.msra.mxu0 %v2406
    %2941 = vmatprep.subr.mxu0 %v2410
    %2942 = vmatpush1.msra.mxu0 %v2409
    %2943 = vmatprep.subr.mxu0 %v2413
    %2944 = vmatpush1.msra.mxu0 %v2412
    %2945 = vmatprep.subr.mxu0 %v2416
    %2946 = vmatpush1.msra.mxu0 %v2415
    %2947 = vmatprep.subr.mxu0 %v2419
    %2948 = vmatpush1.msra.mxu0 %v2418
    %2949 = vmatprep.subr.mxu0 %v2422
    %2950 = vmatpush1.msra.mxu0 %v2421
    %2951 = vmatprep.subr.mxu0 %v2425
    %2952 = vmatpush1.msra.mxu0 %v2424
    %2953 = vmatprep.subr.mxu0 %v2428
    %2954 = vmatpush1.msra.mxu0 %v2427
    %2955 = vmatprep.subr.mxu0 %v2431
    %2956 = vmatpush1.msra.mxu0 %v2430
    %2957 = vmatprep.subr.mxu0 %v2434
    %2958 = vmatpush1.msra.mxu0 %v2433
    %2959 = vmatprep.subr.mxu0 %v2437
    %2960 = vmatpush1.msra.mxu0 %v2436
    %2961 = vmatprep.subr.mxu0 %v2440
    %2962 = vmatpush1.msra.mxu0 %v2439
    %2963 = vmatprep.subr.mxu0 %v2443
    %2964 = vmatpush1.msra.mxu0 %v2442
    %2965 = vmatprep.subr.mxu0 %v2446
    %2966 = vmatpush1.msra.mxu0 %v2445
    %2967 = vmatprep.subr.mxu0 %v2449
    %2968 = vmatpush1.msra.mxu0 %v2448
    %2969 = vmatprep.subr.mxu0 %v2452
    %2970 = vmatpush1.msra.mxu0 %v2451
    %2971 = vmatprep.subr.mxu0 %v2455
    %2972 = vmatpush1.msra.mxu0 %v2454
    %2973 = vmatprep.subr.mxu0 %v2458
    %2974 = vmatpush1.msra.mxu0 %v2457
    %2975 = vmatprep.subr.mxu0 %v2461
    %2976 = vmatpush1.msra.mxu0 %v2460
    %2977 = vmatprep.subr.mxu0 %v2464
    %2978 = vmatpush1.msra.mxu0 %v2463
    %2979 = vmatprep.subr.mxu0 %v2467
    %2980 = vmatpush1.msra.mxu0 %v2466
    %2981 = vmatprep.subr.mxu0 %v2470
    %2982 = vmatpush1.msra.mxu0 %v2469
    %2983 = vmatprep.subr.mxu0 %v2473
    %2984 = vmatpush1.msra.mxu0 %v2472
    %2985 = vmatprep.subr.mxu0 %v2476
    %2986 = vmatpush1.msra.mxu0 %v2475
    %2987 = vmatprep.mubr.f32.mxu0 %v1879
    %2988 = vmatmul.mubr.f32.gmra.mrb[0].mxu0 %v1876
    %v2989 = vpop.f32.mrb[0].mxu0
    %v2990 = vadd.f32 %v2907, %v2989
    %v2991 = vpop.f32.mrb[0].mxu0
    %v2992 = vadd.f32 %v2909, %v2991
    %2993 = vmatprep.mubr.f32.mxu0 %v1995
    %2994 = vmatmul.mubr.f32.gmra.mrb[0].mxu0 %v1994
    %v2995 = vpop.f32.mrb[0].mxu0
    %v2996 = vadd.f32 %v2913, %v2995
    %v2997 = vpop.f32.mrb[0].mxu0
    %v2998 = vadd.f32 %v2915, %v2997
    %2999 = vmatprep.mubr.f32.mxu0 %v1957
    %3000 = vmatmul.mubr.f32.gmra.mrb[0].mxu0 %v1955
    %v3001 = vpop.f32.mrb[0].mxu0
    %v3002 = vadd.f32 %v2919, %v3001
    %v3003 = vpop.f32.mrb[0].mxu0
    %v3004 = vadd.f32 %v2921, %v3003
    %3005 = vdwg.mxu0
    %3006 = vmatprep.subr.mxu0 %v2479
    %3007 = vmatpush1.msra.mxu0 %v2478
    %3008 = vmatprep.subr.mxu0 %v2482
    %3009 = vmatpush1.msra.mxu0 %v2481
    %3010 = vmatprep.subr.mxu0 %v2485
    %3011 = vmatpush1.msra.mxu0 %v2484
    %3012 = vmatprep.subr.mxu0 %v2488
    %3013 = vmatpush1.msra.mxu0 %v2487
    %3014 = vmatprep.subr.mxu0 %v2491
    %3015 = vmatpush1.msra.mxu0 %v2490
    %3016 = vmatprep.subr.mxu0 %v2494
    %3017 = vmatpush1.msra.mxu0 %v2493
    %3018 = vmatprep.subr.mxu0 %v2497
    %3019 = vmatpush1.msra.mxu0 %v2496
    %3020 = vmatprep.subr.mxu0 %v2500
    %3021 = vmatpush1.msra.mxu0 %v2499
    %3022 = vmatprep.subr.mxu0 %v2503
    %3023 = vmatpush1.msra.mxu0 %v2502
    %3024 = vmatprep.subr.mxu0 %v2506
    %3025 = vmatpush1.msra.mxu0 %v2505
    %3026 = vmatprep.subr.mxu0 %v2509
    %3027 = vmatpush1.msra.mxu0 %v2508
    %3028 = vmatprep.subr.mxu0 %v2512
    %3029 = vmatpush1.msra.mxu0 %v2511
    %3030 = vmatprep.subr.mxu0 %v2515
    %3031 = vmatpush1.msra.mxu0 %v2514
    %3032 = vmatprep.subr.mxu0 %v2518
    %3033 = vmatpush1.msra.mxu0 %v2517
    %3034 = vmatprep.subr.mxu0 %v2521
    %3035 = vmatpush1.msra.mxu0 %v2520
    %3036 = vmatprep.subr.mxu0 %v2524
    %3037 = vmatpush1.msra.mxu0 %v2523
    %3038 = vmatprep.subr.mxu0 %v2527
    %3039 = vmatpush1.msra.mxu0 %v2526
    %3040 = vmatprep.subr.mxu0 %v2530
    %3041 = vmatpush1.msra.mxu0 %v2529
    %3042 = vmatprep.subr.mxu0 %v2533
    %3043 = vmatpush1.msra.mxu0 %v2532
    %3044 = vmatprep.subr.mxu0 %v2536
    %3045 = vmatpush1.msra.mxu0 %v2535
    %3046 = vmatprep.subr.mxu0 %v2539
    %3047 = vmatpush1.msra.mxu0 %v2538
    %3048 = vmatprep.subr.mxu0 %v2542
    %3049 = vmatpush1.msra.mxu0 %v2541
    %3050 = vmatprep.subr.mxu0 %v2545
    %3051 = vmatpush1.msra.mxu0 %v2544
    %3052 = vmatprep.subr.mxu0 %v2548
    %3053 = vmatpush1.msra.mxu0 %v2547
    %3054 = vmatprep.subr.mxu0 %v2551
    %3055 = vmatpush1.msra.mxu0 %v2550
    %3056 = vmatprep.subr.mxu0 %v2554
    %3057 = vmatpush1.msra.mxu0 %v2553
    %3058 = vmatprep.subr.mxu0 %v2557
    %3059 = vmatpush1.msra.mxu0 %v2556
    %3060 = vmatprep.subr.mxu0 %v2560
    %3061 = vmatpush1.msra.mxu0 %v2559
    %3062 = vmatprep.subr.mxu0 %v2563
    %3063 = vmatpush1.msra.mxu0 %v2562
    %3064 = vmatprep.subr.mxu0 %v2566
    %3065 = vmatpush1.msra.mxu0 %v2565
    %3066 = vmatprep.subr.mxu0 %v2569
    %3067 = vmatpush1.msra.mxu0 %v2568
    %3068 = vmatprep.subr.mxu0 %v2572
    %3069 = vmatpush1.msra.mxu0 %v2571
    %3070 = vmatprep.mubr.f32.mxu0 %v1885
    %3071 = vmatmul.mubr.f32.gmra.mrb[0].mxu0 %v1882
    %v3072 = vpop.f32.mrb[0].mxu0
    %v3073 = vadd.f32 %v2990, %v3072
    %v3074 = vpop.f32.mrb[0].mxu0
    %v3075 = vadd.f32 %v2992, %v3074
    %3076 = vmatprep.mubr.f32.mxu0 %v1997
    %3077 = vmatmul.mubr.f32.gmra.mrb[0].mxu0 %v1996
    %v3078 = vpop.f32.mrb[0].mxu0
    %v3079 = vadd.f32 %v2996, %v3078
    %v3080 = vpop.f32.mrb[0].mxu0
    %v3081 = vadd.f32 %v2998, %v3080
    %3082 = vmatprep.mubr.f32.mxu0 %v1961
    %3083 = vmatmul.mubr.f32.gmra.mrb[0].mxu0 %v1959
    %v3084 = vpop.f32.mrb[0].mxu0
    %v3085 = vadd.f32 %v3002, %v3084
    %v3086 = vpop.f32.mrb[0].mxu0
    %v3087 = vadd.f32 %v3004, %v3086
    %3088 = vdwg.mxu0
    %3089 = vmatprep.subr.mxu0 0.0
    %3090 = vmatpush1.msra.mxu0 %v2000
    %3091 = vmatprep.subr.mxu0 0.0
    %3092 = vmatpush1.msra.mxu0 %v2003
    %3093 = vmatprep.subr.mxu0 0.0
    %3094 = vmatpush1.msra.mxu0 %v2006
    %3095 = vmatprep.subr.mxu0 0.0
    %3096 = vmatpush1.msra.mxu0 %v2009
    %3097 = vmatprep.subr.mxu0 0.0
    %3098 = vmatpush1.msra.mxu0 %v2012
    %3099 = vmatprep.subr.mxu0 0.0
    %3100 = vmatpush1.msra.mxu0 %v2015
    %3101 = vmatprep.subr.mxu0 0.0
    %3102 = vmatpush1.msra.mxu0 %v2018
    %3103 = vmatprep.subr.mxu0 0.0
    %3104 = vmatpush1.msra.mxu0 %v2021
    %3105 = vmatprep.subr.mxu0 0.0
    %3106 = vmatpush1.msra.mxu0 %v2024
    %3107 = vmatprep.subr.mxu0 0.0
    %3108 = vmatpush1.msra.mxu0 %v2027
    %3109 = vmatprep.subr.mxu0 0.0
    %3110 = vmatpush1.msra.mxu0 %v2030
    %3111 = vmatprep.subr.mxu0 0.0
    %3112 = vmatpush1.msra.mxu0 %v2033
    %3113 = vmatprep.subr.mxu0 0.0
    %3114 = vmatpush1.msra.mxu0 %v2036
    %3115 = vmatprep.subr.mxu0 0.0
    %3116 = vmatpush1.msra.mxu0 %v2039
    %3117 = vmatprep.subr.mxu0 0.0
    %3118 = vmatpush1.msra.mxu0 %v2042
    %3119 = vmatprep.subr.mxu0 0.0
    %3120 = vmatpush1.msra.mxu0 %v2045
    %3121 = vmatprep.subr.mxu0 0.0
    %3122 = vmatpush1.msra.mxu0 %v2048
    %3123 = vmatprep.subr.mxu0 0.0
    %3124 = vmatpush1.msra.mxu0 %v2051
    %3125 = vmatprep.subr.mxu0 0.0
    %3126 = vmatpush1.msra.mxu0 %v2054
    %3127 = vmatprep.subr.mxu0 0.0
    %3128 = vmatpush1.msra.mxu0 %v2057
    %3129 = vmatprep.subr.mxu0 0.0
    %3130 = vmatpush1.msra.mxu0 %v2060
    %3131 = vmatprep.subr.mxu0 0.0
    %3132 = vmatpush1.msra.mxu0 %v2063
    %3133 = vmatprep.subr.mxu0 0.0
    %3134 = vmatpush1.msra.mxu0 %v2066
    %3135 = vmatprep.subr.mxu0 0.0
    %3136 = vmatpush1.msra.mxu0 %v2069
    %3137 = vmatprep.subr.mxu0 0.0
    %3138 = vmatpush1.msra.mxu0 %v2072
    %3139 = vmatprep.subr.mxu0 0.0
    %3140 = vmatpush1.msra.mxu0 %v2075
    %3141 = vmatprep.subr.mxu0 0.0
    %3142 = vmatpush1.msra.mxu0 %v2078
    %3143 = vmatprep.subr.mxu0 0.0
    %3144 = vmatpush1.msra.mxu0 %v2081
    %3145 = vmatprep.subr.mxu0 0.0
    %3146 = vmatpush1.msra.mxu0 %v2084
    %3147 = vmatprep.subr.mxu0 0.0
    %3148 = vmatpush1.msra.mxu0 %v2087
    %3149 = vmatprep.subr.mxu0 0.0
    %3150 = vmatpush1.msra.mxu0 %v2090
    %3151 = vmatprep.subr.mxu0 0.0
    %3152 = vmatpush1.msra.mxu0 %v2093
    %3153 = vmatprep.mubr.f32.mxu0 %v1819
    %3154 = vmatmul.mubr.f32.gmra.mrb[0].mxu0 %v1818
    %v3155 = vpop.f32.mrb[0].mxu0
    %v3156 = vadd.f32 %v2587, %v3155
    %v3157 = vpop.f32.mrb[0].mxu0
    %3158 = vmatprep.mubr.f32.mxu0 %v1987
    %3159 = vmatmul.mubr.f32.gmra.mrb[0].mxu0 %v1986
    %v3160 = vpop.f32.mrb[0].mxu0
    %v3161 = vadd.f32 %v2587, %v3160
    %v3162 = vpop.f32.mrb[0].mxu0
    %3163 = vmatprep.mubr.f32.mxu0 %v1941
    %3164 = vmatmul.mubr.f32.gmra.mrb[0].mxu0 %v1939
    %v3165 = vpop.f32.mrb[0].mxu0
    %v3166 = vadd.f32 %v2587, %v3165
    %v3167 = vpop.f32.mrb[0].mxu0
    %3168 = vdwg.mxu0
    %3169 = vmatprep.subr.mxu0 0.0
    %3170 = vmatpush1.msra.mxu0 %v2096
    %3171 = vmatprep.subr.mxu0 0.0
    %3172 = vmatpush1.msra.mxu0 %v2099
    %3173 = vmatprep.subr.mxu0 0.0
    %3174 = vmatpush1.msra.mxu0 %v2102
    %3175 = vmatprep.subr.mxu0 0.0
    %3176 = vmatpush1.msra.mxu0 %v2105
    %3177 = vmatprep.subr.mxu0 0.0
    %3178 = vmatpush1.msra.mxu0 %v2108
    %3179 = vmatprep.subr.mxu0 0.0
    %3180 = vmatpush1.msra.mxu0 %v2111
    %3181 = vmatprep.subr.mxu0 0.0
    %3182 = vmatpush1.msra.mxu0 %v2114
    %3183 = vmatprep.subr.mxu0 0.0
    %3184 = vmatpush1.msra.mxu0 %v2117
    %3185 = vmatprep.subr.mxu0 0.0
    %3186 = vmatpush1.msra.mxu0 %v2120
    %3187 = vmatprep.subr.mxu0 0.0
    %3188 = vmatpush1.msra.mxu0 %v2123
    %3189 = vmatprep.subr.mxu0 0.0
    %3190 = vmatpush1.msra.mxu0 %v2126
    %3191 = vmatprep.subr.mxu0 0.0
    %3192 = vmatpush1.msra.mxu0 %v2129
    %3193 = vmatprep.subr.mxu0 0.0
    %3194 = vmatpush1.msra.mxu0 %v2132
    %3195 = vmatprep.subr.mxu0 0.0
    %3196 = vmatpush1.msra.mxu0 %v2135
    %3197 = vmatprep.subr.mxu0 0.0
    %3198 = vmatpush1.msra.mxu0 %v2138
    %3199 = vmatprep.subr.mxu0 0.0
    %3200 = vmatpush1.msra.mxu0 %v2141
    %3201 = vmatprep.subr.mxu0 0.0
    %3202 = vmatpush1.msra.mxu0 %v2144
    %3203 = vmatprep.subr.mxu0 0.0
    %3204 = vmatpush1.msra.mxu0 %v2147
    %3205 = vmatprep.subr.mxu0 0.0
    %3206 = vmatpush1.msra.mxu0 %v2150
    %3207 = vmatprep.subr.mxu0 0.0
    %3208 = vmatpush1.msra.mxu0 %v2153
    %3209 = vmatprep.subr.mxu0 0.0
    %3210 = vmatpush1.msra.mxu0 %v2156
    %3211 = vmatprep.subr.mxu0 0.0
    %3212 = vmatpush1.msra.mxu0 %v2159
    %3213 = vmatprep.subr.mxu0 0.0
    %3214 = vmatpush1.msra.mxu0 %v2162
    %3215 = vmatprep.subr.mxu0 0.0
    %3216 = vmatpush1.msra.mxu0 %v2165
    %3217 = vmatprep.subr.mxu0 0.0
    %3218 = vmatpush1.msra.mxu0 %v2168
    %3219 = vmatprep.subr.mxu0 0.0
    %3220 = vmatpush1.msra.mxu0 %v2171
    %3221 = vmatprep.subr.mxu0 0.0
    %3222 = vmatpush1.msra.mxu0 %v2174
    %3223 = vmatprep.subr.mxu0 0.0
    %3224 = vmatpush1.msra.mxu0 %v2177
    %3225 = vmatprep.subr.mxu0 0.0
    %3226 = vmatpush1.msra.mxu0 %v2180
    %3227 = vmatprep.subr.mxu0 0.0
    %3228 = vmatpush1.msra.mxu0 %v2183
    %3229 = vmatprep.subr.mxu0 0.0
    %3230 = vmatpush1.msra.mxu0 %v2186
    %3231 = vmatprep.subr.mxu0 0.0
    %3232 = vmatpush1.msra.mxu0 %v2189
    %3233 = vmatprep.mubr.f32.mxu0 %v1821
    %3234 = vmatmul.mubr.f32.gmra.mrb[0].mxu0 %v1820
    %v3235 = vpop.f32.mrb[0].mxu0
    %v3236 = vadd.f32 %v3156, %v3235
    %v3237 = vpop.f32.mrb[0].mxu0
    %3238 = vmatprep.mubr.f32.mxu0 %v1989
    %3239 = vmatmul.mubr.f32.gmra.mrb[0].mxu0 %v1988
    %v3240 = vpop.f32.mrb[0].mxu0
    %v3241 = vadd.f32 %v3161, %v3240
    %v3242 = vpop.f32.mrb[0].mxu0
    %3243 = vmatprep.mubr.f32.mxu0 %v1945
    %3244 = vmatmul.mubr.f32.gmra.mrb[0].mxu0 %v1943
    %v3245 = vpop.f32.mrb[0].mxu0
    %v3246 = vadd.f32 %v3166, %v3245
    %v3247 = vpop.f32.mrb[0].mxu0
    %3248 = vdwg.mxu0
    %3249 = vmatprep.subr.mxu0 0.0
    %3250 = vmatpush1.msra.mxu0 %v2192
    %3251 = vmatprep.subr.mxu0 0.0
    %3252 = vmatpush1.msra.mxu0 %v2195
    %3253 = vmatprep.subr.mxu0 0.0
    %3254 = vmatpush1.msra.mxu0 %v2198
    %3255 = vmatprep.subr.mxu0 0.0
    %3256 = vmatpush1.msra.mxu0 %v2201
    %3257 = vmatprep.subr.mxu0 0.0
    %3258 = vmatpush1.msra.mxu0 %v2204
    %3259 = vmatprep.subr.mxu0 0.0
    %3260 = vmatpush1.msra.mxu0 %v2207
    %3261 = vmatprep.subr.mxu0 0.0
    %3262 = vmatpush1.msra.mxu0 %v2210
    %3263 = vmatprep.subr.mxu0 0.0
    %3264 = vmatpush1.msra.mxu0 %v2213
    %3265 = vmatprep.subr.mxu0 0.0
    %3266 = vmatpush1.msra.mxu0 %v2216
    %3267 = vmatprep.subr.mxu0 0.0
    %3268 = vmatpush1.msra.mxu0 %v2219
    %3269 = vmatprep.subr.mxu0 0.0
    %3270 = vmatpush1.msra.mxu0 %v2222
    %3271 = vmatprep.subr.mxu0 0.0
    %3272 = vmatpush1.msra.mxu0 %v2225
    %3273 = vmatprep.subr.mxu0 0.0
    %3274 = vmatpush1.msra.mxu0 %v2228
    %3275 = vmatprep.subr.mxu0 0.0
    %3276 = vmatpush1.msra.mxu0 %v2231
    %3277 = vmatprep.subr.mxu0 0.0
    %3278 = vmatpush1.msra.mxu0 %v2234
    %3279 = vmatprep.subr.mxu0 0.0
    %3280 = vmatpush1.msra.mxu0 %v2237
    %3281 = vmatprep.subr.mxu0 0.0
    %3282 = vmatpush1.msra.mxu0 %v2240
    %3283 = vmatprep.subr.mxu0 0.0
    %3284 = vmatpush1.msra.mxu0 %v2243
    %3285 = vmatprep.subr.mxu0 0.0
    %3286 = vmatpush1.msra.mxu0 %v2246
    %3287 = vmatprep.subr.mxu0 0.0
    %3288 = vmatpush1.msra.mxu0 %v2249
    %3289 = vmatprep.subr.mxu0 0.0
    %3290 = vmatpush1.msra.mxu0 %v2252
    %3291 = vmatprep.subr.mxu0 0.0
    %3292 = vmatpush1.msra.mxu0 %v2255
    %3293 = vmatprep.subr.mxu0 0.0
    %3294 = vmatpush1.msra.mxu0 %v2258
    %3295 = vmatprep.subr.mxu0 0.0
    %3296 = vmatpush1.msra.mxu0 %v2261
    %3297 = vmatprep.subr.mxu0 0.0
    %3298 = vmatpush1.msra.mxu0 %v2264
    %3299 = vmatprep.subr.mxu0 0.0
    %3300 = vmatpush1.msra.mxu0 %v2267
    %3301 = vmatprep.subr.mxu0 0.0
    %3302 = vmatpush1.msra.mxu0 %v2270
    %3303 = vmatprep.subr.mxu0 0.0
    %3304 = vmatpush1.msra.mxu0 %v2273
    %3305 = vmatprep.subr.mxu0 0.0
    %3306 = vmatpush1.msra.mxu0 %v2276
    %3307 = vmatprep.subr.mxu0 0.0
    %3308 = vmatpush1.msra.mxu0 %v2279
    %3309 = vmatprep.subr.mxu0 0.0
    %3310 = vmatpush1.msra.mxu0 %v2282
    %3311 = vmatprep.subr.mxu0 0.0
    %3312 = vmatpush1.msra.mxu0 %v2285
    %3313 = vmatprep.mubr.f32.mxu0 %v1859
    %3314 = vmatmul.mubr.f32.gmra.mrb[0].mxu0 %v1856
    %v3315 = vpop.f32.mrb[0].mxu0
    %v3316 = vadd.f32 %v3236, %v3315
    %v3317 = vpop.f32.mrb[0].mxu0
    %3318 = vmatprep.mubr.f32.mxu0 %v1991
    %3319 = vmatmul.mubr.f32.gmra.mrb[0].mxu0 %v1990
    %v3320 = vpop.f32.mrb[0].mxu0
    %v3321 = vadd.f32 %v3241, %v3320
    %v3322 = vpop.f32.mrb[0].mxu0
    %3323 = vmatprep.mubr.f32.mxu0 %v1949
    %3324 = vmatmul.mubr.f32.gmra.mrb[0].mxu0 %v1947
    %v3325 = vpop.f32.mrb[0].mxu0
    %v3326 = vadd.f32 %v3246, %v3325
    %v3327 = vpop.f32.mrb[0].mxu0
    %3328 = vdwg.mxu0
    %3329 = vmatprep.subr.mxu0 0.0
    %3330 = vmatpush1.msra.mxu0 %v2288
    %3331 = vmatprep.subr.mxu0 0.0
    %3332 = vmatpush1.msra.mxu0 %v2291
    %3333 = vmatprep.subr.mxu0 0.0
    %3334 = vmatpush1.msra.mxu0 %v2294
    %3335 = vmatprep.subr.mxu0 0.0
    %3336 = vmatpush1.msra.mxu0 %v2297
    %3337 = vmatprep.subr.mxu0 0.0
    %3338 = vmatpush1.msra.mxu0 %v2300
    %3339 = vmatprep.subr.mxu0 0.0
    %3340 = vmatpush1.msra.mxu0 %v2303
    %3341 = vmatprep.subr.mxu0 0.0
    %3342 = vmatpush1.msra.mxu0 %v2306
    %3343 = vmatprep.subr.mxu0 0.0
    %3344 = vmatpush1.msra.mxu0 %v2309
    %3345 = vmatprep.subr.mxu0 0.0
    %3346 = vmatpush1.msra.mxu0 %v2312
    %3347 = vmatprep.subr.mxu0 0.0
    %3348 = vmatpush1.msra.mxu0 %v2315
    %3349 = vmatprep.subr.mxu0 0.0
    %3350 = vmatpush1.msra.mxu0 %v2318
    %3351 = vmatprep.subr.mxu0 0.0
    %3352 = vmatpush1.msra.mxu0 %v2321
    %3353 = vmatprep.subr.mxu0 0.0
    %3354 = vmatpush1.msra.mxu0 %v2324
    %3355 = vmatprep.subr.mxu0 0.0
    %3356 = vmatpush1.msra.mxu0 %v2327
    %3357 = vmatprep.subr.mxu0 0.0
    %3358 = vmatpush1.msra.mxu0 %v2330
    %3359 = vmatprep.subr.mxu0 0.0
    %3360 = vmatpush1.msra.mxu0 %v2333
    %3361 = vmatprep.subr.mxu0 0.0
    %3362 = vmatpush1.msra.mxu0 %v2336
    %3363 = vmatprep.subr.mxu0 0.0
    %3364 = vmatpush1.msra.mxu0 %v2339
    %3365 = vmatprep.subr.mxu0 0.0
    %3366 = vmatpush1.msra.mxu0 %v2342
    %3367 = vmatprep.subr.mxu0 0.0
    %3368 = vmatpush1.msra.mxu0 %v2345
    %3369 = vmatprep.subr.mxu0 0.0
    %3370 = vmatpush1.msra.mxu0 %v2348
    %3371 = vmatprep.subr.mxu0 0.0
    %3372 = vmatpush1.msra.mxu0 %v2351
    %3373 = vmatprep.subr.mxu0 0.0
    %3374 = vmatpush1.msra.mxu0 %v2354
    %3375 = vmatprep.subr.mxu0 0.0
    %3376 = vmatpush1.msra.mxu0 %v2357
    %3377 = vmatprep.subr.mxu0 0.0
    %3378 = vmatpush1.msra.mxu0 %v2360
    %3379 = vmatprep.subr.mxu0 0.0
    %3380 = vmatpush1.msra.mxu0 %v2363
    %3381 = vmatprep.subr.mxu0 0.0
    %3382 = vmatpush1.msra.mxu0 %v2366
    %3383 = vmatprep.subr.mxu0 0.0
    %3384 = vmatpush1.msra.mxu0 %v2369
    %3385 = vmatprep.subr.mxu0 0.0
    %3386 = vmatpush1.msra.mxu0 %v2372
    %3387 = vmatprep.subr.mxu0 0.0
    %3388 = vmatpush1.msra.mxu0 %v2375
    %3389 = vmatprep.subr.mxu0 0.0
    %3390 = vmatpush1.msra.mxu0 %v2378
    %3391 = vmatprep.subr.mxu0 0.0
    %3392 = vmatpush1.msra.mxu0 %v2381
    %3393 = vmatprep.mubr.f32.mxu0 %v1865
    %3394 = vmatmul.mubr.f32.gmra.mrb[0].mxu0 %v1862
    %v3395 = vpop.f32.mrb[0].mxu0
    %v3396 = vadd.f32 %v3316, %v3395
    %v3397 = vpop.f32.mrb[0].mxu0
    %3398 = vmatprep.mubr.f32.mxu0 %v1993
    %3399 = vmatmul.mubr.f32.gmra.mrb[0].mxu0 %v1992
    %v3400 = vpop.f32.mrb[0].mxu0
    %v3401 = vadd.f32 %v3321, %v3400
    %v3402 = vpop.f32.mrb[0].mxu0
    %3403 = vmatprep.mubr.f32.mxu0 %v1953
    %3404 = vmatmul.mubr.f32.gmra.mrb[0].mxu0 %v1951
    %v3405 = vpop.f32.mrb[0].mxu0
    %v3406 = vadd.f32 %v3326, %v3405
    %v3407 = vpop.f32.mrb[0].mxu0
    %3408 = vdwg.mxu0
    %3409 = vmatprep.subr.mxu0 0.0
    %3410 = vmatpush1.msra.mxu0 %v2384
    %3411 = vmatprep.subr.mxu0 0.0
    %3412 = vmatpush1.msra.mxu0 %v2387
    %3413 = vmatprep.subr.mxu0 0.0
    %3414 = vmatpush1.msra.mxu0 %v2390
    %3415 = vmatprep.subr.mxu0 0.0
    %3416 = vmatpush1.msra.mxu0 %v2393
    %3417 = vmatprep.subr.mxu0 0.0
    %3418 = vmatpush1.msra.mxu0 %v2396
    %3419 = vmatprep.subr.mxu0 0.0
    %3420 = vmatpush1.msra.mxu0 %v2399
    %3421 = vmatprep.subr.mxu0 0.0
    %3422 = vmatpush1.msra.mxu0 %v2402
    %3423 = vmatprep.subr.mxu0 0.0
    %3424 = vmatpush1.msra.mxu0 %v2405
    %3425 = vmatprep.subr.mxu0 0.0
    %3426 = vmatpush1.msra.mxu0 %v2408
    %3427 = vmatprep.subr.mxu0 0.0
    %3428 = vmatpush1.msra.mxu0 %v2411
    %3429 = vmatprep.subr.mxu0 0.0
    %3430 = vmatpush1.msra.mxu0 %v2414
    %3431 = vmatprep.subr.mxu0 0.0
    %3432 = vmatpush1.msra.mxu0 %v2417
    %3433 = vmatprep.subr.mxu0 0.0
    %3434 = vmatpush1.msra.mxu0 %v2420
    %3435 = vmatprep.subr.mxu0 0.0
    %3436 = vmatpush1.msra.mxu0 %v2423
    %3437 = vmatprep.subr.mxu0 0.0
    %3438 = vmatpush1.msra.mxu0 %v2426
    %3439 = vmatprep.subr.mxu0 0.0
    %3440 = vmatpush1.msra.mxu0 %v2429
    %3441 = vmatprep.subr.mxu0 0.0
    %3442 = vmatpush1.msra.mxu0 %v2432
    %3443 = vmatprep.subr.mxu0 0.0
    %3444 = vmatpush1.msra.mxu0 %v2435
    %3445 = vmatprep.subr.mxu0 0.0
    %3446 = vmatpush1.msra.mxu0 %v2438
    %3447 = vmatprep.subr.mxu0 0.0
    %3448 = vmatpush1.msra.mxu0 %v2441
    %3449 = vmatprep.subr.mxu0 0.0
    %3450 = vmatpush1.msra.mxu0 %v2444
    %3451 = vmatprep.subr.mxu0 0.0
    %3452 = vmatpush1.msra.mxu0 %v2447
    %3453 = vmatprep.subr.mxu0 0.0
    %3454 = vmatpush1.msra.mxu0 %v2450
    %3455 = vmatprep.subr.mxu0 0.0
    %3456 = vmatpush1.msra.mxu0 %v2453
    %3457 = vmatprep.subr.mxu0 0.0
    %3458 = vmatpush1.msra.mxu0 %v2456
    %3459 = vmatprep.subr.mxu0 0.0
    %3460 = vmatpush1.msra.mxu0 %v2459
    %3461 = vmatprep.subr.mxu0 0.0
    %3462 = vmatpush1.msra.mxu0 %v2462
    %3463 = vmatprep.subr.mxu0 0.0
    %3464 = vmatpush1.msra.mxu0 %v2465
    %3465 = vmatprep.subr.mxu0 0.0
    %3466 = vmatpush1.msra.mxu0 %v2468
    %3467 = vmatprep.subr.mxu0 0.0
    %3468 = vmatpush1.msra.mxu0 %v2471
    %3469 = vmatprep.subr.mxu0 0.0
    %3470 = vmatpush1.msra.mxu0 %v2474
    %3471 = vmatprep.subr.mxu0 0.0
    %3472 = vmatpush1.msra.mxu0 %v2477
    %3473 = vmatprep.mubr.f32.mxu0 %v1879
    %3474 = vmatmul.mubr.f32.gmra.mrb[0].mxu0 %v1876
    %v3475 = vpop.f32.mrb[0].mxu0
    %v3476 = vadd.f32 %v3396, %v3475
    %v3477 = vpop.f32.mrb[0].mxu0
    %3478 = vmatprep.mubr.f32.mxu0 %v1995
    %3479 = vmatmul.mubr.f32.gmra.mrb[0].mxu0 %v1994
    %v3480 = vpop.f32.mrb[0].mxu0
    %v3481 = vadd.f32 %v3401, %v3480
    %v3482 = vpop.f32.mrb[0].mxu0
    %3483 = vmatprep.mubr.f32.mxu0 %v1957
    %3484 = vmatmul.mubr.f32.gmra.mrb[0].mxu0 %v1955
    %v3485 = vpop.f32.mrb[0].mxu0
    %v3486 = vadd.f32 %v3406, %v3485
    %v3487 = vpop.f32.mrb[0].mxu0
    %3488 = vdwg.mxu0
    %3489 = vmatprep.subr.mxu0 0.0
    %3490 = vmatpush1.msra.mxu0 %v2480
    %3491 = vmatprep.subr.mxu0 0.0
    %3492 = vmatpush1.msra.mxu0 %v2483
    %3493 = vmatprep.subr.mxu0 0.0
    %3494 = vmatpush1.msra.mxu0 %v2486
    %3495 = vmatprep.subr.mxu0 0.0
    %3496 = vmatpush1.msra.mxu0 %v2489
    %3497 = vmatprep.subr.mxu0 0.0
    %3498 = vmatpush1.msra.mxu0 %v2492
    %3499 = vmatprep.subr.mxu0 0.0
    %3500 = vmatpush1.msra.mxu0 %v2495
    %3501 = vmatprep.subr.mxu0 0.0
    %3502 = vmatpush1.msra.mxu0 %v2498
    %3503 = vmatprep.subr.mxu0 0.0
    %3504 = vmatpush1.msra.mxu0 %v2501
    %3505 = vmatprep.subr.mxu0 0.0
    %3506 = vmatpush1.msra.mxu0 %v2504
    %3507 = vmatprep.subr.mxu0 0.0
    %3508 = vmatpush1.msra.mxu0 %v2507
    %3509 = vmatprep.subr.mxu0 0.0
    %3510 = vmatpush1.msra.mxu0 %v2510
    %3511 = vmatprep.subr.mxu0 0.0
    %3512 = vmatpush1.msra.mxu0 %v2513
    %3513 = vmatprep.subr.mxu0 0.0
    %3514 = vmatpush1.msra.mxu0 %v2516
    %3515 = vmatprep.subr.mxu0 0.0
    %3516 = vmatpush1.msra.mxu0 %v2519
    %3517 = vmatprep.subr.mxu0 0.0
    %3518 = vmatpush1.msra.mxu0 %v2522
    %3519 = vmatprep.subr.mxu0 0.0
    %3520 = vmatpush1.msra.mxu0 %v2525
    %3521 = vmatprep.subr.mxu0 0.0
    %3522 = vmatpush1.msra.mxu0 %v2528
    %3523 = vmatprep.subr.mxu0 0.0
    %3524 = vmatpush1.msra.mxu0 %v2531
    %3525 = vmatprep.subr.mxu0 0.0
    %3526 = vmatpush1.msra.mxu0 %v2534
    %3527 = vmatprep.subr.mxu0 0.0
    %3528 = vmatpush1.msra.mxu0 %v2537
    %3529 = vmatprep.subr.mxu0 0.0
    %3530 = vmatpush1.msra.mxu0 %v2540
    %3531 = vmatprep.subr.mxu0 0.0
    %3532 = vmatpush1.msra.mxu0 %v2543
    %3533 = vmatprep.subr.mxu0 0.0
    %3534 = vmatpush1.msra.mxu0 %v2546
    %3535 = vmatprep.subr.mxu0 0.0
    %3536 = vmatpush1.msra.mxu0 %v2549
    %3537 = vmatprep.subr.mxu0 0.0
    %3538 = vmatpush1.msra.mxu0 %v2552
    %3539 = vmatprep.subr.mxu0 0.0
    %3540 = vmatpush1.msra.mxu0 %v2555
    %3541 = vmatprep.subr.mxu0 0.0
    %3542 = vmatpush1.msra.mxu0 %v2558
    %3543 = vmatprep.subr.mxu0 0.0
    %3544 = vmatpush1.msra.mxu0 %v2561
    %3545 = vmatprep.subr.mxu0 0.0
    %3546 = vmatpush1.msra.mxu0 %v2564
    %3547 = vmatprep.subr.mxu0 0.0
    %3548 = vmatpush1.msra.mxu0 %v2567
    %3549 = vmatprep.subr.mxu0 0.0
    %3550 = vmatpush1.msra.mxu0 %v2570
    %3551 = vmatprep.subr.mxu0 0.0
    %3552 = vmatpush1.msra.mxu0 %v2573
    %3553 = vmatprep.mubr.f32.mxu0 %v1885
    %3554 = vmatmul.mubr.f32.gmra.mrb[0].mxu0 %v1882
    %v3555 = vpop.f32.mrb[0].mxu0
    %v3556 = vadd.f32 %v3476, %v3555
    %v3557 = vpop.f32.mrb[0].mxu0
    %3558 = vmatprep.mubr.f32.mxu0 %v1997
    %3559 = vmatmul.mubr.f32.gmra.mrb[0].mxu0 %v1996
    %v3560 = vpop.f32.mrb[0].mxu0
    %v3561 = vadd.f32 %v3481, %v3560
    %v3562 = vpop.f32.mrb[0].mxu0
    %3563 = vmatprep.mubr.f32.mxu0 %v1961
    %3564 = vmatmul.mubr.f32.gmra.mrb[0].mxu0 %v1959
    %v3565 = vpop.f32.mrb[0].mxu0
    %v3566 = vadd.f32 %v3486, %v3565
    %v3567 = vpop.f32.mrb[0].mxu0
    %3568 = vdwg.mxu0
    %v3569 = vmax.f32 %v3073, 0.0
    %v3570 = vmax.f32 %v3075, 0.0
    %v3571 = vmax.f32 %v3556, 0.0
    %v3572 = vmax.f32 %v3079, 0.0
    %v3573 = vmax.f32 %v3081, 0.0
    %v3574 = vmax.f32 %v3561, 0.0
    %v3575 = vmax.f32 %v3085, 0.0
    %v3576 = vmax.f32 %v3087, 0.0
    %v3577 = vmax.f32 %v3566, 0.0
    %v3584 = vrot.slane %v3569, 6
    %v3585 = vrot.slane %v3570, 6
    %v3586 = vrot.slane %v3571, 6
    %v3587 = vrot.slane %v3572, 6
    %v3588 = vsel %vm323, %v3584, %v3587
    %v3589 = vrot.slane %v3573, 6
    %v3590 = vsel %vm323, %v3585, %v3589
    %v3591 = vrot.slane %v3574, 6
    %v3592 = vsel %vm323, %v3586, %v3591
    %v3599 = vsel %vm323, 0.0, %v3584
    %v3600 = vsel %vm323, 0.0, %v3585
    %v3601 = vsel %vm323, 0.0, %v3586
    %v3602 = vsel %vm82, %v3588, 0.0
    %v3603 = vsel %vm82, %v3590, 0.0
    %v3604 = vsel %vm82, %v3592, 0.0
    %v3605 = vsel %vm323, 0.0, %v3572
    %v3606 = vsel %vm323, 0.0, %v3573
    %v3607 = vsel %vm323, 0.0, %v3574
    %v3608 = vsel %vm82, %v3575, 0.0
    %v3609 = vsel %vm82, %v3576, 0.0
    %v3610 = vsel %vm82, %v3577, 0.0
    %v3617 = vrot.slane %v3599, 1
    %v3618 = vrot.slane %v3602, 1
    %v3619 = vsel %vm52, %v3617, %v3618
    %v3620 = vrot.slane %v3600, 1
    %v3621 = vrot.slane %v3603, 1
    %v3622 = vsel %vm52, %v3620, %v3621
    %v3623 = vrot.slane %v3601, 1
    %v3624 = vrot.slane %v3604, 1
    %v3625 = vsel %vm52, %v3623, %v3624
    %3626 = vrot.lane.b32.xlu0 %v3619, 64
    %v3627 = vpop.permute.xlu0 %3626
    %3628 = vrot.lane.b32.xlu0 %v3622, 64
    %v3629 = vpop.permute.xlu0 %3628
    %3630 = vrot.lane.b32.xlu0 %v3625, 64
    %v3631 = vpop.permute.xlu0 %3630
    %3632 = vrot.lane.b32.xlu0 %v3618, 64
    %v3633 = vpop.permute.xlu0 %3632
    %3634 = vrot.lane.b32.xlu0 %v3621, 64
    %v3635 = vpop.permute.xlu0 %3634
    %3636 = vrot.lane.b32.xlu0 %v3624, 64
    %v3637 = vpop.permute.xlu0 %3636
    %v3638 = vsel %vm101, %v3627, %v3629
    %v3639 = vsel %vm101, %v3629, %v3631
    %v3640 = vsel %vm101, %v3633, %v3635
    %v3641 = vsel %vm101, %v3635, %v3637
    %v3648 = vrot.slane %v3599, 2
    %v3649 = vrot.slane %v3602, 2
    %v3650 = vsel %vm62, %v3648, %v3649
    %v3651 = vrot.slane %v3600, 2
    %v3652 = vrot.slane %v3603, 2
    %v3653 = vsel %vm62, %v3651, %v3652
    %v3654 = vrot.slane %v3601, 2
    %v3655 = vrot.slane %v3604, 2
    %v3656 = vsel %vm62, %v3654, %v3655
    %v3662 = vsel %vm101, %v3601, %v3627
    %v3663 = vsel %vm101, %v3604, %v3633
    %v3670 = vrot.slane %v3605, 1
    %v3671 = vrot.slane %v3608, 1
    %v3672 = vsel %vm52, %v3670, %v3671
    %v3673 = vrot.slane %v3606, 1
    %v3674 = vrot.slane %v3609, 1
    %v3675 = vsel %vm52, %v3673, %v3674
    %v3676 = vrot.slane %v3607, 1
    %v3677 = vrot.slane %v3610, 1
    %v3678 = vsel %vm52, %v3676, %v3677
    %3679 = vrot.lane.b32.xlu0 %v3672, 64
    %v3680 = vpop.permute.xlu0 %3679
    %3681 = vrot.lane.b32.xlu0 %v3675, 64
    %v3682 = vpop.permute.xlu0 %3681
    %3683 = vrot.lane.b32.xlu0 %v3678, 64
    %v3684 = vpop.permute.xlu0 %3683
    %3685 = vrot.lane.b32.xlu0 %v3671, 64
    %v3686 = vpop.permute.xlu0 %3685
    %3687 = vrot.lane.b32.xlu0 %v3674, 64
    %v3688 = vpop.permute.xlu0 %3687
    %3689 = vrot.lane.b32.xlu0 %v3677, 64
    %v3690 = vpop.permute.xlu0 %3689
    %v3691 = vsel %vm101, %v3680, %v3682
    %v3692 = vsel %vm101, %v3682, %v3684
    %v3693 = vsel %vm101, %v3686, %v3688
    %v3694 = vsel %vm101, %v3688, %v3690
    %v3697 = vrot.slane %v3605, 2
    %v3698 = vrot.slane %v3608, 2
    %v3699 = vsel %vm62, %v3697, %v3698
    %v3700 = vrot.slane %v3606, 2
    %v3701 = vrot.slane %v3609, 2
    %v3702 = vsel %vm62, %v3700, %v3701
    %v3703 = vrot.slane %v3607, 2
    %v3704 = vrot.slane %v3610, 2
    %v3705 = vsel %vm62, %v3703, %v3704
    %v3706 = vsel %vm101, %v3607, %v3680
    %v3707 = vsel %vm101, %v3610, %v3686
    %v3710 = vrot.slane %v3605, 4
    %v3711 = vrot.slane %v3606, 4
    %v3712 = vrot.slane %v3706, 4
    %v3713 = vrot.slane %v3691, 4
    %v3714 = vrot.slane %v3692, 4
    %v3715 = vrot.slane %v3699, 4
    %v3716 = vrot.slane %v3702, 4
    %v3717 = vrot.slane %v3705, 4
    %v3718 = vrot.slane %v3608, 4
    %v3719 = vsel %vm82, %v3710, %v3718
    %v3720 = vrot.slane %v3609, 4
    %v3721 = vsel %vm82, %v3711, %v3720
    %v3722 = vrot.slane %v3707, 4
    %v3723 = vsel %vm82, %v3712, %v3722
    %v3724 = vrot.slane %v3693, 4
    %v3725 = vsel %vm82, %v3713, %v3724
    %v3726 = vrot.slane %v3694, 4
    %v3727 = vsel %vm82, %v3714, %v3726
    %v3728 = vrot.slane %v3698, 4
    %v3729 = vsel %vm82, %v3715, %v3728
    %v3730 = vrot.slane %v3701, 4
    %v3731 = vsel %vm82, %v3716, %v3730
    %v3732 = vrot.slane %v3704, 4
    %v3733 = vsel %vm82, %v3717, %v3732
    %v3749 = vsel %vm82, %v3602, %v3710
    %v3750 = vsel %vm82, %v3603, %v3711
    %v3751 = vsel %vm82, %v3663, %v3712
    %v3752 = vsel %vm82, %v3640, %v3713
    %v3753 = vsel %vm82, %v3641, %v3714
    %v3754 = vsel %vm82, %v3649, %v3715
    %v3755 = vsel %vm82, %v3652, %v3716
    %v3756 = vsel %vm82, %v3655, %v3717
    %v3757 = vld [vmem:[%s9] sm:$0xff]
    %v3758 = vld [vmem:[%s9 + $0x8] sm:$0xff]
    %v3759 = vld [vmem:[%s9 + $0x10] sm:$0xff]
    %v3760 = vld [vmem:[%s9 + $0x18] sm:$0xff]
    %v3761 = vld [vmem:[%s9 + $0x20] sm:$0xff]
    %v3762 = vld [vmem:[%s9 + $0x28] sm:$0xff]
    %v3763 = vld [vmem:[%s9 + $0x30] sm:$0xff]
    %v3764 = vld [vmem:[%s9 + $0x38] sm:$0xff]
    %v3765 = vld [vmem:[%s9 + $0x40] sm:$0xff]
    %v3766 = vld [vmem:[%s9 + $0x48] sm:$0xff]
    %v3767 = vld [vmem:[%s9 + $0x50] sm:$0xff]
    %v3768 = vld [vmem:[%s9 + $0x58] sm:$0xff]
    %v3769 = vld [vmem:[%s9 + $0x60] sm:$0xff]
    %v3770 = vld [vmem:[%s9 + $0x68] sm:$0xff]
    %v3771 = vld [vmem:[%s9 + $0x70] sm:$0xff]
    %v3772 = vld [vmem:[%s9 + $0x78] sm:$0xff]
    %v3773 = vld [vmem:[%s9 + $0x80] sm:$0xff]
    %v3774 = vld [vmem:[%s9 + $0x88] sm:$0xff]
    %v3775 = vld [vmem:[%s9 + $0x90] sm:$0xff]
    %v3776 = vld [vmem:[%s9 + $0x98] sm:$0xff]
    %v3777 = vld [vmem:[%s9 + $0xa0] sm:$0xff]
    %v3778 = vld [vmem:[%s9 + $0xa8] sm:$0xff]
    %v3779 = vld [vmem:[%s9 + $0xb0] sm:$0xff]
    %v3780 = vld [vmem:[%s9 + $0xb8] sm:$0xff]
    %v3781 = vld [vmem:[%s9 + $0xc0] sm:$0xff]
    %v3782 = vld [vmem:[%s9 + $0xc8] sm:$0xff]
    %v3783 = vld [vmem:[%s9 + $0xd0] sm:$0xff]
    %v3784 = vld [vmem:[%s9 + $0xd8] sm:$0xff]
    %v3785 = vld [vmem:[%s9 + $0xe0] sm:$0xff]
    %v3786 = vld [vmem:[%s9 + $0xe8] sm:$0xff]
    %v3787 = vld [vmem:[%s9 + $0xf0] sm:$0xff]
    %v3788 = vld [vmem:[%s9 + $0xf8] sm:$0xff]
    %v3789 = vld [vmem:[%s9 + $0x100] sm:$0xff]
    %v3790 = vld [vmem:[%s9 + $0x108] sm:$0xff]
    %v3791 = vld [vmem:[%s9 + $0x110] sm:$0xff]
    %v3792 = vld [vmem:[%s9 + $0x118] sm:$0xff]
    %v3793 = vld [vmem:[%s9 + $0x120] sm:$0xff]
    %v3794 = vld [vmem:[%s9 + $0x128] sm:$0xff]
    %v3795 = vld [vmem:[%s9 + $0x130] sm:$0xff]
    %v3796 = vld [vmem:[%s9 + $0x138] sm:$0xff]
    %v3797 = vld [vmem:[%s9 + $0x140] sm:$0xff]
    %v3798 = vld [vmem:[%s9 + $0x148] sm:$0xff]
    %v3799 = vld [vmem:[%s9 + $0x150] sm:$0xff]
    %v3800 = vld [vmem:[%s9 + $0x158] sm:$0xff]
    %v3801 = vld [vmem:[%s9 + $0x160] sm:$0xff]
    %v3802 = vld [vmem:[%s9 + $0x168] sm:$0xff]
    %v3803 = vld [vmem:[%s9 + $0x170] sm:$0xff]
    %v3804 = vld [vmem:[%s9 + $0x178] sm:$0xff]
    %v3805 = vld [vmem:[%s9 + $0x180] sm:$0xff]
    %v3806 = vld [vmem:[%s9 + $0x188] sm:$0xff]
    %v3807 = vld [vmem:[%s9 + $0x190] sm:$0xff]
    %v3808 = vld [vmem:[%s9 + $0x198] sm:$0xff]
    %v3809 = vld [vmem:[%s9 + $0x1a0] sm:$0xff]
    %v3810 = vld [vmem:[%s9 + $0x1a8] sm:$0xff]
    %v3811 = vld [vmem:[%s9 + $0x1b0] sm:$0xff]
    %v3812 = vld [vmem:[%s9 + $0x1b8] sm:$0xff]
    %v3813 = vld [vmem:[%s9 + $0x1c0] sm:$0xff]
    %v3814 = vld [vmem:[%s9 + $0x1c8] sm:$0xff]
    %v3815 = vld [vmem:[%s9 + $0x1d0] sm:$0xff]
    %v3816 = vld [vmem:[%s9 + $0x1d8] sm:$0xff]
    %v3817 = vld [vmem:[%s9 + $0x1e0] sm:$0xff]
    %v3818 = vld [vmem:[%s9 + $0x1e8] sm:$0xff]
    %v3819 = vld [vmem:[%s9 + $0x1f0] sm:$0xff]
    %v3820 = vld [vmem:[%s9 + $0x1f8] sm:$0xff]
    %v3821 = vld [vmem:[%s9 + $0x200] sm:$0xff]
    %v3822 = vld [vmem:[%s9 + $0x208] sm:$0xff]
    %v3823 = vld [vmem:[%s9 + $0x210] sm:$0xff]
    %v3824 = vld [vmem:[%s9 + $0x218] sm:$0xff]
    %v3825 = vld [vmem:[%s9 + $0x220] sm:$0xff]
    %v3826 = vld [vmem:[%s9 + $0x228] sm:$0xff]
    %v3827 = vld [vmem:[%s9 + $0x230] sm:$0xff]
    %v3828 = vld [vmem:[%s9 + $0x238] sm:$0xff]
    %v3829 = vld [vmem:[%s9 + $0x240] sm:$0xff]
    %v3830 = vld [vmem:[%s9 + $0x248] sm:$0xff]
    %v3831 = vld [vmem:[%s9 + $0x250] sm:$0xff]
    %v3832 = vld [vmem:[%s9 + $0x258] sm:$0xff]
    %v3833 = vld [vmem:[%s9 + $0x260] sm:$0xff]
    %v3834 = vld [vmem:[%s9 + $0x268] sm:$0xff]
    %v3835 = vld [vmem:[%s9 + $0x270] sm:$0xff]
    %v3836 = vld [vmem:[%s9 + $0x278] sm:$0xff]
    %v3837 = vld [vmem:[%s9 + $0x280] sm:$0xff]
    %v3838 = vld [vmem:[%s9 + $0x288] sm:$0xff]
    %v3839 = vld [vmem:[%s9 + $0x290] sm:$0xff]
    %v3840 = vld [vmem:[%s9 + $0x298] sm:$0xff]
    %v3841 = vld [vmem:[%s9 + $0x2a0] sm:$0xff]
    %v3842 = vld [vmem:[%s9 + $0x2a8] sm:$0xff]
    %v3843 = vld [vmem:[%s9 + $0x2b0] sm:$0xff]
    %v3844 = vld [vmem:[%s9 + $0x2b8] sm:$0xff]
    %v3845 = vld [vmem:[%s9 + $0x2c0] sm:$0xff]
    %v3846 = vld [vmem:[%s9 + $0x2c8] sm:$0xff]
    %v3847 = vld [vmem:[%s9 + $0x2d0] sm:$0xff]
    %v3848 = vld [vmem:[%s9 + $0x2d8] sm:$0xff]
    %v3849 = vld [vmem:[%s9 + $0x2e0] sm:$0xff]
    %v3850 = vld [vmem:[%s9 + $0x2e8] sm:$0xff]
    %v3851 = vld [vmem:[%s9 + $0x2f0] sm:$0xff]
    %v3852 = vld [vmem:[%s9 + $0x2f8] sm:$0xff]
    %v3853 = vld [vmem:[%s9 + $0x300] sm:$0xff]
    %v3854 = vld [vmem:[%s9 + $0x308] sm:$0xff]
    %v3855 = vld [vmem:[%s9 + $0x310] sm:$0xff]
    %v3856 = vld [vmem:[%s9 + $0x318] sm:$0xff]
    %v3857 = vld [vmem:[%s9 + $0x320] sm:$0xff]
    %v3858 = vld [vmem:[%s9 + $0x328] sm:$0xff]
    %v3859 = vld [vmem:[%s9 + $0x330] sm:$0xff]
    %v3860 = vld [vmem:[%s9 + $0x338] sm:$0xff]
    %v3861 = vld [vmem:[%s9 + $0x340] sm:$0xff]
    %v3862 = vld [vmem:[%s9 + $0x348] sm:$0xff]
    %v3863 = vld [vmem:[%s9 + $0x350] sm:$0xff]
    %v3864 = vld [vmem:[%s9 + $0x358] sm:$0xff]
    %v3865 = vld [vmem:[%s9 + $0x360] sm:$0xff]
    %v3866 = vld [vmem:[%s9 + $0x368] sm:$0xff]
    %v3867 = vld [vmem:[%s9 + $0x370] sm:$0xff]
    %v3868 = vld [vmem:[%s9 + $0x378] sm:$0xff]
    %v3869 = vld [vmem:[%s9 + $0x380] sm:$0xff]
    %v3870 = vld [vmem:[%s9 + $0x388] sm:$0xff]
    %v3871 = vld [vmem:[%s9 + $0x390] sm:$0xff]
    %v3872 = vld [vmem:[%s9 + $0x398] sm:$0xff]
    %v3873 = vld [vmem:[%s9 + $0x3a0] sm:$0xff]
    %v3874 = vld [vmem:[%s9 + $0x3a8] sm:$0xff]
    %v3875 = vld [vmem:[%s9 + $0x3b0] sm:$0xff]
    %v3876 = vld [vmem:[%s9 + $0x3b8] sm:$0xff]
    %v3877 = vld [vmem:[%s10] sm:$0x1]
    %v3879 = vlaneseq
    %v3880 = vshrl.u32 %v3879, 7
    %v3881 = vsub.s32 0, %v3880
    %v3882 = vrot.slane %v3877, %v3881
    %v3884 = vsel %vm101, %v3656, 0
    %v3887 = vsel %vm101, %v3756, 0
    %v3889 = vsel %vm101, %v3733, 0
    %3891 = vmatprep.subr.mxu0 0.0
    %3892 = vmatpush1.msra.mxu0 %v3757
    %3893 = vmatprep.subr.mxu0 0.0
    %3894 = vmatpush1.msra.mxu0 %v3758
    %3895 = vmatprep.subr.mxu0 0.0
    %3896 = vmatpush1.msra.mxu0 %v3759
    %3897 = vmatprep.subr.mxu0 0.0
    %3898 = vmatpush1.msra.mxu0 %v3760
    %3899 = vmatprep.subr.mxu0 0.0
    %3900 = vmatpush1.msra.mxu0 %v3761
    %3901 = vmatprep.subr.mxu0 0.0
    %3902 = vmatpush1.msra.mxu0 %v3762
    %3903 = vmatprep.subr.mxu0 0.0
    %3904 = vmatpush1.msra.mxu0 %v3763
    %3905 = vmatprep.subr.mxu0 0.0
    %3906 = vmatpush1.msra.mxu0 %v3764
    %3907 = vmatprep.subr.mxu0 0.0
    %3908 = vmatpush1.msra.mxu0 %v3765
    %3909 = vmatprep.subr.mxu0 0.0
    %3910 = vmatpush1.msra.mxu0 %v3766
    %3911 = vmatprep.subr.mxu0 0.0
    %3912 = vmatpush1.msra.mxu0 %v3767
    %3913 = vmatprep.subr.mxu0 0.0
    %3914 = vmatpush1.msra.mxu0 %v3768
    %3915 = vmatprep.subr.mxu0 0.0
    %3916 = vmatpush1.msra.mxu0 %v3769
    %3917 = vmatprep.subr.mxu0 0.0
    %3918 = vmatpush1.msra.mxu0 %v3770
    %3919 = vmatprep.subr.mxu0 0.0
    %3920 = vmatpush1.msra.mxu0 %v3771
    %3921 = vmatprep.subr.mxu0 0.0
    %3922 = vmatpush1.msra.mxu0 %v3772
    %3923 = vmatprep.subr.mxu0 0.0
    %3924 = vmatpush1.msra.mxu0 %v3773
    %3925 = vmatprep.subr.mxu0 0.0
    %3926 = vmatpush1.msra.mxu0 %v3774
    %3927 = vmatprep.subr.mxu0 0.0
    %3928 = vmatpush1.msra.mxu0 %v3775
    %3929 = vmatprep.subr.mxu0 0.0
    %3930 = vmatpush1.msra.mxu0 %v3776
    %3931 = vmatprep.subr.mxu0 0.0
    %3932 = vmatpush1.msra.mxu0 %v3777
    %3933 = vmatprep.subr.mxu0 0.0
    %3934 = vmatpush1.msra.mxu0 %v3778
    %3935 = vmatprep.subr.mxu0 0.0
    %3936 = vmatpush1.msra.mxu0 %v3779
    %3937 = vmatprep.subr.mxu0 0.0
    %3938 = vmatpush1.msra.mxu0 %v3780
    %3939 = vmatprep.subr.mxu0 0.0
    %3940 = vmatpush1.msra.mxu0 %v3781
    %3941 = vmatprep.subr.mxu0 0.0
    %3942 = vmatpush1.msra.mxu0 %v3782
    %3943 = vmatprep.subr.mxu0 0.0
    %3944 = vmatpush1.msra.mxu0 %v3783
    %3945 = vmatprep.subr.mxu0 0.0
    %3946 = vmatpush1.msra.mxu0 %v3784
    %3947 = vmatprep.subr.mxu0 0.0
    %3948 = vmatpush1.msra.mxu0 %v3785
    %3949 = vmatprep.subr.mxu0 0.0
    %3950 = vmatpush1.msra.mxu0 %v3786
    %3951 = vmatprep.subr.mxu0 0.0
    %3952 = vmatpush1.msra.mxu0 %v3787
    %3953 = vmatprep.subr.mxu0 0.0
    %3954 = vmatpush1.msra.mxu0 %v3788
    %3955 = vmatprep.mubr.f32.mxu0 %v3600
    %3956 = vmatmul.mubr.f32.gmra.mrb[0].mxu0 %v3599
    %v3957 = vpop.f32.mrb[0].mxu0
    %v3958 = vadd.f32 %v3882, %v3957
    %v3959 = vpop.f32.mrb[0].mxu0
    %3960 = vmatprep.mubr.f32.mxu0 %v3750
    %3961 = vmatmul.mubr.f32.gmra.mrb[0].mxu0 %v3749
    %v3962 = vpop.f32.mrb[0].mxu0
    %v3963 = vadd.f32 %v3882, %v3962
    %v3964 = vpop.f32.mrb[0].mxu0
    %3965 = vmatprep.mubr.f32.mxu0 %v3721
    %3966 = vmatmul.mubr.f32.gmra.mrb[0].mxu0 %v3719
    %v3967 = vpop.f32.mrb[0].mxu0
    %v3968 = vadd.f32 %v3882, %v3967
    %v3969 = vpop.f32.mrb[0].mxu0
    %3970 = vdwg.mxu0
    %3971 = vmatprep.subr.mxu0 0.0
    %3972 = vmatpush1.msra.mxu0 %v3789
    %3973 = vmatprep.subr.mxu0 0.0
    %3974 = vmatpush1.msra.mxu0 %v3790
    %3975 = vmatprep.subr.mxu0 0.0
    %3976 = vmatpush1.msra.mxu0 %v3791
    %3977 = vmatprep.subr.mxu0 0.0
    %3978 = vmatpush1.msra.mxu0 %v3792
    %3979 = vmatprep.subr.mxu0 0.0
    %3980 = vmatpush1.msra.mxu0 %v3793
    %3981 = vmatprep.subr.mxu0 0.0
    %3982 = vmatpush1.msra.mxu0 %v3794
    %3983 = vmatprep.subr.mxu0 0.0
    %3984 = vmatpush1.msra.mxu0 %v3795
    %3985 = vmatprep.subr.mxu0 0.0
    %3986 = vmatpush1.msra.mxu0 %v3796
    %3987 = vmatprep.subr.mxu0 0.0
    %3988 = vmatpush1.msra.mxu0 %v3797
    %3989 = vmatprep.subr.mxu0 0.0
    %3990 = vmatpush1.msra.mxu0 %v3798
    %3991 = vmatprep.subr.mxu0 0.0
    %3992 = vmatpush1.msra.mxu0 %v3799
    %3993 = vmatprep.subr.mxu0 0.0
    %3994 = vmatpush1.msra.mxu0 %v3800
    %3995 = vmatprep.subr.mxu0 0.0
    %3996 = vmatpush1.msra.mxu0 %v3801
    %3997 = vmatprep.subr.mxu0 0.0
    %3998 = vmatpush1.msra.mxu0 %v3802
    %3999 = vmatprep.subr.mxu0 0.0
    %4000 = vmatpush1.msra.mxu0 %v3803
    %4001 = vmatprep.subr.mxu0 0.0
    %4002 = vmatpush1.msra.mxu0 %v3804
    %4003 = vmatprep.subr.mxu0 0.0
    %4004 = vmatpush1.msra.mxu0 %v3805
    %4005 = vmatprep.subr.mxu0 0.0
    %4006 = vmatpush1.msra.mxu0 %v3806
    %4007 = vmatprep.subr.mxu0 0.0
    %4008 = vmatpush1.msra.mxu0 %v3807
    %4009 = vmatprep.subr.mxu0 0.0
    %4010 = vmatpush1.msra.mxu0 %v3808
    %4011 = vmatprep.subr.mxu0 0.0
    %4012 = vmatpush1.msra.mxu0 %v3809
    %4013 = vmatprep.subr.mxu0 0.0
    %4014 = vmatpush1.msra.mxu0 %v3810
    %4015 = vmatprep.subr.mxu0 0.0
    %4016 = vmatpush1.msra.mxu0 %v3811
    %4017 = vmatprep.subr.mxu0 0.0
    %4018 = vmatpush1.msra.mxu0 %v3812
    %4019 = vmatprep.subr.mxu0 0.0
    %4020 = vmatpush1.msra.mxu0 %v3813
    %4021 = vmatprep.subr.mxu0 0.0
    %4022 = vmatpush1.msra.mxu0 %v3814
    %4023 = vmatprep.subr.mxu0 0.0
    %4024 = vmatpush1.msra.mxu0 %v3815
    %4025 = vmatprep.subr.mxu0 0.0
    %4026 = vmatpush1.msra.mxu0 %v3816
    %4027 = vmatprep.subr.mxu0 0.0
    %4028 = vmatpush1.msra.mxu0 %v3817
    %4029 = vmatprep.subr.mxu0 0.0
    %4030 = vmatpush1.msra.mxu0 %v3818
    %4031 = vmatprep.subr.mxu0 0.0
    %4032 = vmatpush1.msra.mxu0 %v3819
    %4033 = vmatprep.subr.mxu0 0.0
    %4034 = vmatpush1.msra.mxu0 %v3820
    %4035 = vmatprep.mubr.f32.mxu0 %v3638
    %4036 = vmatmul.mubr.f32.gmra.mrb[0].mxu0 %v3662
    %v4037 = vpop.f32.mrb[0].mxu0
    %v4038 = vadd.f32 %v3958, %v4037
    %v4039 = vpop.f32.mrb[0].mxu0
    %4040 = vmatprep.mubr.f32.mxu0 %v3752
    %4041 = vmatmul.mubr.f32.gmra.mrb[0].mxu0 %v3751
    %v4042 = vpop.f32.mrb[0].mxu0
    %v4043 = vadd.f32 %v3963, %v4042
    %v4044 = vpop.f32.mrb[0].mxu0
    %4045 = vmatprep.mubr.f32.mxu0 %v3725
    %4046 = vmatmul.mubr.f32.gmra.mrb[0].mxu0 %v3723
    %v4047 = vpop.f32.mrb[0].mxu0
    %v4048 = vadd.f32 %v3968, %v4047
    %v4049 = vpop.f32.mrb[0].mxu0
    %4050 = vdwg.mxu0
    %4051 = vmatprep.subr.mxu0 0.0
    %4052 = vmatpush1.msra.mxu0 %v3821
    %4053 = vmatprep.subr.mxu0 0.0
    %4054 = vmatpush1.msra.mxu0 %v3822
    %4055 = vmatprep.subr.mxu0 0.0
    %4056 = vmatpush1.msra.mxu0 %v3823
    %4057 = vmatprep.subr.mxu0 0.0
    %4058 = vmatpush1.msra.mxu0 %v3824
    %4059 = vmatprep.subr.mxu0 0.0
    %4060 = vmatpush1.msra.mxu0 %v3825
    %4061 = vmatprep.subr.mxu0 0.0
    %4062 = vmatpush1.msra.mxu0 %v3826
    %4063 = vmatprep.subr.mxu0 0.0
    %4064 = vmatpush1.msra.mxu0 %v3827
    %4065 = vmatprep.subr.mxu0 0.0
    %4066 = vmatpush1.msra.mxu0 %v3828
    %4067 = vmatprep.subr.mxu0 0.0
    %4068 = vmatpush1.msra.mxu0 %v3829
    %4069 = vmatprep.subr.mxu0 0.0
    %4070 = vmatpush1.msra.mxu0 %v3830
    %4071 = vmatprep.subr.mxu0 0.0
    %4072 = vmatpush1.msra.mxu0 %v3831
    %4073 = vmatprep.subr.mxu0 0.0
    %4074 = vmatpush1.msra.mxu0 %v3832
    %4075 = vmatprep.subr.mxu0 0.0
    %4076 = vmatpush1.msra.mxu0 %v3833
    %4077 = vmatprep.subr.mxu0 0.0
    %4078 = vmatpush1.msra.mxu0 %v3834
    %4079 = vmatprep.subr.mxu0 0.0
    %4080 = vmatpush1.msra.mxu0 %v3835
    %4081 = vmatprep.subr.mxu0 0.0
    %4082 = vmatpush1.msra.mxu0 %v3836
    %4083 = vmatprep.subr.mxu0 0.0
    %4084 = vmatpush1.msra.mxu0 %v3837
    %4085 = vmatprep.subr.mxu0 0.0
    %4086 = vmatpush1.msra.mxu0 %v3838
    %4087 = vmatprep.subr.mxu0 0.0
    %4088 = vmatpush1.msra.mxu0 %v3839
    %4089 = vmatprep.subr.mxu0 0.0
    %4090 = vmatpush1.msra.mxu0 %v3840
    %4091 = vmatprep.subr.mxu0 0.0
    %4092 = vmatpush1.msra.mxu0 %v3841
    %4093 = vmatprep.subr.mxu0 0.0
    %4094 = vmatpush1.msra.mxu0 %v3842
    %4095 = vmatprep.subr.mxu0 0.0
    %4096 = vmatpush1.msra.mxu0 %v3843
    %4097 = vmatprep.subr.mxu0 0.0
    %4098 = vmatpush1.msra.mxu0 %v3844
    %4099 = vmatprep.subr.mxu0 0.0
    %4100 = vmatpush1.msra.mxu0 %v3845
    %4101 = vmatprep.subr.mxu0 0.0
    %4102 = vmatpush1.msra.mxu0 %v3846
    %4103 = vmatprep.subr.mxu0 0.0
    %4104 = vmatpush1.msra.mxu0 %v3847
    %4105 = vmatprep.subr.mxu0 0.0
    %4106 = vmatpush1.msra.mxu0 %v3848
    %4107 = vmatprep.subr.mxu0 0.0
    %4108 = vmatpush1.msra.mxu0 %v3849
    %4109 = vmatprep.subr.mxu0 0.0
    %4110 = vmatpush1.msra.mxu0 %v3850
    %4111 = vmatprep.subr.mxu0 0.0
    %4112 = vmatpush1.msra.mxu0 %v3851
    %4113 = vmatprep.subr.mxu0 0.0
    %4114 = vmatpush1.msra.mxu0 %v3852
    %4115 = vmatprep.mubr.f32.mxu0 %v3650
    %4116 = vmatmul.mubr.f32.gmra.mrb[0].mxu0 %v3639
    %v4117 = vpop.f32.mrb[0].mxu0
    %v4118 = vadd.f32 %v4038, %v4117
    %v4119 = vpop.f32.mrb[0].mxu0
    %4120 = vmatprep.mubr.f32.mxu0 %v3754
    %4121 = vmatmul.mubr.f32.gmra.mrb[0].mxu0 %v3753
    %v4122 = vpop.f32.mrb[0].mxu0
    %v4123 = vadd.f32 %v4043, %v4122
    %v4124 = vpop.f32.mrb[0].mxu0
    %4125 = vmatprep.mubr.f32.mxu0 %v3729
    %4126 = vmatmul.mubr.f32.gmra.mrb[0].mxu0 %v3727
    %v4127 = vpop.f32.mrb[0].mxu0
    %v4128 = vadd.f32 %v4048, %v4127
    %v4129 = vpop.f32.mrb[0].mxu0
    %4130 = vdwg.mxu0
    %4131 = vmatprep.subr.mxu0 0.0
    %4132 = vmatpush1.msra.mxu0 %v3853
    %4133 = vmatprep.subr.mxu0 0.0
    %4134 = vmatpush1.msra.mxu0 %v3854
    %4135 = vmatprep.subr.mxu0 0.0
    %4136 = vmatpush1.msra.mxu0 %v3855
    %4137 = vmatprep.subr.mxu0 0.0
    %4138 = vmatpush1.msra.mxu0 %v3856
    %4139 = vmatprep.subr.mxu0 0.0
    %4140 = vmatpush1.msra.mxu0 %v3857
    %4141 = vmatprep.subr.mxu0 0.0
    %4142 = vmatpush1.msra.mxu0 %v3858
    %4143 = vmatprep.subr.mxu0 0.0
    %4144 = vmatpush1.msra.mxu0 %v3859
    %4145 = vmatprep.subr.mxu0 0.0
    %4146 = vmatpush1.msra.mxu0 %v3860
    %4147 = vmatprep.subr.mxu0 0.0
    %4148 = vmatpush1.msra.mxu0 %v3861
    %4149 = vmatprep.subr.mxu0 0.0
    %4150 = vmatpush1.msra.mxu0 %v3862
    %4151 = vmatprep.subr.mxu0 0.0
    %4152 = vmatpush1.msra.mxu0 %v3863
    %4153 = vmatprep.subr.mxu0 0.0
    %4154 = vmatpush1.msra.mxu0 %v3864
    %4155 = vmatprep.subr.mxu0 0.0
    %4156 = vmatpush1.msra.mxu0 %v3865
    %4157 = vmatprep.subr.mxu0 0.0
    %4158 = vmatpush1.msra.mxu0 %v3866
    %4159 = vmatprep.subr.mxu0 0.0
    %4160 = vmatpush1.msra.mxu0 %v3867
    %4161 = vmatprep.subr.mxu0 0.0
    %4162 = vmatpush1.msra.mxu0 %v3868
    %4163 = vmatprep.subr.mxu0 0.0
    %4164 = vmatpush1.msra.mxu0 %v3869
    %4165 = vmatprep.subr.mxu0 0.0
    %4166 = vmatpush1.msra.mxu0 %v3870
    %4167 = vmatprep.subr.mxu0 0.0
    %4168 = vmatpush1.msra.mxu0 %v3871
    %4169 = vmatprep.subr.mxu0 0.0
    %4170 = vmatpush1.msra.mxu0 %v3872
    %4171 = vmatprep.subr.mxu0 0.0
    %4172 = vmatpush1.msra.mxu0 %v3873
    %4173 = vmatprep.subr.mxu0 0.0
    %4174 = vmatpush1.msra.mxu0 %v3874
    %4175 = vmatprep.subr.mxu0 0.0
    %4176 = vmatpush1.msra.mxu0 %v3875
    %4177 = vmatprep.subr.mxu0 0.0
    %4178 = vmatpush1.msra.mxu0 %v3876
    %4179 = vmatprep.subr.mxu0 0.0
    %4180 = vmatpush1.msra.mxu0 0.0
    %4181 = vmatprep.subr.mxu0 0.0
    %4182 = vmatpush1.msra.mxu0 0.0
    %4183 = vmatprep.subr.mxu0 0.0
    %4184 = vmatpush1.msra.mxu0 0.0
    %4185 = vmatprep.subr.mxu0 0.0
    %4186 = vmatpush1.msra.mxu0 0.0
    %4187 = vmatprep.subr.mxu0 0.0
    %4188 = vmatpush1.msra.mxu0 0.0
    %4189 = vmatprep.subr.mxu0 0.0
    %4190 = vmatpush1.msra.mxu0 0.0
    %4191 = vmatprep.subr.mxu0 0.0
    %4192 = vmatpush1.msra.mxu0 0.0
    %4193 = vmatprep.subr.mxu0 0.0
    %4194 = vmatpush1.msra.mxu0 0.0
    %4195 = vmatprep.mubr.f32.mxu0 %v3884
    %4196 = vmatmul.mubr.f32.gmra.mrb[0].mxu0 %v3653
    %v4197 = vpop.f32.mrb[0].mxu0
    %v4198 = vadd.f32 %v4118, %v4197
    %v4199 = vpop.f32.mrb[0].mxu0
    %4200 = vmatprep.mubr.f32.mxu0 %v3887
    %4201 = vmatmul.mubr.f32.gmra.mrb[0].mxu0 %v3755
    %v4202 = vpop.f32.mrb[0].mxu0
    %v4203 = vadd.f32 %v4123, %v4202
    %v4204 = vpop.f32.mrb[0].mxu0
    %4205 = vmatprep.mubr.f32.mxu0 %v3889
    %4206 = vmatmul.mubr.f32.gmra.mrb[0].mxu0 %v3731
    %v4207 = vpop.f32.mrb[0].mxu0
    %v4208 = vadd.f32 %v4128, %v4207
    %v4209 = vpop.f32.mrb[0].mxu0
    %4210 = vdwg.mxu0
    %v4211 = vmax.f32 %v4198, 0.0
    %v4212 = vmax.f32 %v4203, 0.0
    %v4213 = vmax.f32 %v4208, 0.0
    %v4216 = vrot.slane %v4211, 4
    %v4217 = vrot.slane %v4212, 4
    %v4218 = vsel %vm82, %v4216, %v4217
    %v4221 = vsel %vm82, 0.0, %v4216
    %v4222 = vsel %vm82, 0.0, %v4212
    %v4225 = vrot.slane %v4221, 1
    %v4226 = vrot.slane %v4218, 1
    %v4227 = vsel %vm52, %v4225, %v4226
    %v4228 = vrot.slane 0.0, 1
    %v4229 = vsel %vm52, %v4226, %v4228
    %4230 = vrot.lane.b32.xlu0 %v4227, 48
    %v4231 = vpop.permute.xlu0 %4230
    %4232 = vrot.lane.b32.xlu0 %v4229, 48
    %v4233 = vpop.permute.xlu0 %4232
    %v4236 = vrot.slane %v4221, 2
    %v4237 = vrot.slane %v4218, 2
    %v4238 = vsel %vm62, %v4236, %v4237
    %v4239 = vrot.slane 0.0, 2
    %v4240 = vsel %vm62, %v4237, %v4239
    %4241 = vrot.lane.b32.xlu0 %v4238, 96
    %v4242 = vpop.permute.xlu0 %4241
    %4243 = vrot.lane.b32.xlu0 %v4240, 96
    %v4244 = vpop.permute.xlu0 %4243
    %v4247 = vrot.slane %v4221, 3
    %v4248 = vrot.slane %v4218, 3
    %v4249 = vsel %vm72, %v4247, %v4248
    %v4250 = vrot.slane 0.0, 3
    %v4251 = vsel %vm72, %v4248, %v4250
    %4252 = vrot.lane.b32.xlu0 %v4249, 16
    %v4253 = vpop.permute.xlu0 %4252
    %4254 = vrot.lane.b32.xlu0 %v4251, 16
    %v4255 = vpop.permute.xlu0 %4254
    %v4258 = vrot.slane %v4221, 4
    %v4259 = vrot.slane %v4218, 4
    %v4260 = vsel %vm82, %v4258, %v4259
    %v4261 = vrot.slane 0.0, 4
    %v4262 = vsel %vm82, %v4259, %v4261
    %4263 = vrot.lane.b32.xlu0 %v4260, 64
    %v4264 = vpop.permute.xlu0 %4263
    %4265 = vrot.lane.b32.xlu0 %v4262, 64
    %v4266 = vpop.permute.xlu0 %4265
    %v4269 = vsel %vm98, %v4221, %v4231
    %v4270 = vsel %vm98, %v4218, %v4233
    %v4271 = vsel %vm288, %v4269, %v4242
    %v4272 = vsel %vm288, %v4270, %v4244
    %v4273 = vsel %vm92, %v4242, %v4253
    %v4274 = vsel %vm92, %v4244, %v4255
    %v4275 = vsel %vm101, %v4273, %v4264
    %v4276 = vsel %vm101, %v4274, %v4266
    %v4279 = vrot.slane %v4222, 1
    %v4280 = vrot.slane %v4213, 1
    %v4281 = vsel %vm52, %v4279, %v4280
    %v4282 = vsel %vm52, %v4280, %v4228
    %4283 = vrot.lane.b32.xlu0 %v4281, 48
    %v4284 = vpop.permute.xlu0 %4283
    %4285 = vrot.lane.b32.xlu0 %v4282, 48
    %v4286 = vpop.permute.xlu0 %4285
    %v4289 = vrot.slane %v4222, 2
    %v4290 = vrot.slane %v4213, 2
    %v4291 = vsel %vm62, %v4289, %v4290
    %v4292 = vsel %vm62, %v4290, %v4239
    %4293 = vrot.lane.b32.xlu0 %v4291, 96
    %v4294 = vpop.permute.xlu0 %4293
    %4295 = vrot.lane.b32.xlu0 %v4292, 96
    %v4296 = vpop.permute.xlu0 %4295
    %v4299 = vrot.slane %v4222, 3
    %v4300 = vrot.slane %v4213, 3
    %v4301 = vsel %vm72, %v4299, %v4300
    %v4302 = vsel %vm72, %v4300, %v4250
    %4303 = vrot.lane.b32.xlu0 %v4301, 16
    %v4304 = vpop.permute.xlu0 %4303
    %4305 = vrot.lane.b32.xlu0 %v4302, 16
    %v4306 = vpop.permute.xlu0 %4305
    %v4309 = vrot.slane %v4222, 4
    %v4310 = vrot.slane %v4213, 4
    %v4311 = vsel %vm82, %v4309, %v4310
    %v4312 = vsel %vm82, %v4310, %v4261
    %4313 = vrot.lane.b32.xlu0 %v4311, 64
    %v4314 = vpop.permute.xlu0 %4313
    %4315 = vrot.lane.b32.xlu0 %v4312, 64
    %v4316 = vpop.permute.xlu0 %4315
    %v4319 = vsel %vm98, %v4222, %v4284
    %v4320 = vsel %vm98, %v4213, %v4286
    %v4321 = vsel %vm288, %v4319, %v4294
    %v4322 = vsel %vm288, %v4320, %v4296
    %v4323 = vsel %vm92, %v4294, %v4304
    %v4324 = vsel %vm92, %v4296, %v4306
    %v4325 = vsel %vm101, %v4323, %v4314
    %v4326 = vsel %vm101, %v4324, %v4316
    %v4327 = vld [vmem:[%s11] sm:$0xff]
    %v4328 = vld [vmem:[%s11 + $0x8] sm:$0xff]
    %v4329 = vld [vmem:[%s11 + $0x10] sm:$0xff]
    %v4330 = vld [vmem:[%s11 + $0x18] sm:$0xff]
    %v4331 = vld [vmem:[%s11 + $0x20] sm:$0xff]
    %v4332 = vld [vmem:[%s11 + $0x28] sm:$0xff]
    %v4333 = vld [vmem:[%s11 + $0x30] sm:$0xff]
    %v4334 = vld [vmem:[%s11 + $0x38] sm:$0xff]
    %v4335 = vld [vmem:[%s11 + $0x40] sm:$0xff]
    %v4336 = vld [vmem:[%s11 + $0x48] sm:$0xff]
    %v4337 = vld [vmem:[%s11 + $0x50] sm:$0xff]
    %v4338 = vld [vmem:[%s11 + $0x58] sm:$0xff]
    %v4339 = vld [vmem:[%s11 + $0x60] sm:$0xff]
    %v4340 = vld [vmem:[%s11 + $0x68] sm:$0xff]
    %v4341 = vld [vmem:[%s11 + $0x70] sm:$0xff]
    %v4342 = vld [vmem:[%s11 + $0x78] sm:$0xff]
    %v4343 = vld [vmem:[%s11 + $0x80] sm:$0xff]
    %v4344 = vld [vmem:[%s11 + $0x88] sm:$0xff]
    %v4345 = vld [vmem:[%s11 + $0x90] sm:$0xff]
    %v4346 = vld [vmem:[%s11 + $0x98] sm:$0xff]
    %v4347 = vld [vmem:[%s11 + $0xa0] sm:$0xff]
    %v4348 = vld [vmem:[%s11 + $0xa8] sm:$0xff]
    %v4349 = vld [vmem:[%s11 + $0xb0] sm:$0xff]
    %v4350 = vld [vmem:[%s11 + $0xb8] sm:$0xff]
    %v4351 = vld [vmem:[%s11 + $0xc0] sm:$0xff]
    %v4352 = vld [vmem:[%s11 + $0xc8] sm:$0xff]
    %v4353 = vld [vmem:[%s11 + $0xd0] sm:$0xff]
    %v4354 = vld [vmem:[%s11 + $0xd8] sm:$0xff]
    %v4355 = vld [vmem:[%s11 + $0xe0] sm:$0xff]
    %v4356 = vld [vmem:[%s11 + $0xe8] sm:$0xff]
    %v4357 = vld [vmem:[%s12] sm:$0x1]
    %v4359 = vlaneseq
    %v4360 = vshrl.u32 %v4359, 7
    %v4361 = vsub.s32 0, %v4360
    %v4362 = vrot.slane %v4357, %v4361
    %vm4364 = vcmask 916480
    %v4366 = vsel %vm4364, %v4275, 0
    %v4369 = vsel %vm4364, %v4276, 0
    %v4372 = vsel %vm4364, %v4325, 0
    %v4375 = vsel %vm4364, %v4326, 0
    %4377 = vmatprep.subr.mxu0 0.0
    %4378 = vmatpush1.msra.mxu0 %v4327
    %4379 = vmatprep.subr.mxu0 0.0
    %4380 = vmatpush1.msra.mxu0 %v4328
    %4381 = vmatprep.subr.mxu0 0.0
    %4382 = vmatpush1.msra.mxu0 %v4329
    %4383 = vmatprep.subr.mxu0 0.0
    %4384 = vmatpush1.msra.mxu0 %v4330
    %4385 = vmatprep.subr.mxu0 0.0
    %4386 = vmatpush1.msra.mxu0 %v4331
    %4387 = vmatprep.subr.mxu0 0.0
    %4388 = vmatpush1.msra.mxu0 %v4332
    %4389 = vmatprep.subr.mxu0 0.0
    %4390 = vmatpush1.msra.mxu0 %v4333
    %4391 = vmatprep.subr.mxu0 0.0
    %4392 = vmatpush1.msra.mxu0 %v4334
    %4393 = vmatprep.subr.mxu0 0.0
    %4394 = vmatpush1.msra.mxu0 %v4335
    %4395 = vmatprep.subr.mxu0 0.0
    %4396 = vmatpush1.msra.mxu0 %v4336
    %4397 = vmatprep.subr.mxu0 0.0
    %4398 = vmatpush1.msra.mxu0 %v4337
    %4399 = vmatprep.subr.mxu0 0.0
    %4400 = vmatpush1.msra.mxu0 %v4338
    %4401 = vmatprep.subr.mxu0 0.0
    %4402 = vmatpush1.msra.mxu0 %v4339
    %4403 = vmatprep.subr.mxu0 0.0
    %4404 = vmatpush1.msra.mxu0 %v4340
    %4405 = vmatprep.subr.mxu0 0.0
    %4406 = vmatpush1.msra.mxu0 %v4341
    %4407 = vmatprep.subr.mxu0 0.0
    %4408 = vmatpush1.msra.mxu0 %v4342
    %4409 = vmatprep.subr.mxu0 0.0
    %4410 = vmatpush1.msra.mxu0 %v4343
    %4411 = vmatprep.subr.mxu0 0.0
    %4412 = vmatpush1.msra.mxu0 %v4344
    %4413 = vmatprep.subr.mxu0 0.0
    %4414 = vmatpush1.msra.mxu0 %v4345
    %4415 = vmatprep.subr.mxu0 0.0
    %4416 = vmatpush1.msra.mxu0 %v4346
    %4417 = vmatprep.subr.mxu0 0.0
    %4418 = vmatpush1.msra.mxu0 %v4347
    %4419 = vmatprep.subr.mxu0 0.0
    %4420 = vmatpush1.msra.mxu0 %v4348
    %4421 = vmatprep.subr.mxu0 0.0
    %4422 = vmatpush1.msra.mxu0 %v4349
    %4423 = vmatprep.subr.mxu0 0.0
    %4424 = vmatpush1.msra.mxu0 %v4350
    %4425 = vmatprep.subr.mxu0 0.0
    %4426 = vmatpush1.msra.mxu0 %v4351
    %4427 = vmatprep.subr.mxu0 0.0
    %4428 = vmatpush1.msra.mxu0 %v4352
    %4429 = vmatprep.subr.mxu0 0.0
    %4430 = vmatpush1.msra.mxu0 %v4353
    %4431 = vmatprep.subr.mxu0 0.0
    %4432 = vmatpush1.msra.mxu0 %v4354
    %4433 = vmatprep.subr.mxu0 0.0
    %4434 = vmatpush1.msra.mxu0 %v4355
    %4435 = vmatprep.subr.mxu0 0.0
    %4436 = vmatpush1.msra.mxu0 %v4356
    %4437 = vmatprep.subr.mxu0 0.0
    %4438 = vmatpush1.msra.mxu0 0.0
    %4439 = vmatprep.subr.mxu0 0.0
    %4440 = vmatpush1.msra.mxu0 0.0
    %4441 = vmatprep.mubr.f32.mxu0 %v4366
    %4442 = vmatmul.mubr.f32.gmra.mrb[0].mxu0 %v4271
    %v4443 = vpop.f32.mrb[0].mxu0
    %v4444 = vadd.f32 %v4362, %v4443
    %v4445 = vpop.f32.mrb[0].mxu0
    %4446 = vmatprep.mubr.f32.mxu0 %v4369
    %4447 = vmatmul.mubr.f32.gmra.mrb[0].mxu0 %v4272
    %v4448 = vpop.f32.mrb[0].mxu0
    %v4449 = vadd.f32 %v4362, %v4448
    %v4450 = vpop.f32.mrb[0].mxu0
    %4451 = vmatprep.mubr.f32.mxu0 %v4372
    %4452 = vmatmul.mubr.f32.gmra.mrb[0].mxu0 %v4321
    %v4453 = vpop.f32.mrb[0].mxu0
    %v4454 = vadd.f32 %v4362, %v4453
    %v4455 = vpop.f32.mrb[0].mxu0
    %4456 = vmatprep.mubr.f32.mxu0 %v4375
    %4457 = vmatmul.mubr.f32.gmra.mrb[0].mxu0 %v4322
    %v4458 = vpop.f32.mrb[0].mxu0
    %v4459 = vadd.f32 %v4362, %v4458
    %v4460 = vpop.f32.mrb[0].mxu0
    %4461 = vdwg.mxu0
    %4462 = vst.msk [vmem:[#allocation2] sm:$0xff] %vm92, %v4444
    %4463 = vst.msk [vmem:[#allocation2 + $0x8] sm:$0xff] %vm92, %v4449
    %s4464 = scalar_lea.vmem [#allocation2], 16
    %4465 = vst.msk [vmem:[%s4464] sm:$0xff] %vm92, %v4454
    %4466 = vst.msk [vmem:[%s4464 + $0x8] sm:$0xff] %vm92, %v4459
    // Predicated region
    $region54: #{torch_conv_model_forward.1} parent=1 // pred_check
      _
    $region55: #{torch_conv_model_forward.1} parent=1 // pred_check_branch
      %4468 = sbr.rel (0) target = $region57
    $region56: #{torch_conv_model_forward.1} parent=1 // pred_region
      %s4470 = ssub.s32 512, 512
      %4471 = vsyncadd [#allocation3], %s4470
      %s4472 = sshll.u32 [#allocation2], 4
      %s4473 = int_to_ptr.vmem [resolvable:$true] %s4472
      %4478 = dma.vmem_to_hbm [thread:$0]  %s4473, 512, %s13, [#allocation3], 128, 128, 8
    $region57: #{torch_conv_model_forward.1} parent=1 // pred_fallthru
      _
    // Predicated region
    $region58: #{torch_conv_model_forward.1} parent=1 // pred_check
      _
    $region59: #{torch_conv_model_forward.1} parent=1 // pred_check_branch
      %4480 = sbr.rel (0) target = $region61
    $region60: #{torch_conv_model_forward.1} parent=1 // pred_region
      %4481 = dma.done [#allocation3], 512
    $region61: #{torch_conv_model_forward.1} parent=1 // pred_fallthru
      _
    %4482 = vsyncpa [#allocation3], 1

</llo_original>
